<compile_context>
chip_gen: v5e
topology: v5e:2x2
jax: 0.10.0
libtpu: 0.0.40
codegen_flags: <defaults>
</compile_context>

<pallas_src>
import functools
import math

import jax
import jax.numpy as jnp
from jax import lax
from jax.experimental import pallas as pl
from jax.experimental.pallas import tpu as pltpu

# ---- synthetic CLIP text-tower config (small, but lane-aligned) ----
B = 2            # batch
L = 8            # context length (77 in real CLIP)
D = 256          # transformer width (>=128 -> lane-dense activations)
H = 2            # heads -> head_dim = 128 (128-aligned lane slices)
HD = D // H
LAYERS = 2       # transformer layers
VOCAB = 64
PROJ = 128       # text_projection output dim (lane-dense)
MLP = 4 * D
LN_EPS = 1e-5
NEG_INF = -1e9


def _layer_norm(x, g, b):
    mu = jnp.mean(x, axis=-1, keepdims=True)
    var = jnp.mean((x - mu) ** 2, axis=-1, keepdims=True)
    return (x - mu) * lax.rsqrt(var + LN_EPS) * g + b


def _mm(a, w):
    # bf16 operands at the MXU, f32 accumulation.
    return jnp.dot(a.astype(jnp.bfloat16), w, preferred_element_type=jnp.float32)


# ------------------------- fused kernel -------------------------

def text_encoder_kernel(emb_ref, pos_ref, mask_ref, onehot_ref,
                        ln1g_ref, ln1b_ref, wqkv_ref, bqkv_ref, wo_ref, bo_ref,
                        ln2g_ref, ln2b_ref, wfc_ref, bfc_ref, wpr_ref, bpr_ref,
                        lnfg_ref, lnfb_ref, wproj_ref,
                        o_ref, x_scr, *, num_heads, batch, seq):
    layer = pl.program_id(0)

    # layer 0: token embedding + positional embedding -> resident activation
    @pl.when(layer == 0)
    def _init():
        pos = pos_ref[...]                                        # (L, D)
        x_scr[...] = emb_ref[...] + jnp.concatenate([pos] * batch, axis=0)

    x = x_scr[...]                                                # (B*L, D) f32
    d = x.shape[-1]
    hd = d // num_heads
    scale = 1.0 / math.sqrt(hd)
    mask = mask_ref[...]                                          # (L, L) 0 / -1e9

    # ---- attention branch: x + c_proj(MHA(ln_1(x))), causal ----
    h = _layer_norm(x, ln1g_ref[0], ln1b_ref[0])
    qkv = _mm(h, wqkv_ref[0]) + bqkv_ref[0]                       # (B*L, 3D)
    q, k, v = qkv[:, :d], qkv[:, d:2 * d], qkv[:, 2 * d:]         # 128-aligned splits

    per_batch = []
    for b in range(batch):                                        # static, B small
        rs = slice(b * seq, (b + 1) * seq)                        # sublane-aligned rows
        q_b, k_b, v_b = q[rs], k[rs], v[rs]
        heads = []
        for hh in range(num_heads):                               # static, 128-aligned
            cs = slice(hh * hd, (hh + 1) * hd)
            qh = q_b[:, cs].astype(jnp.bfloat16)
            kh = k_b[:, cs].astype(jnp.bfloat16)
            vh = v_b[:, cs].astype(jnp.bfloat16)
            s = lax.dot_general(qh, kh, (((1,), (1,)), ((), ())),
                                preferred_element_type=jnp.float32)
            s = s * scale + mask
            s = s - jnp.max(s, axis=-1, keepdims=True)
            p = jnp.exp(s)
            p = p * pl.reciprocal(jnp.sum(p, axis=-1, keepdims=True), approx=True)
            heads.append(jnp.dot(p.astype(jnp.bfloat16), vh,
                                 preferred_element_type=jnp.float32))
        per_batch.append(jnp.concatenate(heads, axis=-1))         # (L, D)
    attn = jnp.concatenate(per_batch, axis=0)                     # (B*L, D)
    x = x + _mm(attn, wo_ref[0]) + bo_ref[0]                      # ONE whole-D out-proj

    # ---- MLP branch: x + c_proj(QuickGELU(c_fc(ln_2(x)))) ----
    h = _layer_norm(x, ln2g_ref[0], ln2b_ref[0])
    h = _mm(h, wfc_ref[0]) + bfc_ref[0]
    h = h * jax.nn.sigmoid(1.702 * h)                             # QuickGELU
    h = _mm(h, wpr_ref[0]) + bpr_ref[0]
    x = x + h
    x_scr[...] = x

    # ---- last layer: gather EOT rows (one-hot matmul), ln_final, projection ----
    @pl.when(layer == pl.num_programs(0) - 1)
    def _final():
        xf = jnp.dot(onehot_ref[...], x, preferred_element_type=jnp.float32)  # (B, D)
        xf = _layer_norm(xf, lnfg_ref[...], lnfb_ref[...])
        o_ref[...] = _mm(xf, wproj_ref[...]).astype(o_ref.dtype)


# ------------------------- wrapper -------------------------

def text_encoder_forward(tokens, params):
    """tokens: int32 [B, L] pre-tokenized ids."""
    bt, lt = tokens.shape
    emb = jnp.take(params["token_embedding"], tokens.reshape(-1), axis=0)     # (B*L, D)

    # EOT selection: x[arange(B), text.argmax(-1)] as a one-hot gather matrix.
    eot = jnp.argmax(tokens, axis=-1)                                          # (B,)
    flat_eot = jnp.arange(bt) * lt + eot
    onehot = (jnp.arange(bt * lt)[None, :] == flat_eot[:, None]).astype(jnp.float32)

    # Hoisted causal attention mask (constant).
    idx = jnp.arange(lt)
    causal = jnp.where(idx[None, :] <= idx[:, None], 0.0, NEG_INF).astype(jnp.float32)

    def layer_spec(shape):
        return pl.BlockSpec((1,) + shape, lambda l: (l, 0, 0))

    def full_spec(shape):
        return pl.BlockSpec(shape, lambda l: (0,) * len(shape))

    kernel = functools.partial(text_encoder_kernel, num_heads=H, batch=bt, seq=lt)
    return pl.pallas_call(
        kernel,
        out_shape=jax.ShapeDtypeStruct((bt, PROJ), jnp.float32),
        grid=(LAYERS,),
        in_specs=[
            full_spec((bt * lt, D)),                              # token embeddings
            full_spec((lt, D)),                                   # positional embedding
            full_spec((lt, lt)),                                  # causal mask
            full_spec((bt, bt * lt)),                             # EOT one-hot gather
            layer_spec((1, D)), layer_spec((1, D)),               # ln_1 g, b
            layer_spec((D, 3 * D)), layer_spec((1, 3 * D)),       # attn in_proj w, b
            layer_spec((D, D)), layer_spec((1, D)),               # attn out_proj w, b
            layer_spec((1, D)), layer_spec((1, D)),               # ln_2 g, b
            layer_spec((D, MLP)), layer_spec((1, MLP)),           # mlp c_fc w, b
            layer_spec((MLP, D)), layer_spec((1, D)),             # mlp c_proj w, b
            full_spec((1, D)), full_spec((1, D)),                 # ln_final g, b
            full_spec((D, PROJ)),                                 # text_projection
        ],
        out_specs=pl.BlockSpec((bt, PROJ), lambda l: (0, 0)),
        scratch_shapes=[pltpu.VMEM((bt * lt, D), jnp.float32)],   # resident activation
        compiler_params=pltpu.CompilerParams(
            dimension_semantics=("arbitrary",)),                  # layer axis carries state
    )(emb, params["positional_embedding"], causal, onehot,
      params["ln1_g"], params["ln1_b"], params["w_qkv"], params["b_qkv"],
      params["w_o"], params["b_o"], params["ln2_g"], params["ln2_b"],
      params["w_fc"], params["b_fc"], params["w_pr"], params["b_pr"],
      params["lnf_g"], params["lnf_b"], params["text_projection"])


# ------------------------- parameter init -------------------------

def make_params(key):
    ks = iter(jax.random.split(key, 8))
    nrm = lambda shape, s=0.02: (s * jax.random.normal(next(ks), shape)).astype(jnp.float32)
    bf = jnp.bfloat16
    return dict(
        token_embedding=nrm((VOCAB, D)),
        positional_embedding=nrm((L, D), 0.01),
        # per-layer weights stacked on a leading LAYERS axis (selected by index_map)
        ln1_g=jnp.ones((LAYERS, 1, D), jnp.float32),
        ln1_b=jnp.zeros((LAYERS, 1, D), jnp.float32),
        w_qkv=nrm((LAYERS, D, 3 * D)).astype(bf),
        b_qkv=jnp.zeros((LAYERS, 1, 3 * D), jnp.float32),
        w_o=nrm((LAYERS, D, D)).astype(bf),
        b_o=jnp.zeros((LAYERS, 1, D), jnp.float32),
        ln2_g=jnp.ones((LAYERS, 1, D), jnp.float32),
        ln2_b=jnp.zeros((LAYERS, 1, D), jnp.float32),
        w_fc=nrm((LAYERS, D, MLP)).astype(bf),
        b_fc=jnp.zeros((LAYERS, 1, MLP), jnp.float32),
        w_pr=nrm((LAYERS, MLP, D)).astype(bf),
        b_pr=jnp.zeros((LAYERS, 1, D), jnp.float32),
        lnf_g=jnp.ones((1, D), jnp.float32),
        lnf_b=jnp.zeros((1, D), jnp.float32),
        text_projection=nrm((D, PROJ)).astype(bf),
    )


if __name__ == "__main__":
    key = jax.random.PRNGKey(0)
    pkey, tkey = jax.random.split(key)
    params = make_params(pkey)
    tokens = jax.random.randint(tkey, (B, L), minval=1, maxval=VOCAB - 1, dtype=jnp.int32)
    tokens = tokens.at[:, -1].set(VOCAB - 1)   # synthetic EOT token = largest id -> argmax picks it

    out = jax.jit(text_encoder_forward)(tokens, params)
    jax.block_until_ready(out)
    assert out.shape == (B, PROJ) and out.dtype == jnp.float32
    assert bool(jnp.all(jnp.isfinite(out)))
    print("KERNEL_OK")
</pallas_src>

<mosaic_0001>
module attributes {stable_mosaic.version = 11 : i64} {
  func.func @text_encoder_kernel(%arg0: i32, %arg1: memref<16x256xf32, #tpu.memory_space<vmem>>, %arg2: memref<8x256xf32, #tpu.memory_space<vmem>>, %arg3: memref<8x8xf32, #tpu.memory_space<vmem>>, %arg4: memref<2x16xf32, #tpu.memory_space<vmem>>, %arg5: memref<1x1x256xf32, #tpu.memory_space<vmem>>, %arg6: memref<1x1x256xf32, #tpu.memory_space<vmem>>, %arg7: memref<1x256x768xbf16, #tpu.memory_space<vmem>>, %arg8: memref<1x1x768xf32, #tpu.memory_space<vmem>>, %arg9: memref<1x256x256xbf16, #tpu.memory_space<vmem>>, %arg10: memref<1x1x256xf32, #tpu.memory_space<vmem>>, %arg11: memref<1x1x256xf32, #tpu.memory_space<vmem>>, %arg12: memref<1x1x256xf32, #tpu.memory_space<vmem>>, %arg13: memref<1x256x1024xbf16, #tpu.memory_space<vmem>>, %arg14: memref<1x1x1024xf32, #tpu.memory_space<vmem>>, %arg15: memref<1x1024x256xbf16, #tpu.memory_space<vmem>>, %arg16: memref<1x1x256xf32, #tpu.memory_space<vmem>>, %arg17: memref<1x256xf32, #tpu.memory_space<vmem>>, %arg18: memref<1x256xf32, #tpu.memory_space<vmem>>, %arg19: memref<256x128xbf16, #tpu.memory_space<vmem>>, %arg20: memref<2x128xf32, #tpu.memory_space<vmem>>, %arg21: memref<16x256xf32, #tpu.memory_space<vmem>>) attributes {dimension_semantics = [#tpu.dimension_semantics<arbitrary>], iteration_bounds = array<i64: 2>, scalar_prefetch = 0 : i64, scratch_operands = 1 : i64, tpu.core_type = #tpu.core_type<tc>, window_params = [{pipeline_mode = #tpu.pipeline_mode<synchronous>, transform_indices = @transform_0, window_bounds = array<i64: 16, 256>}, {pipeline_mode = #tpu.pipeline_mode<synchronous>, transform_indices = @transform_1, window_bounds = array<i64: 8, 256>}, {pipeline_mode = #tpu.pipeline_mode<synchronous>, transform_indices = @transform_2, window_bounds = array<i64: 8, 8>}, {pipeline_mode = #tpu.pipeline_mode<synchronous>, transform_indices = @transform_3, window_bounds = array<i64: 2, 16>}, {transform_indices = @transform_4, window_bounds = array<i64: 1, 1, 256>}, {transform_indices = @transform_5, window_bounds = array<i64: 1, 1, 256>}, {transform_indices = @transform_6, window_bounds = array<i64: 1, 256, 768>}, {transform_indices = @transform_7, window_bounds = array<i64: 1, 1, 768>}, {transform_indices = @transform_8, window_bounds = array<i64: 1, 256, 256>}, {transform_indices = @transform_9, window_bounds = array<i64: 1, 1, 256>}, {transform_indices = @transform_10, window_bounds = array<i64: 1, 1, 256>}, {transform_indices = @transform_11, window_bounds = array<i64: 1, 1, 256>}, {transform_indices = @transform_12, window_bounds = array<i64: 1, 256, 1024>}, {transform_indices = @transform_13, window_bounds = array<i64: 1, 1, 1024>}, {transform_indices = @transform_14, window_bounds = array<i64: 1, 1024, 256>}, {transform_indices = @transform_15, window_bounds = array<i64: 1, 1, 256>}, {pipeline_mode = #tpu.pipeline_mode<synchronous>, transform_indices = @transform_16, window_bounds = array<i64: 1, 256>}, {pipeline_mode = #tpu.pipeline_mode<synchronous>, transform_indices = @transform_17, window_bounds = array<i64: 1, 256>}, {pipeline_mode = #tpu.pipeline_mode<synchronous>, transform_indices = @transform_18, window_bounds = array<i64: 256, 128>}, {pipeline_mode = #tpu.pipeline_mode<synchronous>, transform_indices = @transform_19, window_bounds = array<i64: 2, 128>}]} {
    %c0_i32 = arith.constant 0 : i32
    %0 = arith.cmpi eq, %arg0, %c0_i32 : i32
    %1 = arith.extui %0 : i1 to i32
    %c0_i32_0 = arith.constant 0 : i32
    %2 = arith.cmpi ne, %1, %c0_i32_0 : i32
    scf.if %2 {
      %c0_78 = arith.constant 0 : index
      %c0_79 = arith.constant 0 : index
      %203 = vector.load %arg2[%c0_78, %c0_79] : memref<8x256xf32, #tpu.memory_space<vmem>>, vector<8x256xf32>
      %c0_80 = arith.constant 0 : index
      %c0_81 = arith.constant 0 : index
      %204 = vector.load %arg1[%c0_80, %c0_81] : memref<16x256xf32, #tpu.memory_space<vmem>>, vector<16x256xf32>
      %205 = tpu.concatenate %203, %203 in 0 : vector<8x256xf32>, vector<8x256xf32> -> vector<16x256xf32>
      %206 = arith.addf %204, %205 : vector<16x256xf32>
      %c0_82 = arith.constant 0 : index
      %c0_83 = arith.constant 0 : index
      %207 = vector.load %arg21[%c0_82, %c0_83] : memref<16x256xf32, #tpu.memory_space<vmem>>, vector<16x256xf32>
      tpu.vector_store %arg21[%c0_82, %c0_83], %206 {strides = array<i32>} : memref<16x256xf32, #tpu.memory_space<vmem>>, vector<16x256xf32>,
    } else {
    }
    %c0 = arith.constant 0 : index
    %c0_1 = arith.constant 0 : index
    %3 = vector.load %arg21[%c0, %c0_1] : memref<16x256xf32, #tpu.memory_space<vmem>>, vector<16x256xf32>
    %c0_2 = arith.constant 0 : index
    %c0_3 = arith.constant 0 : index
    %4 = vector.load %arg3[%c0_2, %c0_3] : memref<8x8xf32, #tpu.memory_space<vmem>>, vector<8x8xf32>
    %c0_4 = arith.constant 0 : index
    %c0_5 = arith.constant 0 : index
    %c0_6 = arith.constant 0 : index
    %5 = vector.load %arg5[%c0_4, %c0_5, %c0_6] : memref<1x1x256xf32, #tpu.memory_space<vmem>>, vector<1x1x256xf32>
    %6 = vector.shape_cast %5 : vector<1x1x256xf32> to vector<1x256xf32>
    %c0_7 = arith.constant 0 : index
    %c0_8 = arith.constant 0 : index
    %c0_9 = arith.constant 0 : index
    %7 = vector.load %arg6[%c0_7, %c0_8, %c0_9] : memref<1x1x256xf32, #tpu.memory_space<vmem>>, vector<1x1x256xf32>
    %8 = vector.shape_cast %7 : vector<1x1x256xf32> to vector<1x256xf32>
    %cst = arith.constant dense<0.000000e+00> : vector<16xf32>
    %9 = vector.multi_reduction <add>, %3, %cst [1] : vector<16x256xf32> to vector<16xf32>
    %10 = vector.shape_cast %9 : vector<16xf32> to vector<16x1xf32>
    %cst_10 = arith.constant 2.560000e+02 : f32
    %11 = vector.broadcast %cst_10 : f32 to vector<16x1xf32>
    %12 = arith.divf %10, %11 : vector<16x1xf32>
    %13 = vector.broadcast %12 : vector<16x1xf32> to vector<16x256xf32>
    %14 = arith.subf %3, %13 : vector<16x256xf32>
    %15 = arith.mulf %14, %14 : vector<16x256xf32>
    %cst_11 = arith.constant dense<0.000000e+00> : vector<16xf32>
    %16 = vector.multi_reduction <add>, %15, %cst_11 [1] : vector<16x256xf32> to vector<16xf32>
    %17 = vector.shape_cast %16 : vector<16xf32> to vector<16x1xf32>
    %cst_12 = arith.constant 2.560000e+02 : f32
    %18 = vector.broadcast %cst_12 : f32 to vector<16x1xf32>
    %19 = arith.divf %17, %18 : vector<16x1xf32>
    %20 = vector.broadcast %12 : vector<16x1xf32> to vector<16x256xf32>
    %21 = arith.subf %3, %20 : vector<16x256xf32>
    %cst_13 = arith.constant 9.99999974E-6 : f32
    %22 = vector.broadcast %cst_13 : f32 to vector<16x1xf32>
    %23 = arith.addf %19, %22 : vector<16x1xf32>
    %24 = math.rsqrt %23 : vector<16x1xf32>
    %25 = vector.broadcast %24 : vector<16x1xf32> to vector<16x256xf32>
    %26 = arith.mulf %21, %25 : vector<16x256xf32>
    %27 = vector.broadcast %6 : vector<1x256xf32> to vector<16x256xf32>
    %28 = arith.mulf %26, %27 : vector<16x256xf32>
    %29 = vector.broadcast %8 : vector<1x256xf32> to vector<16x256xf32>
    %30 = arith.addf %28, %29 : vector<16x256xf32>
    %c0_14 = arith.constant 0 : index
    %c0_15 = arith.constant 0 : index
    %c0_16 = arith.constant 0 : index
    %31 = vector.load %arg7[%c0_14, %c0_15, %c0_16] : memref<1x256x768xbf16, #tpu.memory_space<vmem>>, vector<1x256x768xbf16>
    %32 = vector.shape_cast %31 : vector<1x256x768xbf16> to vector<256x768xbf16>
    %33 = arith.truncf %30 : vector<16x256xf32> to vector<16x256xbf16>
    %cst_17 = arith.constant dense<0.000000e+00> : vector<16x768xf32>
    %34 = tpu.matmul %33, %32, %cst_17 {dimension_numbers = #tpu.dot_dimension_numbers<[1], [0], [0], [1], [0, 0, 1, 1], [], []>} : vector<16x256xbf16>, vector<256x768xbf16>, vector<16x768xf32> -> vector<16x768xf32>
    %c0_18 = arith.constant 0 : index
    %c0_19 = arith.constant 0 : index
    %c0_20 = arith.constant 0 : index
    %35 = vector.load %arg8[%c0_18, %c0_19, %c0_20] : memref<1x1x768xf32, #tpu.memory_space<vmem>>, vector<1x1x768xf32>
    %36 = vector.shape_cast %35 : vector<1x1x768xf32> to vector<1x768xf32>
    %37 = vector.broadcast %36 : vector<1x768xf32> to vector<16x768xf32>
    %38 = arith.addf %34, %37 : vector<16x768xf32>
    %39 = vector.extract_strided_slice %38 {offsets = [0, 0], sizes = [16, 256], strides = [1, 1]} : vector<16x768xf32> to vector<16x256xf32>
    %40 = vector.extract_strided_slice %38 {offsets = [0, 256], sizes = [16, 256], strides = [1, 1]} : vector<16x768xf32> to vector<16x256xf32>
    %41 = vector.extract_strided_slice %38 {offsets = [0, 512], sizes = [16, 256], strides = [1, 1]} : vector<16x768xf32> to vector<16x256xf32>
    %42 = vector.extract_strided_slice %39 {offsets = [0, 0], sizes = [8, 256], strides = [1, 1]} : vector<16x256xf32> to vector<8x256xf32>
    %43 = vector.extract_strided_slice %40 {offsets = [0, 0], sizes = [8, 256], strides = [1, 1]} : vector<16x256xf32> to vector<8x256xf32>
    %44 = vector.extract_strided_slice %41 {offsets = [0, 0], sizes = [8, 256], strides = [1, 1]} : vector<16x256xf32> to vector<8x256xf32>
    %45 = vector.extract_strided_slice %42 {offsets = [0, 0], sizes = [8, 128], strides = [1, 1]} : vector<8x256xf32> to vector<8x128xf32>
    %46 = arith.truncf %45 : vector<8x128xf32> to vector<8x128xbf16>
    %47 = vector.extract_strided_slice %43 {offsets = [0, 0], sizes = [8, 128], strides = [1, 1]} : vector<8x256xf32> to vector<8x128xf32>
    %48 = arith.truncf %47 : vector<8x128xf32> to vector<8x128xbf16>
    %49 = vector.extract_strided_slice %44 {offsets = [0, 0], sizes = [8, 128], strides = [1, 1]} : vector<8x256xf32> to vector<8x128xf32>
    %50 = arith.truncf %49 : vector<8x128xf32> to vector<8x128xbf16>
    %cst_21 = arith.constant dense<0.000000e+00> : vector<8x8xf32>
    %51 = tpu.matmul %46, %48, %cst_21 {dimension_numbers = #tpu.dot_dimension_numbers<[1], [1], [0], [0], [0, 0, 1, 0], [], []>} : vector<8x128xbf16>, vector<8x128xbf16>, vector<8x8xf32> -> vector<8x8xf32>
    %cst_22 = arith.constant 0.0883883461 : f32
    %52 = vector.broadcast %cst_22 : f32 to vector<8x8xf32>
    %53 = arith.mulf %51, %52 : vector<8x8xf32>
    %54 = arith.addf %53, %4 : vector<8x8xf32>
    %cst_23 = arith.constant dense<0xFF800000> : vector<8xf32>
    %55 = vector.multi_reduction <maximumf>, %54, %cst_23 [1] : vector<8x8xf32> to vector<8xf32>
    %56 = vector.shape_cast %55 : vector<8xf32> to vector<8x1xf32>
    %57 = vector.broadcast %56 : vector<8x1xf32> to vector<8x8xf32>
    %58 = arith.subf %54, %57 : vector<8x8xf32>
    %59 = math.exp %58 : vector<8x8xf32>
    %cst_24 = arith.constant dense<0.000000e+00> : vector<8xf32>
    %60 = vector.multi_reduction <add>, %59, %cst_24 [1] : vector<8x8xf32> to vector<8xf32>
    %61 = vector.shape_cast %60 : vector<8xf32> to vector<8x1xf32>
    %62 = tpu.reciprocal %61 {approx = true} : vector<8x1xf32> -> vector<8x1xf32>
    %63 = vector.broadcast %62 : vector<8x1xf32> to vector<8x8xf32>
    %64 = arith.mulf %59, %63 : vector<8x8xf32>
    %65 = arith.truncf %64 : vector<8x8xf32> to vector<8x8xbf16>
    %cst_25 = arith.constant dense<0.000000e+00> : vector<8x128xf32>
    %66 = tpu.matmul %65, %50, %cst_25 {dimension_numbers = #tpu.dot_dimension_numbers<[1], [0], [0], [1], [0, 0, 1, 1], [], []>} : vector<8x8xbf16>, vector<8x128xbf16>, vector<8x128xf32> -> vector<8x128xf32>
    %67 = vector.extract_strided_slice %42 {offsets = [0, 128], sizes = [8, 128], strides = [1, 1]} : vector<8x256xf32> to vector<8x128xf32>
    %68 = arith.truncf %67 : vector<8x128xf32> to vector<8x128xbf16>
    %69 = vector.extract_strided_slice %43 {offsets = [0, 128], sizes = [8, 128], strides = [1, 1]} : vector<8x256xf32> to vector<8x128xf32>
    %70 = arith.truncf %69 : vector<8x128xf32> to vector<8x128xbf16>
    %71 = vector.extract_strided_slice %44 {offsets = [0, 128], sizes = [8, 128], strides = [1, 1]} : vector<8x256xf32> to vector<8x128xf32>
    %72 = arith.truncf %71 : vector<8x128xf32> to vector<8x128xbf16>
    %cst_26 = arith.constant dense<0.000000e+00> : vector<8x8xf32>
    %73 = tpu.matmul %68, %70, %cst_26 {dimension_numbers = #tpu.dot_dimension_numbers<[1], [1], [0], [0], [0, 0, 1, 0], [], []>} : vector<8x128xbf16>, vector<8x128xbf16>, vector<8x8xf32> -> vector<8x8xf32>
    %cst_27 = arith.constant 0.0883883461 : f32
    %74 = vector.broadcast %cst_27 : f32 to vector<8x8xf32>
    %75 = arith.mulf %73, %74 : vector<8x8xf32>
    %76 = arith.addf %75, %4 : vector<8x8xf32>
    %cst_28 = arith.constant dense<0xFF800000> : vector<8xf32>
    %77 = vector.multi_reduction <maximumf>, %76, %cst_28 [1] : vector<8x8xf32> to vector<8xf32>
    %78 = vector.shape_cast %77 : vector<8xf32> to vector<8x1xf32>
    %79 = vector.broadcast %78 : vector<8x1xf32> to vector<8x8xf32>
    %80 = arith.subf %76, %79 : vector<8x8xf32>
    %81 = math.exp %80 : vector<8x8xf32>
    %cst_29 = arith.constant dense<0.000000e+00> : vector<8xf32>
    %82 = vector.multi_reduction <add>, %81, %cst_29 [1] : vector<8x8xf32> to vector<8xf32>
    %83 = vector.shape_cast %82 : vector<8xf32> to vector<8x1xf32>
    %84 = tpu.reciprocal %83 {approx = true} : vector<8x1xf32> -> vector<8x1xf32>
    %85 = vector.broadcast %84 : vector<8x1xf32> to vector<8x8xf32>
    %86 = arith.mulf %81, %85 : vector<8x8xf32>
    %87 = arith.truncf %86 : vector<8x8xf32> to vector<8x8xbf16>
    %cst_30 = arith.constant dense<0.000000e+00> : vector<8x128xf32>
    %88 = tpu.matmul %87, %72, %cst_30 {dimension_numbers = #tpu.dot_dimension_numbers<[1], [0], [0], [1], [0, 0, 1, 1], [], []>} : vector<8x8xbf16>, vector<8x128xbf16>, vector<8x128xf32> -> vector<8x128xf32>
    %89 = tpu.concatenate %66, %88 in 1 : vector<8x128xf32>, vector<8x128xf32> -> vector<8x256xf32>
    %90 = vector.extract_strided_slice %39 {offsets = [8, 0], sizes = [8, 256], strides = [1, 1]} : vector<16x256xf32> to vector<8x256xf32>
    %91 = vector.extract_strided_slice %40 {offsets = [8, 0], sizes = [8, 256], strides = [1, 1]} : vector<16x256xf32> to vector<8x256xf32>
    %92 = vector.extract_strided_slice %41 {offsets = [8, 0], sizes = [8, 256], strides = [1, 1]} : vector<16x256xf32> to vector<8x256xf32>
    %93 = vector.extract_strided_slice %90 {offsets = [0, 0], sizes = [8, 128], strides = [1, 1]} : vector<8x256xf32> to vector<8x128xf32>
    %94 = arith.truncf %93 : vector<8x128xf32> to vector<8x128xbf16>
    %95 = vector.extract_strided_slice %91 {offsets = [0, 0], sizes = [8, 128], strides = [1, 1]} : vector<8x256xf32> to vector<8x128xf32>
    %96 = arith.truncf %95 : vector<8x128xf32> to vector<8x128xbf16>
    %97 = vector.extract_strided_slice %92 {offsets = [0, 0], sizes = [8, 128], strides = [1, 1]} : vector<8x256xf32> to vector<8x128xf32>
    %98 = arith.truncf %97 : vector<8x128xf32> to vector<8x128xbf16>
    %cst_31 = arith.constant dense<0.000000e+00> : vector<8x8xf32>
    %99 = tpu.matmul %94, %96, %cst_31 {dimension_numbers = #tpu.dot_dimension_numbers<[1], [1], [0], [0], [0, 0, 1, 0], [], []>} : vector<8x128xbf16>, vector<8x128xbf16>, vector<8x8xf32> -> vector<8x8xf32>
    %cst_32 = arith.constant 0.0883883461 : f32
    %100 = vector.broadcast %cst_32 : f32 to vector<8x8xf32>
    %101 = arith.mulf %99, %100 : vector<8x8xf32>
    %102 = arith.addf %101, %4 : vector<8x8xf32>
    %cst_33 = arith.constant dense<0xFF800000> : vector<8xf32>
    %103 = vector.multi_reduction <maximumf>, %102, %cst_33 [1] : vector<8x8xf32> to vector<8xf32>
    %104 = vector.shape_cast %103 : vector<8xf32> to vector<8x1xf32>
    %105 = vector.broadcast %104 : vector<8x1xf32> to vector<8x8xf32>
    %106 = arith.subf %102, %105 : vector<8x8xf32>
    %107 = math.exp %106 : vector<8x8xf32>
    %cst_34 = arith.constant dense<0.000000e+00> : vector<8xf32>
    %108 = vector.multi_reduction <add>, %107, %cst_34 [1] : vector<8x8xf32> to vector<8xf32>
    %109 = vector.shape_cast %108 : vector<8xf32> to vector<8x1xf32>
    %110 = tpu.reciprocal %109 {approx = true} : vector<8x1xf32> -> vector<8x1xf32>
    %111 = vector.broadcast %110 : vector<8x1xf32> to vector<8x8xf32>
    %112 = arith.mulf %107, %111 : vector<8x8xf32>
    %113 = arith.truncf %112 : vector<8x8xf32> to vector<8x8xbf16>
    %cst_35 = arith.constant dense<0.000000e+00> : vector<8x128xf32>
    %114 = tpu.matmul %113, %98, %cst_35 {dimension_numbers = #tpu.dot_dimension_numbers<[1], [0], [0], [1], [0, 0, 1, 1], [], []>} : vector<8x8xbf16>, vector<8x128xbf16>, vector<8x128xf32> -> vector<8x128xf32>
    %115 = vector.extract_strided_slice %90 {offsets = [0, 128], sizes = [8, 128], strides = [1, 1]} : vector<8x256xf32> to vector<8x128xf32>
    %116 = arith.truncf %115 : vector<8x128xf32> to vector<8x128xbf16>
    %117 = vector.extract_strided_slice %91 {offsets = [0, 128], sizes = [8, 128], strides = [1, 1]} : vector<8x256xf32> to vector<8x128xf32>
    %118 = arith.truncf %117 : vector<8x128xf32> to vector<8x128xbf16>
    %119 = vector.extract_strided_slice %92 {offsets = [0, 128], sizes = [8, 128], strides = [1, 1]} : vector<8x256xf32> to vector<8x128xf32>
    %120 = arith.truncf %119 : vector<8x128xf32> to vector<8x128xbf16>
    %cst_36 = arith.constant dense<0.000000e+00> : vector<8x8xf32>
    %121 = tpu.matmul %116, %118, %cst_36 {dimension_numbers = #tpu.dot_dimension_numbers<[1], [1], [0], [0], [0, 0, 1, 0], [], []>} : vector<8x128xbf16>, vector<8x128xbf16>, vector<8x8xf32> -> vector<8x8xf32>
    %cst_37 = arith.constant 0.0883883461 : f32
    %122 = vector.broadcast %cst_37 : f32 to vector<8x8xf32>
    %123 = arith.mulf %121, %122 : vector<8x8xf32>
    %124 = arith.addf %123, %4 : vector<8x8xf32>
    %cst_38 = arith.constant dense<0xFF800000> : vector<8xf32>
    %125 = vector.multi_reduction <maximumf>, %124, %cst_38 [1] : vector<8x8xf32> to vector<8xf32>
    %126 = vector.shape_cast %125 : vector<8xf32> to vector<8x1xf32>
    %127 = vector.broadcast %126 : vector<8x1xf32> to vector<8x8xf32>
    %128 = arith.subf %124, %127 : vector<8x8xf32>
    %129 = math.exp %128 : vector<8x8xf32>
    %cst_39 = arith.constant dense<0.000000e+00> : vector<8xf32>
    %130 = vector.multi_reduction <add>, %129, %cst_39 [1] : vector<8x8xf32> to vector<8xf32>
    %131 = vector.shape_cast %130 : vector<8xf32> to vector<8x1xf32>
    %132 = tpu.reciprocal %131 {approx = true} : vector<8x1xf32> -> vector<8x1xf32>
    %133 = vector.broadcast %132 : vector<8x1xf32> to vector<8x8xf32>
    %134 = arith.mulf %129, %133 : vector<8x8xf32>
    %135 = arith.truncf %134 : vector<8x8xf32> to vector<8x8xbf16>
    %cst_40 = arith.constant dense<0.000000e+00> : vector<8x128xf32>
    %136 = tpu.matmul %135, %120, %cst_40 {dimension_numbers = #tpu.dot_dimension_numbers<[1], [0], [0], [1], [0, 0, 1, 1], [], []>} : vector<8x8xbf16>, vector<8x128xbf16>, vector<8x128xf32> -> vector<8x128xf32>
    %137 = tpu.concatenate %114, %136 in 1 : vector<8x128xf32>, vector<8x128xf32> -> vector<8x256xf32>
    %138 = tpu.concatenate %89, %137 in 0 : vector<8x256xf32>, vector<8x256xf32> -> vector<16x256xf32>
    %c0_41 = arith.constant 0 : index
    %c0_42 = arith.constant 0 : index
    %c0_43 = arith.constant 0 : index
    %139 = vector.load %arg9[%c0_41, %c0_42, %c0_43] : memref<1x256x256xbf16, #tpu.memory_space<vmem>>, vector<1x256x256xbf16>
    %140 = vector.shape_cast %139 : vector<1x256x256xbf16> to vector<256x256xbf16>
    %141 = arith.truncf %138 : vector<16x256xf32> to vector<16x256xbf16>
    %cst_44 = arith.constant dense<0.000000e+00> : vector<16x256xf32>
    %142 = tpu.matmul %141, %140, %cst_44 {dimension_numbers = #tpu.dot_dimension_numbers<[1], [0], [0], [1], [0, 0, 1, 1], [], []>} : vector<16x256xbf16>, vector<256x256xbf16>, vector<16x256xf32> -> vector<16x256xf32>
    %143 = arith.addf %3, %142 : vector<16x256xf32>
    %c0_45 = arith.constant 0 : index
    %c0_46 = arith.constant 0 : index
    %c0_47 = arith.constant 0 : index
    %144 = vector.load %arg10[%c0_45, %c0_46, %c0_47] : memref<1x1x256xf32, #tpu.memory_space<vmem>>, vector<1x1x256xf32>
    %145 = vector.shape_cast %144 : vector<1x1x256xf32> to vector<1x256xf32>
    %146 = vector.broadcast %145 : vector<1x256xf32> to vector<16x256xf32>
    %147 = arith.addf %143, %146 : vector<16x256xf32>
    %c0_48 = arith.constant 0 : index
    %c0_49 = arith.constant 0 : index
    %c0_50 = arith.constant 0 : index
    %148 = vector.load %arg11[%c0_48, %c0_49, %c0_50] : memref<1x1x256xf32, #tpu.memory_space<vmem>>, vector<1x1x256xf32>
    %149 = vector.shape_cast %148 : vector<1x1x256xf32> to vector<1x256xf32>
    %c0_51 = arith.constant 0 : index
    %c0_52 = arith.constant 0 : index
    %c0_53 = arith.constant 0 : index
    %150 = vector.load %arg12[%c0_51, %c0_52, %c0_53] : memref<1x1x256xf32, #tpu.memory_space<vmem>>, vector<1x1x256xf32>
    %151 = vector.shape_cast %150 : vector<1x1x256xf32> to vector<1x256xf32>
    %cst_54 = arith.constant dense<0.000000e+00> : vector<16xf32>
    %152 = vector.multi_reduction <add>, %147, %cst_54 [1] : vector<16x256xf32> to vector<16xf32>
    %153 = vector.shape_cast %152 : vector<16xf32> to vector<16x1xf32>
    %cst_55 = arith.constant 2.560000e+02 : f32
    %154 = vector.broadcast %cst_55 : f32 to vector<16x1xf32>
    %155 = arith.divf %153, %154 : vector<16x1xf32>
    %156 = vector.broadcast %155 : vector<16x1xf32> to vector<16x256xf32>
    %157 = arith.subf %147, %156 : vector<16x256xf32>
    %158 = arith.mulf %157, %157 : vector<16x256xf32>
    %cst_56 = arith.constant dense<0.000000e+00> : vector<16xf32>
    %159 = vector.multi_reduction <add>, %158, %cst_56 [1] : vector<16x256xf32> to vector<16xf32>
    %160 = vector.shape_cast %159 : vector<16xf32> to vector<16x1xf32>
    %cst_57 = arith.constant 2.560000e+02 : f32
    %161 = vector.broadcast %cst_57 : f32 to vector<16x1xf32>
    %162 = arith.divf %160, %161 : vector<16x1xf32>
    %163 = vector.broadcast %155 : vector<16x1xf32> to vector<16x256xf32>
    %164 = arith.subf %147, %163 : vector<16x256xf32>
    %cst_58 = arith.constant 9.99999974E-6 : f32
    %165 = vector.broadcast %cst_58 : f32 to vector<16x1xf32>
    %166 = arith.addf %162, %165 : vector<16x1xf32>
    %167 = math.rsqrt %166 : vector<16x1xf32>
    %168 = vector.broadcast %167 : vector<16x1xf32> to vector<16x256xf32>
    %169 = arith.mulf %164, %168 : vector<16x256xf32>
    %170 = vector.broadcast %149 : vector<1x256xf32> to vector<16x256xf32>
    %171 = arith.mulf %169, %170 : vector<16x256xf32>
    %172 = vector.broadcast %151 : vector<1x256xf32> to vector<16x256xf32>
    %173 = arith.addf %171, %172 : vector<16x256xf32>
    %c0_59 = arith.constant 0 : index
    %c0_60 = arith.constant 0 : index
    %c0_61 = arith.constant 0 : index
    %174 = vector.load %arg13[%c0_59, %c0_60, %c0_61] : memref<1x256x1024xbf16, #tpu.memory_space<vmem>>, vector<1x256x1024xbf16>
    %175 = vector.shape_cast %174 : vector<1x256x1024xbf16> to vector<256x1024xbf16>
    %176 = arith.truncf %173 : vector<16x256xf32> to vector<16x256xbf16>
    %cst_62 = arith.constant dense<0.000000e+00> : vector<16x1024xf32>
    %177 = tpu.matmul %176, %175, %cst_62 {dimension_numbers = #tpu.dot_dimension_numbers<[1], [0], [0], [1], [0, 0, 1, 1], [], []>} : vector<16x256xbf16>, vector<256x1024xbf16>, vector<16x1024xf32> -> vector<16x1024xf32>
    %c0_63 = arith.constant 0 : index
    %c0_64 = arith.constant 0 : index
    %c0_65 = arith.constant 0 : index
    %178 = vector.load %arg14[%c0_63, %c0_64, %c0_65] : memref<1x1x1024xf32, #tpu.memory_space<vmem>>, vector<1x1x1024xf32>
    %179 = vector.shape_cast %178 : vector<1x1x1024xf32> to vector<1x1024xf32>
    %180 = vector.broadcast %179 : vector<1x1024xf32> to vector<16x1024xf32>
    %181 = arith.addf %177, %180 : vector<16x1024xf32>
    %cst_66 = arith.constant 1.702000e+00 : f32
    %182 = vector.broadcast %cst_66 : f32 to vector<16x1024xf32>
    %183 = arith.mulf %182, %181 : vector<16x1024xf32>
    %184 = arith.negf %183 : vector<16x1024xf32>
    %185 = math.exp %184 : vector<16x1024xf32>
    %cst_67 = arith.constant 1.000000e+00 : f32
    %186 = vector.broadcast %cst_67 : f32 to vector<16x1024xf32>
    %187 = arith.addf %186, %185 : vector<16x1024xf32>
    %188 = arith.divf %186, %187 : vector<16x1024xf32>
    %189 = arith.mulf %181, %188 : vector<16x1024xf32>
    %c0_68 = arith.constant 0 : index
    %c0_69 = arith.constant 0 : index
    %c0_70 = arith.constant 0 : index
    %190 = vector.load %arg15[%c0_68, %c0_69, %c0_70] : memref<1x1024x256xbf16, #tpu.memory_space<vmem>>, vector<1x1024x256xbf16>
    %191 = vector.shape_cast %190 : vector<1x1024x256xbf16> to vector<1024x256xbf16>
    %192 = arith.truncf %189 : vector<16x1024xf32> to vector<16x1024xbf16>
    %cst_71 = arith.constant dense<0.000000e+00> : vector<16x256xf32>
    %193 = tpu.matmul %192, %191, %cst_71 {dimension_numbers = #tpu.dot_dimension_numbers<[1], [0], [0], [1], [0, 0, 1, 1], [], []>} : vector<16x1024xbf16>, vector<1024x256xbf16>, vector<16x256xf32> -> vector<16x256xf32>
    %c0_72 = arith.constant 0 : index
    %c0_73 = arith.constant 0 : index
    %c0_74 = arith.constant 0 : index
    %194 = vector.load %arg16[%c0_72, %c0_73, %c0_74] : memref<1x1x256xf32, #tpu.memory_space<vmem>>, vector<1x1x256xf32>
    %195 = vector.shape_cast %194 : vector<1x1x256xf32> to vector<1x256xf32>
    %196 = vector.broadcast %195 : vector<1x256xf32> to vector<16x256xf32>
    %197 = arith.addf %193, %196 : vector<16x256xf32>
    %198 = arith.addf %147, %197 : vector<16x256xf32>
    %c0_75 = arith.constant 0 : index
    %c0_76 = arith.constant 0 : index
    %199 = vector.load %arg21[%c0_75, %c0_76] : memref<16x256xf32, #tpu.memory_space<vmem>>, vector<16x256xf32>
    tpu.vector_store %arg21[%c0_75, %c0_76], %198 {strides = array<i32>} : memref<16x256xf32, #tpu.memory_space<vmem>>, vector<16x256xf32>,
    %c1_i32 = arith.constant 1 : i32
    %200 = arith.cmpi eq, %arg0, %c1_i32 : i32
    %201 = arith.extui %200 : i1 to i32
    %c0_i32_77 = arith.constant 0 : i32
    %202 = arith.cmpi ne, %201, %c0_i32_77 : i32
    scf.if %202 {
      %c0_78 = arith.constant 0 : index
      %c0_79 = arith.constant 0 : index
      %203 = vector.load %arg4[%c0_78, %c0_79] : memref<2x16xf32, #tpu.memory_space<vmem>>, vector<2x16xf32>
      %cst_80 = arith.constant dense<0.000000e+00> : vector<2x256xf32>
      %204 = tpu.matmul %203, %198, %cst_80 {dimension_numbers = #tpu.dot_dimension_numbers<[1], [0], [0], [1], [0, 0, 1, 1], [], []>} : vector<2x16xf32>, vector<16x256xf32>, vector<2x256xf32> -> vector<2x256xf32>
      %c0_81 = arith.constant 0 : index
      %c0_82 = arith.constant 0 : index
      %205 = vector.load %arg17[%c0_81, %c0_82] : memref<1x256xf32, #tpu.memory_space<vmem>>, vector<1x256xf32>
      %c0_83 = arith.constant 0 : index
      %c0_84 = arith.constant 0 : index
      %206 = vector.load %arg18[%c0_83, %c0_84] : memref<1x256xf32, #tpu.memory_space<vmem>>, vector<1x256xf32>
      %cst_85 = arith.constant dense<0.000000e+00> : vector<2xf32>
      %207 = vector.multi_reduction <add>, %204, %cst_85 [1] : vector<2x256xf32> to vector<2xf32>
      %208 = vector.shape_cast %207 : vector<2xf32> to vector<2x1xf32>
      %cst_86 = arith.constant 2.560000e+02 : f32
      %209 = vector.broadcast %cst_86 : f32 to vector<2x1xf32>
      %210 = arith.divf %208, %209 : vector<2x1xf32>
      %211 = vector.broadcast %210 : vector<2x1xf32> to vector<2x256xf32>
      %212 = arith.subf %204, %211 : vector<2x256xf32>
      %213 = arith.mulf %212, %212 : vector<2x256xf32>
      %cst_87 = arith.constant dense<0.000000e+00> : vector<2xf32>
      %214 = vector.multi_reduction <add>, %213, %cst_87 [1] : vector<2x256xf32> to vector<2xf32>
      %215 = vector.shape_cast %214 : vector<2xf32> to vector<2x1xf32>
      %cst_88 = arith.constant 2.560000e+02 : f32
      %216 = vector.broadcast %cst_88 : f32 to vector<2x1xf32>
      %217 = arith.divf %215, %216 : vector<2x1xf32>
      %218 = vector.broadcast %210 : vector<2x1xf32> to vector<2x256xf32>
      %219 = arith.subf %204, %218 : vector<2x256xf32>
      %cst_89 = arith.constant 9.99999974E-6 : f32
      %220 = vector.broadcast %cst_89 : f32 to vector<2x1xf32>
      %221 = arith.addf %217, %220 : vector<2x1xf32>
      %222 = math.rsqrt %221 : vector<2x1xf32>
      %223 = vector.broadcast %222 : vector<2x1xf32> to vector<2x256xf32>
      %224 = arith.mulf %219, %223 : vector<2x256xf32>
      %225 = vector.broadcast %205 : vector<1x256xf32> to vector<2x256xf32>
      %226 = arith.mulf %224, %225 : vector<2x256xf32>
      %227 = vector.broadcast %206 : vector<1x256xf32> to vector<2x256xf32>
      %228 = arith.addf %226, %227 : vector<2x256xf32>
      %c0_90 = arith.constant 0 : index
      %c0_91 = arith.constant 0 : index
      %229 = vector.load %arg19[%c0_90, %c0_91] : memref<256x128xbf16, #tpu.memory_space<vmem>>, vector<256x128xbf16>
      %230 = arith.truncf %228 : vector<2x256xf32> to vector<2x256xbf16>
      %cst_92 = arith.constant dense<0.000000e+00> : vector<2x128xf32>
      %231 = tpu.matmul %230, %229, %cst_92 {dimension_numbers = #tpu.dot_dimension_numbers<[1], [0], [0], [1], [0, 0, 1, 1], [], []>} : vector<2x256xbf16>, vector<256x128xbf16>, vector<2x128xf32> -> vector<2x128xf32>
      %c0_93 = arith.constant 0 : index
      %c0_94 = arith.constant 0 : index
      %232 = vector.load %arg20[%c0_93, %c0_94] : memref<2x128xf32, #tpu.memory_space<vmem>>, vector<2x128xf32>
      tpu.vector_store %arg20[%c0_93, %c0_94], %231 {strides = array<i32>} : memref<2x128xf32, #tpu.memory_space<vmem>>, vector<2x128xf32>,
    } else {
    }
    return
  }
  func.func @transform_0(%arg0: i32) -> (i32, i32) {
    %c0_i32 = arith.constant 0 : i32
    %c0_i32_0 = arith.constant 0 : i32
    %c0_i32_1 = arith.constant 0 : i32
    return %c0_i32, %c0_i32_0 : i32, i32
  }
  func.func @transform_1(%arg0: i32) -> (i32, i32) {
    %c0_i32 = arith.constant 0 : i32
    %c0_i32_0 = arith.constant 0 : i32
    %c0_i32_1 = arith.constant 0 : i32
    return %c0_i32, %c0_i32_0 : i32, i32
  }
  func.func @transform_2(%arg0: i32) -> (i32, i32) {
    %c0_i32 = arith.constant 0 : i32
    %c0_i32_0 = arith.constant 0 : i32
    %c0_i32_1 = arith.constant 0 : i32
    return %c0_i32, %c0_i32_0 : i32, i32
  }
  func.func @transform_3(%arg0: i32) -> (i32, i32) {
    %c0_i32 = arith.constant 0 : i32
    %c0_i32_0 = arith.constant 0 : i32
    %c0_i32_1 = arith.constant 0 : i32
    return %c0_i32, %c0_i32_0 : i32, i32
  }
  func.func @transform_4(%arg0: i32) -> (i32, i32, i32) {
    %c0_i32 = arith.constant 0 : i32
    %c0_i32_0 = arith.constant 0 : i32
    %c0_i32_1 = arith.constant 0 : i32
    return %arg0, %c0_i32, %c0_i32_0 : i32, i32, i32
  }
  func.func @transform_5(%arg0: i32) -> (i32, i32, i32) {
    %c0_i32 = arith.constant 0 : i32
    %c0_i32_0 = arith.constant 0 : i32
    %c0_i32_1 = arith.constant 0 : i32
    return %arg0, %c0_i32, %c0_i32_0 : i32, i32, i32
  }
  func.func @transform_6(%arg0: i32) -> (i32, i32, i32) {
    %c0_i32 = arith.constant 0 : i32
    %c0_i32_0 = arith.constant 0 : i32
    %c0_i32_1 = arith.constant 0 : i32
    return %arg0, %c0_i32, %c0_i32_0 : i32, i32, i32
  }
  func.func @transform_7(%arg0: i32) -> (i32, i32, i32) {
    %c0_i32 = arith.constant 0 : i32
    %c0_i32_0 = arith.constant 0 : i32
    %c0_i32_1 = arith.constant 0 : i32
    return %arg0, %c0_i32, %c0_i32_0 : i32, i32, i32
  }
  func.func @transform_8(%arg0: i32) -> (i32, i32, i32) {
    %c0_i32 = arith.constant 0 : i32
    %c0_i32_0 = arith.constant 0 : i32
    %c0_i32_1 = arith.constant 0 : i32
    return %arg0, %c0_i32, %c0_i32_0 : i32, i32, i32
  }
  func.func @transform_9(%arg0: i32) -> (i32, i32, i32) {
    %c0_i32 = arith.constant 0 : i32
    %c0_i32_0 = arith.constant 0 : i32
    %c0_i32_1 = arith.constant 0 : i32
    return %arg0, %c0_i32, %c0_i32_0 : i32, i32, i32
  }
  func.func @transform_10(%arg0: i32) -> (i32, i32, i32) {
    %c0_i32 = arith.constant 0 : i32
    %c0_i32_0 = arith.constant 0 : i32
    %c0_i32_1 = arith.constant 0 : i32
    return %arg0, %c0_i32, %c0_i32_0 : i32, i32, i32
  }
  func.func @transform_11(%arg0: i32) -> (i32, i32, i32) {
    %c0_i32 = arith.constant 0 : i32
    %c0_i32_0 = arith.constant 0 : i32
    %c0_i32_1 = arith.constant 0 : i32
    return %arg0, %c0_i32, %c0_i32_0 : i32, i32, i32
  }
  func.func @transform_12(%arg0: i32) -> (i32, i32, i32) {
    %c0_i32 = arith.constant 0 : i32
    %c0_i32_0 = arith.constant 0 : i32
    %c0_i32_1 = arith.constant 0 : i32
    return %arg0, %c0_i32, %c0_i32_0 : i32, i32, i32
  }
  func.func @transform_13(%arg0: i32) -> (i32, i32, i32) {
    %c0_i32 = arith.constant 0 : i32
    %c0_i32_0 = arith.constant 0 : i32
    %c0_i32_1 = arith.constant 0 : i32
    return %arg0, %c0_i32, %c0_i32_0 : i32, i32, i32
  }
  func.func @transform_14(%arg0: i32) -> (i32, i32, i32) {
    %c0_i32 = arith.constant 0 : i32
    %c0_i32_0 = arith.constant 0 : i32
    %c0_i32_1 = arith.constant 0 : i32
    return %arg0, %c0_i32, %c0_i32_0 : i32, i32, i32
  }
  func.func @transform_15(%arg0: i32) -> (i32, i32, i32) {
    %c0_i32 = arith.constant 0 : i32
    %c0_i32_0 = arith.constant 0 : i32
    %c0_i32_1 = arith.constant 0 : i32
    return %arg0, %c0_i32, %c0_i32_0 : i32, i32, i32
  }
  func.func @transform_16(%arg0: i32) -> (i32, i32) {
    %c0_i32 = arith.constant 0 : i32
    %c0_i32_0 = arith.constant 0 : i32
    %c0_i32_1 = arith.constant 0 : i32
    return %c0_i32, %c0_i32_0 : i32, i32
  }
  func.func @transform_17(%arg0: i32) -> (i32, i32) {
    %c0_i32 = arith.constant 0 : i32
    %c0_i32_0 = arith.constant 0 : i32
    %c0_i32_1 = arith.constant 0 : i32
    return %c0_i32, %c0_i32_0 : i32, i32
  }
  func.func @transform_18(%arg0: i32) -> (i32, i32) {
    %c0_i32 = arith.constant 0 : i32
    %c0_i32_0 = arith.constant 0 : i32
    %c0_i32_1 = arith.constant 0 : i32
    return %c0_i32, %c0_i32_0 : i32, i32
  }
  func.func @transform_19(%arg0: i32) -> (i32, i32) {
    %c0_i32 = arith.constant 0 : i32
    %c0_i32_0 = arith.constant 0 : i32
    %c0_i32_1 = arith.constant 0 : i32
    return %c0_i32, %c0_i32_0 : i32, i32
  }
}

</mosaic_0001>

<llo_original>
// kernel: text_encoder_forward.1
$region0: #{text_encoder_forward.1}
  #allocation0 [shape = 'u32[]', space=smem, size = 0x4, offset = 0x4, fixed_abs, tag = 'smem constant byte address 0x4 - core index']
  #allocation1 [shape = 'u32[72,128]{1,0:T(1,128)}', space=vmem, size = 0x9000, scoped, tag = 'internal scratch']
  #allocation2 [shape = 'f32[16,256]{1,0:T(8,128)}', space=vmem, size = 0x4000, scoped, tag = 'scratch operand']
  %s0 = inlined_call_operand.vmem [shape: f32[16,256], index: 0, kind: input, shape index: {}]
  %s1 = inlined_call_operand.vmem [shape: f32[8,256], index: 1, kind: input, shape index: {}]
  %s2 = inlined_call_operand.vmem [shape: f32[8,8], index: 2, kind: input, shape index: {}]
  %s3 = inlined_call_operand.vmem [shape: f32[2,16], index: 3, kind: input, shape index: {}]
  %s4 = inlined_call_operand.vmem [shape: f32[2,1,256], index: 4, kind: input, shape index: {}]
  %s5 = inlined_call_operand.vmem [shape: f32[2,1,256], index: 5, kind: input, shape index: {}]
  %s6 = inlined_call_operand.hbm [shape: bf16[2,256,768], index: 6, kind: input, shape index: {}]
  %s7 = inlined_call_operand.vmem [shape: f32[2,1,768], index: 7, kind: input, shape index: {}]
  %s8 = inlined_call_operand.hbm [shape: bf16[2,256,256], index: 8, kind: input, shape index: {}]
  %s9 = inlined_call_operand.vmem [shape: f32[2,1,256], index: 9, kind: input, shape index: {}]
  %s10 = inlined_call_operand.vmem [shape: f32[2,1,256], index: 10, kind: input, shape index: {}]
  %s11 = inlined_call_operand.vmem [shape: f32[2,1,256], index: 11, kind: input, shape index: {}]
  %s12 = inlined_call_operand.hbm [shape: bf16[2,256,1024], index: 12, kind: input, shape index: {}]
  %s13 = inlined_call_operand.vmem [shape: f32[2,1,1024], index: 13, kind: input, shape index: {}]
  %s14 = inlined_call_operand.hbm [shape: bf16[2,1024,256], index: 14, kind: input, shape index: {}]
  %s15 = inlined_call_operand.vmem [shape: f32[2,1,256], index: 15, kind: input, shape index: {}]
  %s16 = inlined_call_operand.vmem [shape: f32[1,256], index: 16, kind: input, shape index: {}]
  %s17 = inlined_call_operand.vmem [shape: f32[1,256], index: 17, kind: input, shape index: {}]
  %s18 = inlined_call_operand.vmem [shape: bf16[256,128], index: 18, kind: input, shape index: {}]
  %s19 = inlined_call_operand.hbm [shape: f32[2,128], index: 19, kind: output, shape index: {}]
  %s20 = sld [smem:[#allocation0]]
  $region133: #{text_encoder_forward.1} parent=0
    _
  %s22 = ssub.s32 1, %s20
  %s23 = scalar_select 0, %s22, %s20
  $region1: #{text_encoder_forward.1} parent=0
    #allocation3 [shape = 'u8[786432]{0}', space=vmem, size = 0xc0000, scoped, tag = 'input window, operand 6']
    #allocation4 [shape = 's32[2]{0}', space=sflag, size = 0x8, scoped, tag = 'scoped memory for text_encoder_forward.1']
    #allocation5 [shape = 's32[2]{0}', space=sflag, size = 0x8, scoped, tag = 'scoped memory for text_encoder_forward.1']
    #allocation6 [shape = 'u8[262144]{0}', space=vmem, size = 0x40000, scoped, tag = 'input window, operand 8']
    #allocation7 [shape = 's32[2]{0}', space=sflag, size = 0x8, scoped, tag = 'scoped memory for text_encoder_forward.1']
    #allocation8 [shape = 'u8[1048576]{0}', space=vmem, size = 0x100000, scoped, tag = 'input window, operand 12']
    #allocation9 [shape = 'u8[1048576]{0}', space=vmem, size = 0x100000, scoped, tag = 'input window, operand 14']
    #allocation10 [shape = 's32[2]{0}', space=sflag, size = 0x8, scoped, tag = 'scoped memory for text_encoder_forward.1']
    #allocation11 [shape = 'u8[1024]{0}', space=vmem, size = 0x400, scoped, tag = 'output window, operand 0, single buffered']
    %24 = vsyncpa [#allocation4], 0
    %s25 = scalar_lea.sflag [#allocation4], 1
    %26 = vsyncpa %s25, 0
    %27 = vsyncpa [#allocation7], 0
    %s28 = scalar_lea.sflag [#allocation7], 1
    %29 = vsyncpa %s28, 0
    %30 = vsyncpa [#allocation10], 0
    %s31 = scalar_lea.sflag [#allocation10], 1
    %32 = vsyncpa %s31, 0
    %33 = vsyncpa [#allocation5], 0
    loop: start=0, step=1, limit=4
    $region2: #{text_encoder_forward.1} parent=1 // loop_pre_header
      _
    $region3: #{text_encoder_forward.1} parent=1 // loop_header
      %s35 = sphi 0, %s39
      %p36 = scmp.ge.s32.totalorder %s35, 4
      %s43 = sphi 0, %s43
      %s45 = sphi 0, %s43
      %s46 = sphi 0, %s45
      %s60 = sphi 0, %s46
      %s64 = sphi 0, %s64
      %s66 = sphi 0, %s64
      %s67 = sphi 0, %s66
      %s81 = sphi 0, %s67
      %s85 = sphi 0, %s85
      %s87 = sphi 0, %s85
      %s88 = sphi 0, %s87
      %s102 = sphi 0, %s88
      %s106 = sphi 0, %s106
      %s108 = sphi 0, %s106
      %s109 = sphi 0, %s108
      %s123 = sphi 0, %s109
      %s129 = sphi 0, %s131
      %s132 = sphi 0, %s129
      %s133 = sphi 0, %s132
      %s149 = sphi 0, %s133
      %s155 = sphi 0, %s157
      %s158 = sphi 0, %s155
      %s159 = sphi 0, %s158
      %s175 = sphi 0, %s159
      %s181 = sphi 0, %s183
      %s184 = sphi 0, %s181
      %s185 = sphi 0, %s184
      %s201 = sphi 0, %s185
      %s207 = sphi 0, %s209
      %s210 = sphi 0, %s207
      %s211 = sphi 0, %s210
      %s227 = sphi 0, %s211
      %s233 = sphi 0, %s235
      %s236 = sphi 0, %s233
      %s237 = sphi 0, %s236
      %s253 = sphi 0, %s237
      %s259 = sphi 0, %s261
      %s262 = sphi 0, %s259
      %s263 = sphi 0, %s262
      %s279 = sphi 0, %s263
      %s285 = sphi 0, %s287
      %s288 = sphi 0, %s285
      %s289 = sphi 0, %s288
      %s305 = sphi 0, %s289
      %s311 = sphi 0, %s313
      %s314 = sphi 0, %s311
      %s315 = sphi 0, %s314
      %s331 = sphi 0, %s315
      %s337 = sphi 0, %s339
      %s340 = sphi 0, %s337
      %s341 = sphi 0, %s340
      %s357 = sphi 0, %s341
      %s363 = sphi 0, %s365
      %s366 = sphi 0, %s363
      %s367 = sphi 0, %s366
      %s383 = sphi 0, %s367
      %s389 = sphi 0, %s391
      %s392 = sphi 0, %s389
      %s393 = sphi 0, %s392
      %s409 = sphi 0, %s393
      %s415 = sphi 0, %s417
      %s418 = sphi 0, %s415
      %s419 = sphi 0, %s418
      %s435 = sphi 0, %s419
      %s439 = sphi 0, %s439
      %s441 = sphi 0, %s439
      %s442 = sphi 0, %s441
      %s456 = sphi 0, %s442
      %s460 = sphi 0, %s460
      %s462 = sphi 0, %s460
      %s463 = sphi 0, %s462
      %s477 = sphi 0, %s463
      %s481 = sphi 0, %s481
      %s483 = sphi 0, %s481
      %s484 = sphi 0, %s483
      %s498 = sphi 0, %s484
      %s502 = sphi 0, %s502
      %s504 = sphi 0, %s502
      %s505 = sphi 0, %s504
      %s519 = sphi 0, %s505
    $region4: #{text_encoder_forward.1} parent=1 // loop_header_branch
      %38 = sbr.rel (%p36) target = $region8
    $region5: #{text_encoder_forward.1} parent=1 // loop_body
      %s40 = ssub.s32 %s35, 1
      %s41 = ssub.s32 %s35, 2
      %s42 = sadd.s32 %s35, 1
      %s44 = sadd.s32 %s43, 1
      %p47 = scmp.eq.s32.totalorder %s35, 1
      %p48 = scmp.ne.s32.totalorder %s43, %s45
      %p49 = scmp.eq.s32.totalorder %s35, 0
      %p50 = por %p48, %p49
      %p51 = scmp.ne.s32.totalorder %s43, %s45
      %p52 = scmp.eq.s32.totalorder %s40, 1
      %p53 = por %p51, %p52
      %p54 = scmp.ne.s32.totalorder %s45, %s46
      %p55 = scmp.eq.s32.totalorder %s40, 0
      %p56 = por %p54, %p55
      %p57 = scmp.ne.s32.totalorder %s45, %s46
      %p58 = scmp.eq.s32.totalorder %s41, 1
      %p59 = por %p57, %p58
      %p61 = scmp.ne.s32.totalorder %s46, %s60
      %p62 = scmp.eq.s32.totalorder %s41, 0
      %p63 = por %p61, %p62
      %s65 = sadd.s32 %s64, 1
      %p68 = scmp.eq.s32.totalorder %s35, 1
      %p69 = scmp.ne.s32.totalorder %s64, %s66
      %p70 = scmp.eq.s32.totalorder %s35, 0
      %p71 = por %p69, %p70
      %p72 = scmp.ne.s32.totalorder %s64, %s66
      %p73 = scmp.eq.s32.totalorder %s40, 1
      %p74 = por %p72, %p73
      %p75 = scmp.ne.s32.totalorder %s66, %s67
      %p76 = scmp.eq.s32.totalorder %s40, 0
      %p77 = por %p75, %p76
      %p78 = scmp.ne.s32.totalorder %s66, %s67
      %p79 = scmp.eq.s32.totalorder %s41, 1
      %p80 = por %p78, %p79
      %p82 = scmp.ne.s32.totalorder %s67, %s81
      %p83 = scmp.eq.s32.totalorder %s41, 0
      %p84 = por %p82, %p83
      %s86 = sadd.s32 %s85, 1
      %p89 = scmp.eq.s32.totalorder %s35, 1
      %p90 = scmp.ne.s32.totalorder %s85, %s87
      %p91 = scmp.eq.s32.totalorder %s35, 0
      %p92 = por %p90, %p91
      %p93 = scmp.ne.s32.totalorder %s85, %s87
      %p94 = scmp.eq.s32.totalorder %s40, 1
      %p95 = por %p93, %p94
      %p96 = scmp.ne.s32.totalorder %s87, %s88
      %p97 = scmp.eq.s32.totalorder %s40, 0
      %p98 = por %p96, %p97
      %p99 = scmp.ne.s32.totalorder %s87, %s88
      %p100 = scmp.eq.s32.totalorder %s41, 1
      %p101 = por %p99, %p100
      %p103 = scmp.ne.s32.totalorder %s88, %s102
      %p104 = scmp.eq.s32.totalorder %s41, 0
      %p105 = por %p103, %p104
      %s107 = sadd.s32 %s106, 1
      %p110 = scmp.eq.s32.totalorder %s35, 1
      %p111 = scmp.ne.s32.totalorder %s106, %s108
      %p112 = scmp.eq.s32.totalorder %s35, 0
      %p113 = por %p111, %p112
      %p114 = scmp.ne.s32.totalorder %s106, %s108
      %p115 = scmp.eq.s32.totalorder %s40, 1
      %p116 = por %p114, %p115
      %p117 = scmp.ne.s32.totalorder %s108, %s109
      %p118 = scmp.eq.s32.totalorder %s40, 0
      %p119 = por %p117, %p118
      %p120 = scmp.ne.s32.totalorder %s108, %s109
      %p121 = scmp.eq.s32.totalorder %s41, 1
      %p122 = por %p120, %p121
      %p124 = scmp.ne.s32.totalorder %s109, %s123
      %p125 = scmp.eq.s32.totalorder %s41, 0
      %p126 = por %p124, %p125
      %s127 = ssub.s32 %s35, %s42
      %p128 = scmp.eq.s32.totalorder %s127, 0
      %s130 = sadd.s32 %s129, 1
      %s131 = scalar_select %p128, %s129, %s130
      %p134 = pneg %p128
      %p135 = scmp.eq.s32.totalorder %s35, 1
      %p136 = por %p134, %p135
      %p137 = scmp.ne.s32.totalorder %s129, %s132
      %p138 = scmp.eq.s32.totalorder %s35, 0
      %p139 = por %p137, %p138
      %p140 = scmp.ne.s32.totalorder %s129, %s132
      %p141 = scmp.eq.s32.totalorder %s40, 1
      %p142 = por %p140, %p141
      %p143 = scmp.ne.s32.totalorder %s132, %s133
      %p144 = scmp.eq.s32.totalorder %s40, 0
      %p145 = por %p143, %p144
      %p146 = scmp.ne.s32.totalorder %s132, %s133
      %p147 = scmp.eq.s32.totalorder %s41, 1
      %p148 = por %p146, %p147
      %p150 = scmp.ne.s32.totalorder %s133, %s149
      %p151 = scmp.eq.s32.totalorder %s41, 0
      %p152 = por %p150, %p151
      %s153 = ssub.s32 %s35, %s42
      %p154 = scmp.eq.s32.totalorder %s153, 0
      %s156 = sadd.s32 %s155, 1
      %s157 = scalar_select %p154, %s155, %s156
      %p160 = pneg %p154
      %p161 = scmp.eq.s32.totalorder %s35, 1
      %p162 = por %p160, %p161
      %p163 = scmp.ne.s32.totalorder %s155, %s158
      %p164 = scmp.eq.s32.totalorder %s35, 0
      %p165 = por %p163, %p164
      %p166 = scmp.ne.s32.totalorder %s155, %s158
      %p167 = scmp.eq.s32.totalorder %s40, 1
      %p168 = por %p166, %p167
      %p169 = scmp.ne.s32.totalorder %s158, %s159
      %p170 = scmp.eq.s32.totalorder %s40, 0
      %p171 = por %p169, %p170
      %p172 = scmp.ne.s32.totalorder %s158, %s159
      %p173 = scmp.eq.s32.totalorder %s41, 1
      %p174 = por %p172, %p173
      %p176 = scmp.ne.s32.totalorder %s159, %s175
      %p177 = scmp.eq.s32.totalorder %s41, 0
      %p178 = por %p176, %p177
      %s179 = ssub.s32 %s35, %s42
      %p180 = scmp.eq.s32.totalorder %s179, 0
      %s182 = sadd.s32 %s181, 1
      %s183 = scalar_select %p180, %s181, %s182
      %p186 = pneg %p180
      %p187 = scmp.eq.s32.totalorder %s35, 1
      %p188 = por %p186, %p187
      %p189 = scmp.ne.s32.totalorder %s181, %s184
      %p190 = scmp.eq.s32.totalorder %s35, 0
      %p191 = por %p189, %p190
      %p192 = scmp.ne.s32.totalorder %s181, %s184
      %p193 = scmp.eq.s32.totalorder %s40, 1
      %p194 = por %p192, %p193
      %p195 = scmp.ne.s32.totalorder %s184, %s185
      %p196 = scmp.eq.s32.totalorder %s40, 0
      %p197 = por %p195, %p196
      %p198 = scmp.ne.s32.totalorder %s184, %s185
      %p199 = scmp.eq.s32.totalorder %s41, 1
      %p200 = por %p198, %p199
      %p202 = scmp.ne.s32.totalorder %s185, %s201
      %p203 = scmp.eq.s32.totalorder %s41, 0
      %p204 = por %p202, %p203
      %s205 = ssub.s32 %s35, %s42
      %p206 = scmp.eq.s32.totalorder %s205, 0
      %s208 = sadd.s32 %s207, 1
      %s209 = scalar_select %p206, %s207, %s208
      %p212 = pneg %p206
      %p213 = scmp.eq.s32.totalorder %s35, 1
      %p214 = por %p212, %p213
      %p215 = scmp.ne.s32.totalorder %s207, %s210
      %p216 = scmp.eq.s32.totalorder %s35, 0
      %p217 = por %p215, %p216
      %p218 = scmp.ne.s32.totalorder %s207, %s210
      %p219 = scmp.eq.s32.totalorder %s40, 1
      %p220 = por %p218, %p219
      %p221 = scmp.ne.s32.totalorder %s210, %s211
      %p222 = scmp.eq.s32.totalorder %s40, 0
      %p223 = por %p221, %p222
      %p224 = scmp.ne.s32.totalorder %s210, %s211
      %p225 = scmp.eq.s32.totalorder %s41, 1
      %p226 = por %p224, %p225
      %p228 = scmp.ne.s32.totalorder %s211, %s227
      %p229 = scmp.eq.s32.totalorder %s41, 0
      %p230 = por %p228, %p229
      %s231 = ssub.s32 %s35, %s42
      %p232 = scmp.eq.s32.totalorder %s231, 0
      %s234 = sadd.s32 %s233, 1
      %s235 = scalar_select %p232, %s233, %s234
      %p238 = pneg %p232
      %p239 = scmp.eq.s32.totalorder %s35, 1
      %p240 = por %p238, %p239
      %p241 = scmp.ne.s32.totalorder %s233, %s236
      %p242 = scmp.eq.s32.totalorder %s35, 0
      %p243 = por %p241, %p242
      %p244 = scmp.ne.s32.totalorder %s233, %s236
      %p245 = scmp.eq.s32.totalorder %s40, 1
      %p246 = por %p244, %p245
      %p247 = scmp.ne.s32.totalorder %s236, %s237
      %p248 = scmp.eq.s32.totalorder %s40, 0
      %p249 = por %p247, %p248
      %p250 = scmp.ne.s32.totalorder %s236, %s237
      %p251 = scmp.eq.s32.totalorder %s41, 1
      %p252 = por %p250, %p251
      %p254 = scmp.ne.s32.totalorder %s237, %s253
      %p255 = scmp.eq.s32.totalorder %s41, 0
      %p256 = por %p254, %p255
      %s257 = ssub.s32 %s35, %s42
      %p258 = scmp.eq.s32.totalorder %s257, 0
      %s260 = sadd.s32 %s259, 1
      %s261 = scalar_select %p258, %s259, %s260
      %p264 = pneg %p258
      %p265 = scmp.eq.s32.totalorder %s35, 1
      %p266 = por %p264, %p265
      %p267 = scmp.ne.s32.totalorder %s259, %s262
      %p268 = scmp.eq.s32.totalorder %s35, 0
      %p269 = por %p267, %p268
      %p270 = scmp.ne.s32.totalorder %s259, %s262
      %p271 = scmp.eq.s32.totalorder %s40, 1
      %p272 = por %p270, %p271
      %p273 = scmp.ne.s32.totalorder %s262, %s263
      %p274 = scmp.eq.s32.totalorder %s40, 0
      %p275 = por %p273, %p274
      %p276 = scmp.ne.s32.totalorder %s262, %s263
      %p277 = scmp.eq.s32.totalorder %s41, 1
      %p278 = por %p276, %p277
      %p280 = scmp.ne.s32.totalorder %s263, %s279
      %p281 = scmp.eq.s32.totalorder %s41, 0
      %p282 = por %p280, %p281
      %s283 = ssub.s32 %s35, %s42
      %p284 = scmp.eq.s32.totalorder %s283, 0
      %s286 = sadd.s32 %s285, 1
      %s287 = scalar_select %p284, %s285, %s286
      %p290 = pneg %p284
      %p291 = scmp.eq.s32.totalorder %s35, 1
      %p292 = por %p290, %p291
      %p293 = scmp.ne.s32.totalorder %s285, %s288
      %p294 = scmp.eq.s32.totalorder %s35, 0
      %p295 = por %p293, %p294
      %p296 = scmp.ne.s32.totalorder %s285, %s288
      %p297 = scmp.eq.s32.totalorder %s40, 1
      %p298 = por %p296, %p297
      %p299 = scmp.ne.s32.totalorder %s288, %s289
      %p300 = scmp.eq.s32.totalorder %s40, 0
      %p301 = por %p299, %p300
      %p302 = scmp.ne.s32.totalorder %s288, %s289
      %p303 = scmp.eq.s32.totalorder %s41, 1
      %p304 = por %p302, %p303
      %p306 = scmp.ne.s32.totalorder %s289, %s305
      %p307 = scmp.eq.s32.totalorder %s41, 0
      %p308 = por %p306, %p307
      %s309 = ssub.s32 %s35, %s42
      %p310 = scmp.eq.s32.totalorder %s309, 0
      %s312 = sadd.s32 %s311, 1
      %s313 = scalar_select %p310, %s311, %s312
      %p316 = pneg %p310
      %p317 = scmp.eq.s32.totalorder %s35, 1
      %p318 = por %p316, %p317
      %p319 = scmp.ne.s32.totalorder %s311, %s314
      %p320 = scmp.eq.s32.totalorder %s35, 0
      %p321 = por %p319, %p320
      %p322 = scmp.ne.s32.totalorder %s311, %s314
      %p323 = scmp.eq.s32.totalorder %s40, 1
      %p324 = por %p322, %p323
      %p325 = scmp.ne.s32.totalorder %s314, %s315
      %p326 = scmp.eq.s32.totalorder %s40, 0
      %p327 = por %p325, %p326
      %p328 = scmp.ne.s32.totalorder %s314, %s315
      %p329 = scmp.eq.s32.totalorder %s41, 1
      %p330 = por %p328, %p329
      %p332 = scmp.ne.s32.totalorder %s315, %s331
      %p333 = scmp.eq.s32.totalorder %s41, 0
      %p334 = por %p332, %p333
      %s335 = ssub.s32 %s35, %s42
      %p336 = scmp.eq.s32.totalorder %s335, 0
      %s338 = sadd.s32 %s337, 1
      %s339 = scalar_select %p336, %s337, %s338
      %p342 = pneg %p336
      %p343 = scmp.eq.s32.totalorder %s35, 1
      %p344 = por %p342, %p343
      %p345 = scmp.ne.s32.totalorder %s337, %s340
      %p346 = scmp.eq.s32.totalorder %s35, 0
      %p347 = por %p345, %p346
      %p348 = scmp.ne.s32.totalorder %s337, %s340
      %p349 = scmp.eq.s32.totalorder %s40, 1
      %p350 = por %p348, %p349
      %p351 = scmp.ne.s32.totalorder %s340, %s341
      %p352 = scmp.eq.s32.totalorder %s40, 0
      %p353 = por %p351, %p352
      %p354 = scmp.ne.s32.totalorder %s340, %s341
      %p355 = scmp.eq.s32.totalorder %s41, 1
      %p356 = por %p354, %p355
      %p358 = scmp.ne.s32.totalorder %s341, %s357
      %p359 = scmp.eq.s32.totalorder %s41, 0
      %p360 = por %p358, %p359
      %s361 = ssub.s32 %s35, %s42
      %p362 = scmp.eq.s32.totalorder %s361, 0
      %s364 = sadd.s32 %s363, 1
      %s365 = scalar_select %p362, %s363, %s364
      %p368 = pneg %p362
      %p369 = scmp.eq.s32.totalorder %s35, 1
      %p370 = por %p368, %p369
      %p371 = scmp.ne.s32.totalorder %s363, %s366
      %p372 = scmp.eq.s32.totalorder %s35, 0
      %p373 = por %p371, %p372
      %p374 = scmp.ne.s32.totalorder %s363, %s366
      %p375 = scmp.eq.s32.totalorder %s40, 1
      %p376 = por %p374, %p375
      %p377 = scmp.ne.s32.totalorder %s366, %s367
      %p378 = scmp.eq.s32.totalorder %s40, 0
      %p379 = por %p377, %p378
      %p380 = scmp.ne.s32.totalorder %s366, %s367
      %p381 = scmp.eq.s32.totalorder %s41, 1
      %p382 = por %p380, %p381
      %p384 = scmp.ne.s32.totalorder %s367, %s383
      %p385 = scmp.eq.s32.totalorder %s41, 0
      %p386 = por %p384, %p385
      %s387 = ssub.s32 %s35, %s42
      %p388 = scmp.eq.s32.totalorder %s387, 0
      %s390 = sadd.s32 %s389, 1
      %s391 = scalar_select %p388, %s389, %s390
      %p394 = pneg %p388
      %p395 = scmp.eq.s32.totalorder %s35, 1
      %p396 = por %p394, %p395
      %p397 = scmp.ne.s32.totalorder %s389, %s392
      %p398 = scmp.eq.s32.totalorder %s35, 0
      %p399 = por %p397, %p398
      %p400 = scmp.ne.s32.totalorder %s389, %s392
      %p401 = scmp.eq.s32.totalorder %s40, 1
      %p402 = por %p400, %p401
      %p403 = scmp.ne.s32.totalorder %s392, %s393
      %p404 = scmp.eq.s32.totalorder %s40, 0
      %p405 = por %p403, %p404
      %p406 = scmp.ne.s32.totalorder %s392, %s393
      %p407 = scmp.eq.s32.totalorder %s41, 1
      %p408 = por %p406, %p407
      %p410 = scmp.ne.s32.totalorder %s393, %s409
      %p411 = scmp.eq.s32.totalorder %s41, 0
      %p412 = por %p410, %p411
      %s413 = ssub.s32 %s35, %s42
      %p414 = scmp.eq.s32.totalorder %s413, 0
      %s416 = sadd.s32 %s415, 1
      %s417 = scalar_select %p414, %s415, %s416
      %p420 = pneg %p414
      %p421 = scmp.eq.s32.totalorder %s35, 1
      %p422 = por %p420, %p421
      %p423 = scmp.ne.s32.totalorder %s415, %s418
      %p424 = scmp.eq.s32.totalorder %s35, 0
      %p425 = por %p423, %p424
      %p426 = scmp.ne.s32.totalorder %s415, %s418
      %p427 = scmp.eq.s32.totalorder %s40, 1
      %p428 = por %p426, %p427
      %p429 = scmp.ne.s32.totalorder %s418, %s419
      %p430 = scmp.eq.s32.totalorder %s40, 0
      %p431 = por %p429, %p430
      %p432 = scmp.ne.s32.totalorder %s418, %s419
      %p433 = scmp.eq.s32.totalorder %s41, 1
      %p434 = por %p432, %p433
      %p436 = scmp.ne.s32.totalorder %s419, %s435
      %p437 = scmp.eq.s32.totalorder %s41, 0
      %p438 = por %p436, %p437
      %s440 = sadd.s32 %s439, 1
      %p443 = scmp.eq.s32.totalorder %s35, 1
      %p444 = scmp.ne.s32.totalorder %s439, %s441
      %p445 = scmp.eq.s32.totalorder %s35, 0
      %p446 = por %p444, %p445
      %p447 = scmp.ne.s32.totalorder %s439, %s441
      %p448 = scmp.eq.s32.totalorder %s40, 1
      %p449 = por %p447, %p448
      %p450 = scmp.ne.s32.totalorder %s441, %s442
      %p451 = scmp.eq.s32.totalorder %s40, 0
      %p452 = por %p450, %p451
      %p453 = scmp.ne.s32.totalorder %s441, %s442
      %p454 = scmp.eq.s32.totalorder %s41, 1
      %p455 = por %p453, %p454
      %p457 = scmp.ne.s32.totalorder %s442, %s456
      %p458 = scmp.eq.s32.totalorder %s41, 0
      %p459 = por %p457, %p458
      %s461 = sadd.s32 %s460, 1
      %p464 = scmp.eq.s32.totalorder %s35, 1
      %p465 = scmp.ne.s32.totalorder %s460, %s462
      %p466 = scmp.eq.s32.totalorder %s35, 0
      %p467 = por %p465, %p466
      %p468 = scmp.ne.s32.totalorder %s460, %s462
      %p469 = scmp.eq.s32.totalorder %s40, 1
      %p470 = por %p468, %p469
      %p471 = scmp.ne.s32.totalorder %s462, %s463
      %p472 = scmp.eq.s32.totalorder %s40, 0
      %p473 = por %p471, %p472
      %p474 = scmp.ne.s32.totalorder %s462, %s463
      %p475 = scmp.eq.s32.totalorder %s41, 1
      %p476 = por %p474, %p475
      %p478 = scmp.ne.s32.totalorder %s463, %s477
      %p479 = scmp.eq.s32.totalorder %s41, 0
      %p480 = por %p478, %p479
      %s482 = sadd.s32 %s481, 1
      %p485 = scmp.eq.s32.totalorder %s35, 1
      %p486 = scmp.ne.s32.totalorder %s481, %s483
      %p487 = scmp.eq.s32.totalorder %s35, 0
      %p488 = por %p486, %p487
      %p489 = scmp.ne.s32.totalorder %s481, %s483
      %p490 = scmp.eq.s32.totalorder %s40, 1
      %p491 = por %p489, %p490
      %p492 = scmp.ne.s32.totalorder %s483, %s484
      %p493 = scmp.eq.s32.totalorder %s40, 0
      %p494 = por %p492, %p493
      %p495 = scmp.ne.s32.totalorder %s483, %s484
      %p496 = scmp.eq.s32.totalorder %s41, 1
      %p497 = por %p495, %p496
      %p499 = scmp.ne.s32.totalorder %s484, %s498
      %p500 = scmp.eq.s32.totalorder %s41, 0
      %p501 = por %p499, %p500
      %s503 = sadd.s32 %s502, 1
      %p506 = scmp.eq.s32.totalorder %s35, 1
      %p507 = scmp.ne.s32.totalorder %s502, %s504
      %p508 = scmp.eq.s32.totalorder %s35, 0
      %p509 = por %p507, %p508
      %p510 = scmp.ne.s32.totalorder %s502, %s504
      %p511 = scmp.eq.s32.totalorder %s40, 1
      %p512 = por %p510, %p511
      %p513 = scmp.ne.s32.totalorder %s504, %s505
      %p514 = scmp.eq.s32.totalorder %s40, 0
      %p515 = por %p513, %p514
      %p516 = scmp.ne.s32.totalorder %s504, %s505
      %p517 = scmp.eq.s32.totalorder %s41, 1
      %p518 = por %p516, %p517
      %p520 = scmp.ne.s32.totalorder %s505, %s519
      %p521 = scmp.eq.s32.totalorder %s41, 0
      %p522 = por %p520, %p521
      %p523 = scmp.le.s32.totalorder 1, %s35
      %p524 = scmp.lt.s32.totalorder %s35, 3
      %p525 = pnand %p523, %p524
      %p526 = pneg %p525
      // Predicated region
      $region9: #{text_encoder_forward.1} parent=5 // pred_check
        _
      $region10: #{text_encoder_forward.1} parent=5 // pred_check_branch
        %528 = sbr.rel (%p525) target = $region12
      $region11: #{text_encoder_forward.1} parent=5 // pred_region
        %s529 = ssub.s32 %s35, 1
        // Predicated region
        $region13: #{text_encoder_forward.1} parent=11 // pred_check
          %p530 = pneg %p56
        $region14: #{text_encoder_forward.1} parent=11 // pred_check_branch
          %532 = sbr.rel (%p530) target = $region16
        $region15: #{text_encoder_forward.1} parent=11 // pred_region
          _
        $region16: #{text_encoder_forward.1} parent=11 // pred_fallthru
          _
        // Predicated region
        $region17: #{text_encoder_forward.1} parent=11 // pred_check
          %p533 = pneg %p77
        $region18: #{text_encoder_forward.1} parent=11 // pred_check_branch
          %535 = sbr.rel (%p533) target = $region20
        $region19: #{text_encoder_forward.1} parent=11 // pred_region
          _
        $region20: #{text_encoder_forward.1} parent=11 // pred_fallthru
          _
        // Predicated region
        $region21: #{text_encoder_forward.1} parent=11 // pred_check
          %p536 = pneg %p98
        $region22: #{text_encoder_forward.1} parent=11 // pred_check_branch
          %538 = sbr.rel (%p536) target = $region24
        $region23: #{text_encoder_forward.1} parent=11 // pred_region
          _
        $region24: #{text_encoder_forward.1} parent=11 // pred_fallthru
          _
        // Predicated region
        $region25: #{text_encoder_forward.1} parent=11 // pred_check
          %p539 = pneg %p119
        $region26: #{text_encoder_forward.1} parent=11 // pred_check_branch
          %541 = sbr.rel (%p539) target = $region28
        $region27: #{text_encoder_forward.1} parent=11 // pred_region
          _
        $region28: #{text_encoder_forward.1} parent=11 // pred_fallthru
          _
        // Predicated region
        $region29: #{text_encoder_forward.1} parent=11 // pred_check
          %p542 = pneg %p452
        $region30: #{text_encoder_forward.1} parent=11 // pred_check_branch
          %544 = sbr.rel (%p542) target = $region32
        $region31: #{text_encoder_forward.1} parent=11 // pred_region
          _
        $region32: #{text_encoder_forward.1} parent=11 // pred_fallthru
          _
        // Predicated region
        $region33: #{text_encoder_forward.1} parent=11 // pred_check
          %p545 = pneg %p473
        $region34: #{text_encoder_forward.1} parent=11 // pred_check_branch
          %547 = sbr.rel (%p545) target = $region36
        $region35: #{text_encoder_forward.1} parent=11 // pred_region
          _
        $region36: #{text_encoder_forward.1} parent=11 // pred_fallthru
          _
        // Predicated region
        $region37: #{text_encoder_forward.1} parent=11 // pred_check
          %p548 = pneg %p494
        $region38: #{text_encoder_forward.1} parent=11 // pred_check_branch
          %550 = sbr.rel (%p548) target = $region40
        $region39: #{text_encoder_forward.1} parent=11 // pred_region
          _
        $region40: #{text_encoder_forward.1} parent=11 // pred_fallthru
          _
      $region12: #{text_encoder_forward.1} parent=5 // pred_fallthru
        _
      %p551 = scmp.lt.s32.totalorder %s35, 2
      // Predicated region
      $region41: #{text_encoder_forward.1} parent=5 // pred_check
        %p552 = pneg %p551
      $region42: #{text_encoder_forward.1} parent=5 // pred_check_branch
        %554 = sbr.rel (%p552) target = $region44
      $region43: #{text_encoder_forward.1} parent=5 // pred_region
        // Predicated region
        $region45: #{text_encoder_forward.1} parent=43 // pred_check
          %p555 = pneg %p139
        $region46: #{text_encoder_forward.1} parent=43 // pred_check_branch
          %557 = sbr.rel (%p555) target = $region48
        $region47: #{text_encoder_forward.1} parent=43 // pred_region
          %p558 = scmp.lt.s32.totalorder %s35, 1
          %s559 = scalar_select %p558, %s35, 1
          %s560 = smul.addr %s559, 2
          %s561 = scalar_lea.vmem %s4, %s560
        $region48: #{text_encoder_forward.1} parent=43 // pred_fallthru
          _
        // Predicated region
        $region49: #{text_encoder_forward.1} parent=43 // pred_check
          %p562 = pneg %p165
        $region50: #{text_encoder_forward.1} parent=43 // pred_check_branch
          %564 = sbr.rel (%p562) target = $region52
        $region51: #{text_encoder_forward.1} parent=43 // pred_region
          %p565 = scmp.lt.s32.totalorder %s35, 1
          %s566 = scalar_select %p565, %s35, 1
          %s567 = smul.addr %s566, 2
          %s568 = scalar_lea.vmem %s5, %s567
        $region52: #{text_encoder_forward.1} parent=43 // pred_fallthru
          _
        // Predicated region
        $region53: #{text_encoder_forward.1} parent=43 // pred_check
          %p569 = pneg %p191
        $region54: #{text_encoder_forward.1} parent=43 // pred_check_branch
          %571 = sbr.rel (%p569) target = $region56
        $region55: #{text_encoder_forward.1} parent=43 // pred_region
          %s572 = sand.u32 %s181, 1
          %s573 = scalar_lea.sflag [#allocation4], %s572
          %s574 = sand.u32 %s181, 1
          %s575 = smul.addr %s574, 768
          %s576 = scalar_lea.vmem [#allocation3], %s575
          %578 = vsyncadd %s573, 0
          %s579 = smul.addr %s35, 192
          %s580 = smul.addr %s579, 4
          %s581 = scalar_lea.hbm %s6, %s580
          %s582 = sshll.u32 %s581, 4
          %s583 = int_to_ptr.hbm [resolvable:$true] %s582
          %s584 = sshll.u32 %s576, 4
          %s585 = int_to_ptr.vmem [resolvable:$true] %s584
          %590 = dma.hbm_to_vmem [thread:$0]  %s583, 12288, %s585, %s573, 384, 384, 24
        $region56: #{text_encoder_forward.1} parent=43 // pred_fallthru
          _
        // Predicated region
        $region57: #{text_encoder_forward.1} parent=43 // pred_check
          %p591 = pneg %p217
        $region58: #{text_encoder_forward.1} parent=43 // pred_check_branch
          %593 = sbr.rel (%p591) target = $region60
        $region59: #{text_encoder_forward.1} parent=43 // pred_region
          %p594 = scmp.lt.s32.totalorder %s35, 1
          %s595 = scalar_select %p594, %s35, 1
          %s596 = smul.addr %s595, 6
          %s597 = scalar_lea.vmem %s7, %s596
        $region60: #{text_encoder_forward.1} parent=43 // pred_fallthru
          _
        // Predicated region
        $region61: #{text_encoder_forward.1} parent=43 // pred_check
          %p598 = pneg %p243
        $region62: #{text_encoder_forward.1} parent=43 // pred_check_branch
          %600 = sbr.rel (%p598) target = $region64
        $region63: #{text_encoder_forward.1} parent=43 // pred_region
          %s601 = sand.u32 %s35, 1
          %s602 = scalar_lea.sflag [#allocation7], %s601
          %s603 = sand.u32 %s233, 1
          %s604 = smul.addr %s603, 256
          %s605 = scalar_lea.vmem [#allocation6], %s604
          %607 = vsyncadd %s602, 0
          %s608 = smul.addr %s35, 64
          %s609 = smul.addr %s608, 4
          %s610 = scalar_lea.hbm %s8, %s609
          %s611 = sshll.u32 %s610, 4
          %s612 = int_to_ptr.hbm [resolvable:$true] %s611
          %s613 = sshll.u32 %s605, 4
          %s614 = int_to_ptr.vmem [resolvable:$true] %s613
          %619 = dma.hbm_to_vmem [thread:$0]  %s612, 4096, %s614, %s602, 128, 128, 8
        $region64: #{text_encoder_forward.1} parent=43 // pred_fallthru
          _
        // Predicated region
        $region65: #{text_encoder_forward.1} parent=43 // pred_check
          %p620 = pneg %p269
        $region66: #{text_encoder_forward.1} parent=43 // pred_check_branch
          %622 = sbr.rel (%p620) target = $region68
        $region67: #{text_encoder_forward.1} parent=43 // pred_region
          %p623 = scmp.lt.s32.totalorder %s35, 1
          %s624 = scalar_select %p623, %s35, 1
          %s625 = smul.addr %s624, 2
          %s626 = scalar_lea.vmem %s9, %s625
        $region68: #{text_encoder_forward.1} parent=43 // pred_fallthru
          _
        // Predicated region
        $region69: #{text_encoder_forward.1} parent=43 // pred_check
          %p627 = pneg %p295
        $region70: #{text_encoder_forward.1} parent=43 // pred_check_branch
          %629 = sbr.rel (%p627) target = $region72
        $region71: #{text_encoder_forward.1} parent=43 // pred_region
          %p630 = scmp.lt.s32.totalorder %s35, 1
          %s631 = scalar_select %p630, %s35, 1
          %s632 = smul.addr %s631, 2
          %s633 = scalar_lea.vmem %s10, %s632
        $region72: #{text_encoder_forward.1} parent=43 // pred_fallthru
          _
        // Predicated region
        $region73: #{text_encoder_forward.1} parent=43 // pred_check
          %p634 = pneg %p321
        $region74: #{text_encoder_forward.1} parent=43 // pred_check_branch
          %636 = sbr.rel (%p634) target = $region76
        $region75: #{text_encoder_forward.1} parent=43 // pred_region
          %p637 = scmp.lt.s32.totalorder %s35, 1
          %s638 = scalar_select %p637, %s35, 1
          %s639 = smul.addr %s638, 2
          %s640 = scalar_lea.vmem %s11, %s639
        $region76: #{text_encoder_forward.1} parent=43 // pred_fallthru
          _
        // Predicated region
        $region77: #{text_encoder_forward.1} parent=43 // pred_check
          %p641 = pneg %p347
        $region78: #{text_encoder_forward.1} parent=43 // pred_check_branch
          %643 = sbr.rel (%p641) target = $region80
        $region79: #{text_encoder_forward.1} parent=43 // pred_region
          %s644 = sand.u32 %s35, 1
          %s645 = scalar_lea.sflag [#allocation7], %s644
          %s646 = sand.u32 %s337, 1
          %s647 = smul.addr %s646, 1024
          %s648 = scalar_lea.vmem [#allocation8], %s647
          %650 = vsyncadd %s645, 0
          %s651 = smul.addr %s35, 256
          %s652 = smul.addr %s651, 4
          %s653 = scalar_lea.hbm %s12, %s652
          %s654 = sshll.u32 %s653, 4
          %s655 = int_to_ptr.hbm [resolvable:$true] %s654
          %s656 = sshll.u32 %s648, 4
          %s657 = int_to_ptr.vmem [resolvable:$true] %s656
          %662 = dma.hbm_to_vmem [thread:$0]  %s655, 16384, %s657, %s645, 512, 512, 32
        $region80: #{text_encoder_forward.1} parent=43 // pred_fallthru
          _
        // Predicated region
        $region81: #{text_encoder_forward.1} parent=43 // pred_check
          %p663 = pneg %p373
        $region82: #{text_encoder_forward.1} parent=43 // pred_check_branch
          %665 = sbr.rel (%p663) target = $region84
        $region83: #{text_encoder_forward.1} parent=43 // pred_region
          %p666 = scmp.lt.s32.totalorder %s35, 1
          %s667 = scalar_select %p666, %s35, 1
          %s668 = smul.addr %s667, 8
          %s669 = scalar_lea.vmem %s13, %s668
        $region84: #{text_encoder_forward.1} parent=43 // pred_fallthru
          _
        // Predicated region
        $region85: #{text_encoder_forward.1} parent=43 // pred_check
          %p670 = pneg %p399
        $region86: #{text_encoder_forward.1} parent=43 // pred_check_branch
          %672 = sbr.rel (%p670) target = $region88
        $region87: #{text_encoder_forward.1} parent=43 // pred_region
          %s673 = sand.u32 %s389, 1
          %s674 = scalar_lea.sflag [#allocation10], %s673
          %s675 = sand.u32 %s389, 1
          %s676 = smul.addr %s675, 1024
          %s677 = scalar_lea.vmem [#allocation9], %s676
          %679 = vsyncadd %s674, 0
          %s680 = smul.addr %s35, 256
          %s681 = smul.addr %s680, 4
          %s682 = scalar_lea.hbm %s14, %s681
          %s683 = sshll.u32 %s682, 4
          %s684 = int_to_ptr.hbm [resolvable:$true] %s683
          %s685 = sshll.u32 %s677, 4
          %s686 = int_to_ptr.vmem [resolvable:$true] %s685
          %691 = dma.hbm_to_vmem [thread:$0]  %s684, 16384, %s686, %s674, 128, 128, 8
        $region88: #{text_encoder_forward.1} parent=43 // pred_fallthru
          _
        // Predicated region
        $region89: #{text_encoder_forward.1} parent=43 // pred_check
          %p692 = pneg %p425
        $region90: #{text_encoder_forward.1} parent=43 // pred_check_branch
          %694 = sbr.rel (%p692) target = $region92
        $region91: #{text_encoder_forward.1} parent=43 // pred_region
          %p695 = scmp.lt.s32.totalorder %s35, 1
          %s696 = scalar_select %p695, %s35, 1
          %s697 = smul.addr %s696, 2
          %s698 = scalar_lea.vmem %s15, %s697
        $region92: #{text_encoder_forward.1} parent=43 // pred_fallthru
          _
      $region44: #{text_encoder_forward.1} parent=5 // pred_fallthru
        _
      %p699 = scmp.le.s32.totalorder 1, %s35
      %p700 = scmp.lt.s32.totalorder %s35, 3
      %p701 = pnand %p699, %p700
      %p702 = pneg %p701
      // Predicated region
      $region93: #{text_encoder_forward.1} parent=5 // pred_check
        _
      $region94: #{text_encoder_forward.1} parent=5 // pred_check_branch
        %704 = sbr.rel (%p701) target = $region96
      $region95: #{text_encoder_forward.1} parent=5 // pred_region
        %s705 = ssub.s32 %s35, 1
        %s706 = sand.u32 %s184, 1
        %s707 = scalar_lea.sflag [#allocation4], %s706
        %s708 = sand.u32 %s184, 1
        %s709 = smul.addr %s708, 768
        %s710 = scalar_lea.vmem [#allocation3], %s709
        // Predicated region
        $region97: #{text_encoder_forward.1} parent=95 // pred_check
          %p711 = pneg %p197
        $region98: #{text_encoder_forward.1} parent=95 // pred_check_branch
          %713 = sbr.rel (%p711) target = $region100
        $region99: #{text_encoder_forward.1} parent=95 // pred_region
          %715 = dma.done %s707, 12288
        $region100: #{text_encoder_forward.1} parent=95 // pred_fallthru
          _
        %s716 = sand.u32 %s40, 1
        %s717 = scalar_lea.sflag [#allocation7], %s716
        %s718 = sand.u32 %s236, 1
        %s719 = smul.addr %s718, 256
        %s720 = scalar_lea.vmem [#allocation6], %s719
        // Predicated region
        $region101: #{text_encoder_forward.1} parent=95 // pred_check
          %p721 = pneg %p249
        $region102: #{text_encoder_forward.1} parent=95 // pred_check_branch
          %723 = sbr.rel (%p721) target = $region104
        $region103: #{text_encoder_forward.1} parent=95 // pred_region
          %725 = dma.done %s717, 4096
        $region104: #{text_encoder_forward.1} parent=95 // pred_fallthru
          _
        %s726 = sand.u32 %s40, 1
        %s727 = scalar_lea.sflag [#allocation7], %s726
        %s728 = sand.u32 %s340, 1
        %s729 = smul.addr %s728, 1024
        %s730 = scalar_lea.vmem [#allocation8], %s729
        // Predicated region
        $region105: #{text_encoder_forward.1} parent=95 // pred_check
          %p731 = pneg %p353
        $region106: #{text_encoder_forward.1} parent=95 // pred_check_branch
          %733 = sbr.rel (%p731) target = $region108
        $region107: #{text_encoder_forward.1} parent=95 // pred_region
          %735 = dma.done %s727, 16384
        $region108: #{text_encoder_forward.1} parent=95 // pred_fallthru
          _
        %s736 = sand.u32 %s392, 1
        %s737 = scalar_lea.sflag [#allocation10], %s736
        %s738 = sand.u32 %s392, 1
        %s739 = smul.addr %s738, 1024
        %s740 = scalar_lea.vmem [#allocation9], %s739
        // Predicated region
        $region109: #{text_encoder_forward.1} parent=95 // pred_check
          %p741 = pneg %p405
        $region110: #{text_encoder_forward.1} parent=95 // pred_check_branch
          %743 = sbr.rel (%p741) target = $region112
        $region111: #{text_encoder_forward.1} parent=95 // pred_region
          %745 = dma.done %s737, 16384
        $region112: #{text_encoder_forward.1} parent=95 // pred_fallthru
          _
        %p746 = pneg %p56
        %p747 = pneg %p53
        %p748 = pneg %p77
        %p749 = pneg %p74
        %p750 = pneg %p98
        %p751 = pneg %p95
        %p752 = pneg %p119
        %p753 = pneg %p116
        %p754 = scmp.lt.s32.totalorder %s40, 1
        %s755 = scalar_select %p754, %s40, 1
        %s756 = smul.addr %s755, 2
        %s757 = scalar_lea.vmem %s4, %s756
        %p758 = pneg %p145
        %p759 = pneg %p142
        %p760 = scmp.lt.s32.totalorder %s40, 1
        %s761 = scalar_select %p760, %s40, 1
        %s762 = smul.addr %s761, 2
        %s763 = scalar_lea.vmem %s5, %s762
        %p764 = pneg %p171
        %p765 = pneg %p168
        %s766 = sand.u32 %s184, 1
        %s767 = scalar_lea.sflag [#allocation4], %s766
        %s768 = sand.u32 %s184, 1
        %s769 = smul.addr %s768, 768
        %s770 = scalar_lea.vmem [#allocation3], %s769
        %p771 = pneg %p197
        %p772 = pneg %p194
        %p773 = scmp.lt.s32.totalorder %s40, 1
        %s774 = scalar_select %p773, %s40, 1
        %s775 = smul.addr %s774, 6
        %s776 = scalar_lea.vmem %s7, %s775
        %p777 = pneg %p223
        %p778 = pneg %p220
        %s779 = sand.u32 %s40, 1
        %s780 = scalar_lea.sflag [#allocation7], %s779
        %s781 = sand.u32 %s236, 1
        %s782 = smul.addr %s781, 256
        %s783 = scalar_lea.vmem [#allocation6], %s782
        %p784 = pneg %p249
        %p785 = pneg %p246
        %p786 = scmp.lt.s32.totalorder %s40, 1
        %s787 = scalar_select %p786, %s40, 1
        %s788 = smul.addr %s787, 2
        %s789 = scalar_lea.vmem %s9, %s788
        %p790 = pneg %p275
        %p791 = pneg %p272
        %p792 = scmp.lt.s32.totalorder %s40, 1
        %s793 = scalar_select %p792, %s40, 1
        %s794 = smul.addr %s793, 2
        %s795 = scalar_lea.vmem %s10, %s794
        %p796 = pneg %p301
        %p797 = pneg %p298
        %p798 = scmp.lt.s32.totalorder %s40, 1
        %s799 = scalar_select %p798, %s40, 1
        %s800 = smul.addr %s799, 2
        %s801 = scalar_lea.vmem %s11, %s800
        %p802 = pneg %p327
        %p803 = pneg %p324
        %s804 = sand.u32 %s40, 1
        %s805 = scalar_lea.sflag [#allocation7], %s804
        %s806 = sand.u32 %s340, 1
        %s807 = smul.addr %s806, 1024
        %s808 = scalar_lea.vmem [#allocation8], %s807
        %p809 = pneg %p353
        %p810 = pneg %p350
        %p811 = scmp.lt.s32.totalorder %s40, 1
        %s812 = scalar_select %p811, %s40, 1
        %s813 = smul.addr %s812, 8
        %s814 = scalar_lea.vmem %s13, %s813
        %p815 = pneg %p379
        %p816 = pneg %p376
        %s817 = sand.u32 %s392, 1
        %s818 = scalar_lea.sflag [#allocation10], %s817
        %s819 = sand.u32 %s392, 1
        %s820 = smul.addr %s819, 1024
        %s821 = scalar_lea.vmem [#allocation9], %s820
        %p822 = pneg %p405
        %p823 = pneg %p402
        %p824 = scmp.lt.s32.totalorder %s40, 1
        %s825 = scalar_select %p824, %s40, 1
        %s826 = smul.addr %s825, 2
        %s827 = scalar_lea.vmem %s15, %s826
        %p828 = pneg %p431
        %p829 = pneg %p428
        %p830 = pneg %p452
        %p831 = pneg %p449
        %p832 = pneg %p473
        %p833 = pneg %p470
        %p834 = pneg %p494
        %p835 = pneg %p491
        %p836 = pneg %p515
        %p837 = pneg %p512
        %p838 = scmp.lt.s32.totalorder %s40, 1
        %s839 = scalar_select %p838, %s40, 1
        %s840 = smul.addr %s839, 2
        %s841 = scalar_lea.vmem %s4, %s840
        %p842 = scmp.lt.s32.totalorder %s40, 1
        %s843 = scalar_select %p842, %s40, 1
        %s844 = smul.addr %s843, 2
        %s845 = scalar_lea.vmem %s5, %s844
        %p846 = scmp.lt.s32.totalorder %s40, 1
        %s847 = scalar_select %p846, %s40, 1
        %s848 = smul.addr %s847, 6
        %s849 = scalar_lea.vmem %s7, %s848
        %p850 = scmp.lt.s32.totalorder %s40, 1
        %s851 = scalar_select %p850, %s40, 1
        %s852 = smul.addr %s851, 2
        %s853 = scalar_lea.vmem %s9, %s852
        %p854 = scmp.lt.s32.totalorder %s40, 1
        %s855 = scalar_select %p854, %s40, 1
        %s856 = smul.addr %s855, 2
        %s857 = scalar_lea.vmem %s10, %s856
        %p858 = scmp.lt.s32.totalorder %s40, 1
        %s859 = scalar_select %p858, %s40, 1
        %s860 = smul.addr %s859, 2
        %s861 = scalar_lea.vmem %s11, %s860
        %p862 = scmp.lt.s32.totalorder %s40, 1
        %s863 = scalar_select %p862, %s40, 1
        %s864 = smul.addr %s863, 8
        %s865 = scalar_lea.vmem %s13, %s864
        %p866 = scmp.lt.s32.totalorder %s40, 1
        %s867 = scalar_select %p866, %s40, 1
        %s868 = smul.addr %s867, 2
        %s869 = scalar_lea.vmem %s15, %s868
        %p871 = scmp.eq.s32.totalorder %s40, 0
        // Predicated region
        $region113: #{text_encoder_forward.1} parent=95 // pred_check
          %p872 = pneg %p871
        $region114: #{text_encoder_forward.1} parent=95 // pred_check_branch
          %874 = sbr.rel (%p872) target = $region116
        $region115: #{text_encoder_forward.1} parent=95 // pred_region
          %v875 = vld [vmem:[%s1] sm:$0xff]
          %v876 = vld [vmem:[%s1 + $0x8] sm:$0xff]
          %v877 = vld [vmem:[%s0] sm:$0xff]
          %v878 = vld [vmem:[%s0 + $0x8] sm:$0xff]
          %v879 = vld [vmem:[%s0 + $0x10] sm:$0xff]
          %v880 = vld [vmem:[%s0 + $0x18] sm:$0xff]
          %v881 = vadd.f32 %v877, %v875
          %v882 = vadd.f32 %v878, %v876
          %v883 = vadd.f32 %v879, %v875
          %v884 = vadd.f32 %v880, %v876
          %885 = vst [vmem:[#allocation2] sm:$0xff] %v881
          %886 = vst [vmem:[#allocation2 + $0x8] sm:$0xff] %v882
          %887 = vst [vmem:[#allocation2 + $0x10] sm:$0xff] %v883
          %888 = vst [vmem:[#allocation2 + $0x18] sm:$0xff] %v884
        $region116: #{text_encoder_forward.1} parent=95 // pred_fallthru
          _
        %v889 = vld [vmem:[#allocation2] sm:$0xff]
        %v890 = vld [vmem:[#allocation2 + $0x8] sm:$0xff]
        %v891 = vld [vmem:[#allocation2 + $0x10] sm:$0xff]
        %v892 = vld [vmem:[#allocation2 + $0x18] sm:$0xff]
        %v893 = vld [vmem:[%s2] sm:$0xff]
        %v894 = vld [vmem:[%s841] sm:$0x3]
        %v895 = vld [vmem:[%s845] sm:$0x3]
        %v896 = vadd.f32 %v889, %v890
        %897 = vadd.xlane.f32.xlu0 %v896
        %v898 = vpop.xlane.xlu0 %897
        %v899 = vadd.f32 %v891, %v892
        %900 = vadd.xlane.f32.xlu0 %v899
        %v901 = vpop.xlane.xlu0 %900
        %v902 = vrcp.pop 256.0
        %v903 = vmul.f32 256.0, %v902
        %v904 = vsub.f32 1.0, %v903
        %v905 = vmul.f32 %v902, %v904
        %v906 = vadd.f32 %v902, %v905
        %vm907 = vweird.f32 %v902
        %v908 = vsel %vm907, %v902, %v906
        %v909 = vmul.f32 %v898, %v908
        %v910 = vmul.f32 %v901, %v908
        %v911 = vsub.f32 %v889, %v909
        %v912 = vsub.f32 %v890, %v909
        %v913 = vsub.f32 %v891, %v910
        %v914 = vsub.f32 %v892, %v910
        %v915 = vmul.f32 %v911, %v911
        %v916 = vmul.f32 %v912, %v912
        %v917 = vmul.f32 %v913, %v913
        %v918 = vmul.f32 %v914, %v914
        %v919 = vadd.f32 %v915, %v916
        %920 = vadd.xlane.f32.xlu0 %v919
        %v921 = vpop.xlane.xlu0 %920
        %v922 = vadd.f32 %v917, %v918
        %923 = vadd.xlane.f32.xlu0 %v922
        %v924 = vpop.xlane.xlu0 %923
        %v925 = vmul.f32 %v921, %v908
        %v926 = vmul.f32 %v924, %v908
        %v927 = vadd.f32 %v925, 1e-05
        %v928 = vadd.f32 %v926, 1e-05
        %v929 = vrsqrt.pop %v927
        %v930 = vmul.f32 %v929, %v927
        %v931 = vmul.f32 %v930, %v929
        %v932 = vmul.f32 0.5, %v931
        %v933 = vsub.f32 1.5, %v932
        %v934 = vmul.f32 %v929, %v933
        %vm935 = vweird.f32 %v927
        %vm936 = vweird.f32 %v929
        %vm937 = vmor %vm935, %vm936
        %v938 = vsel %vm937, %v929, %v934
        %v939 = vrsqrt.pop %v928
        %v940 = vmul.f32 %v939, %v928
        %v941 = vmul.f32 %v940, %v939
        %v942 = vmul.f32 0.5, %v941
        %v943 = vsub.f32 1.5, %v942
        %v944 = vmul.f32 %v939, %v943
        %vm945 = vweird.f32 %v928
        %vm946 = vweird.f32 %v939
        %vm947 = vmor %vm945, %vm946
        %v948 = vsel %vm947, %v939, %v944
        %v949 = vmul.f32 %v911, %v938
        %v950 = vmul.f32 %v912, %v938
        %v951 = vmul.f32 %v913, %v948
        %v952 = vmul.f32 %v914, %v948
        %v954 = vperm.slane %v894, 0
        %v955 = vperm.slane %v894, 1
        %v958 = vmul.f32 %v949, %v954
        %v959 = vmul.f32 %v950, %v955
        %v960 = vmul.f32 %v951, %v954
        %v961 = vmul.f32 %v952, %v955
        %v963 = vperm.slane %v895, 0
        %v964 = vperm.slane %v895, 1
        %v967 = vadd.f32 %v958, %v963
        %v968 = vadd.f32 %v959, %v964
        %v969 = vadd.f32 %v960, %v963
        %v970 = vadd.f32 %v961, %v964
        %v971 = vld [vmem:[%s710] sm:$0xff]
        %v972 = vld [vmem:[%s710 + $0x8] sm:$0xff]
        %v973 = vld [vmem:[%s710 + $0x10] sm:$0xff]
        %v974 = vld [vmem:[%s710 + $0x18] sm:$0xff]
        %v975 = vld [vmem:[%s710 + $0x20] sm:$0xff]
        %v976 = vld [vmem:[%s710 + $0x28] sm:$0xff]
        %v977 = vld [vmem:[%s710 + $0x30] sm:$0xff]
        %v978 = vld [vmem:[%s710 + $0x38] sm:$0xff]
        %v979 = vld [vmem:[%s710 + $0x40] sm:$0xff]
        %v980 = vld [vmem:[%s710 + $0x48] sm:$0xff]
        %v981 = vld [vmem:[%s710 + $0x50] sm:$0xff]
        %v982 = vld [vmem:[%s710 + $0x58] sm:$0xff]
        %v983 = vld [vmem:[%s710 + $0x60] sm:$0xff]
        %v984 = vld [vmem:[%s710 + $0x68] sm:$0xff]
        %v985 = vld [vmem:[%s710 + $0x70] sm:$0xff]
        %v986 = vld [vmem:[%s710 + $0x78] sm:$0xff]
        %v987 = vld [vmem:[%s710 + $0x80] sm:$0xff]
        %v988 = vld [vmem:[%s710 + $0x88] sm:$0xff]
        %v989 = vld [vmem:[%s710 + $0x90] sm:$0xff]
        %v990 = vld [vmem:[%s710 + $0x98] sm:$0xff]
        %v991 = vld [vmem:[%s710 + $0xa0] sm:$0xff]
        %v992 = vld [vmem:[%s710 + $0xa8] sm:$0xff]
        %v993 = vld [vmem:[%s710 + $0xb0] sm:$0xff]
        %v994 = vld [vmem:[%s710 + $0xb8] sm:$0xff]
        %v995 = vld [vmem:[%s710 + $0xc0] sm:$0xff]
        %v996 = vld [vmem:[%s710 + $0xc8] sm:$0xff]
        %v997 = vld [vmem:[%s710 + $0xd0] sm:$0xff]
        %v998 = vld [vmem:[%s710 + $0xd8] sm:$0xff]
        %v999 = vld [vmem:[%s710 + $0xe0] sm:$0xff]
        %v1000 = vld [vmem:[%s710 + $0xe8] sm:$0xff]
        %v1001 = vld [vmem:[%s710 + $0xf0] sm:$0xff]
        %v1002 = vld [vmem:[%s710 + $0xf8] sm:$0xff]
        %v1003 = vld [vmem:[%s710 + $0x100] sm:$0xff]
        %v1004 = vld [vmem:[%s710 + $0x108] sm:$0xff]
        %v1005 = vld [vmem:[%s710 + $0x110] sm:$0xff]
        %v1006 = vld [vmem:[%s710 + $0x118] sm:$0xff]
        %v1007 = vld [vmem:[%s710 + $0x120] sm:$0xff]
        %v1008 = vld [vmem:[%s710 + $0x128] sm:$0xff]
        %v1009 = vld [vmem:[%s710 + $0x130] sm:$0xff]
        %v1010 = vld [vmem:[%s710 + $0x138] sm:$0xff]
        %v1011 = vld [vmem:[%s710 + $0x140] sm:$0xff]
        %v1012 = vld [vmem:[%s710 + $0x148] sm:$0xff]
        %v1013 = vld [vmem:[%s710 + $0x150] sm:$0xff]
        %v1014 = vld [vmem:[%s710 + $0x158] sm:$0xff]
        %v1015 = vld [vmem:[%s710 + $0x160] sm:$0xff]
        %v1016 = vld [vmem:[%s710 + $0x168] sm:$0xff]
        %v1017 = vld [vmem:[%s710 + $0x170] sm:$0xff]
        %v1018 = vld [vmem:[%s710 + $0x178] sm:$0xff]
        %v1019 = vld [vmem:[%s710 + $0x180] sm:$0xff]
        %v1020 = vld [vmem:[%s710 + $0x188] sm:$0xff]
        %v1021 = vld [vmem:[%s710 + $0x190] sm:$0xff]
        %v1022 = vld [vmem:[%s710 + $0x198] sm:$0xff]
        %v1023 = vld [vmem:[%s710 + $0x1a0] sm:$0xff]
        %v1024 = vld [vmem:[%s710 + $0x1a8] sm:$0xff]
        %v1025 = vld [vmem:[%s710 + $0x1b0] sm:$0xff]
        %v1026 = vld [vmem:[%s710 + $0x1b8] sm:$0xff]
        %v1027 = vld [vmem:[%s710 + $0x1c0] sm:$0xff]
        %v1028 = vld [vmem:[%s710 + $0x1c8] sm:$0xff]
        %v1029 = vld [vmem:[%s710 + $0x1d0] sm:$0xff]
        %v1030 = vld [vmem:[%s710 + $0x1d8] sm:$0xff]
        %v1031 = vld [vmem:[%s710 + $0x1e0] sm:$0xff]
        %v1032 = vld [vmem:[%s710 + $0x1e8] sm:$0xff]
        %v1033 = vld [vmem:[%s710 + $0x1f0] sm:$0xff]
        %v1034 = vld [vmem:[%s710 + $0x1f8] sm:$0xff]
        %v1035 = vld [vmem:[%s710 + $0x200] sm:$0xff]
        %v1036 = vld [vmem:[%s710 + $0x208] sm:$0xff]
        %v1037 = vld [vmem:[%s710 + $0x210] sm:$0xff]
        %v1038 = vld [vmem:[%s710 + $0x218] sm:$0xff]
        %v1039 = vld [vmem:[%s710 + $0x220] sm:$0xff]
        %v1040 = vld [vmem:[%s710 + $0x228] sm:$0xff]
        %v1041 = vld [vmem:[%s710 + $0x230] sm:$0xff]
        %v1042 = vld [vmem:[%s710 + $0x238] sm:$0xff]
        %v1043 = vld [vmem:[%s710 + $0x240] sm:$0xff]
        %v1044 = vld [vmem:[%s710 + $0x248] sm:$0xff]
        %v1045 = vld [vmem:[%s710 + $0x250] sm:$0xff]
        %v1046 = vld [vmem:[%s710 + $0x258] sm:$0xff]
        %v1047 = vld [vmem:[%s710 + $0x260] sm:$0xff]
        %v1048 = vld [vmem:[%s710 + $0x268] sm:$0xff]
        %v1049 = vld [vmem:[%s710 + $0x270] sm:$0xff]
        %v1050 = vld [vmem:[%s710 + $0x278] sm:$0xff]
        %v1051 = vld [vmem:[%s710 + $0x280] sm:$0xff]
        %v1052 = vld [vmem:[%s710 + $0x288] sm:$0xff]
        %v1053 = vld [vmem:[%s710 + $0x290] sm:$0xff]
        %v1054 = vld [vmem:[%s710 + $0x298] sm:$0xff]
        %v1055 = vld [vmem:[%s710 + $0x2a0] sm:$0xff]
        %v1056 = vld [vmem:[%s710 + $0x2a8] sm:$0xff]
        %v1057 = vld [vmem:[%s710 + $0x2b0] sm:$0xff]
        %v1058 = vld [vmem:[%s710 + $0x2b8] sm:$0xff]
        %v1059 = vld [vmem:[%s710 + $0x2c0] sm:$0xff]
        %v1060 = vld [vmem:[%s710 + $0x2c8] sm:$0xff]
        %v1061 = vld [vmem:[%s710 + $0x2d0] sm:$0xff]
        %v1062 = vld [vmem:[%s710 + $0x2d8] sm:$0xff]
        %v1063 = vld [vmem:[%s710 + $0x2e0] sm:$0xff]
        %v1064 = vld [vmem:[%s710 + $0x2e8] sm:$0xff]
        %v1065 = vld [vmem:[%s710 + $0x2f0] sm:$0xff]
        %v1066 = vld [vmem:[%s710 + $0x2f8] sm:$0xff]
        %v1067 = vpack.c.bf16 %v969, %v967
        %v1068 = vpack.c.bf16 %v970, %v968
        %v1069 = vld [vmem:[%s849] sm:$0x3f]
        %v1071 = vperm.slane %v1069, 0
        %v1072 = vperm.slane %v1069, 1
        %v1073 = vperm.slane %v1069, 2
        %v1074 = vperm.slane %v1069, 3
        %v1075 = vperm.slane %v1069, 4
        %v1076 = vperm.slane %v1069, 5
        %v1179 = vunpack.c.l.b16 %v971
        %v1180 = vunpack.c.h.b16 %v971
        %v1181 = vunpack.c.l.b16 %v972
        %v1182 = vunpack.c.h.b16 %v972
        %v1183 = vunpack.c.l.b16 %v973
        %v1184 = vunpack.c.h.b16 %v973
        %v1185 = vunpack.c.l.b16 %v974
        %v1186 = vunpack.c.h.b16 %v974
        %v1187 = vunpack.c.l.b16 %v975
        %v1188 = vunpack.c.h.b16 %v975
        %v1189 = vunpack.c.l.b16 %v976
        %v1190 = vunpack.c.h.b16 %v976
        %v1191 = vunpack.c.l.b16 %v977
        %v1192 = vunpack.c.h.b16 %v977
        %v1193 = vunpack.c.l.b16 %v978
        %v1194 = vunpack.c.h.b16 %v978
        %v1195 = vunpack.c.l.b16 %v979
        %v1196 = vunpack.c.h.b16 %v979
        %v1197 = vunpack.c.l.b16 %v980
        %v1198 = vunpack.c.h.b16 %v980
        %v1199 = vunpack.c.l.b16 %v981
        %v1200 = vunpack.c.h.b16 %v981
        %v1201 = vunpack.c.l.b16 %v982
        %v1202 = vunpack.c.h.b16 %v982
        %v1203 = vunpack.c.l.b16 %v983
        %v1204 = vunpack.c.h.b16 %v983
        %v1205 = vunpack.c.l.b16 %v984
        %v1206 = vunpack.c.h.b16 %v984
        %v1207 = vunpack.c.l.b16 %v985
        %v1208 = vunpack.c.h.b16 %v985
        %v1209 = vunpack.c.l.b16 %v986
        %v1210 = vunpack.c.h.b16 %v986
        %v1211 = vunpack.c.l.b16 %v987
        %v1212 = vunpack.c.h.b16 %v987
        %v1213 = vunpack.c.l.b16 %v988
        %v1214 = vunpack.c.h.b16 %v988
        %v1215 = vunpack.c.l.b16 %v989
        %v1216 = vunpack.c.h.b16 %v989
        %v1217 = vunpack.c.l.b16 %v990
        %v1218 = vunpack.c.h.b16 %v990
        %v1219 = vunpack.c.l.b16 %v991
        %v1220 = vunpack.c.h.b16 %v991
        %v1221 = vunpack.c.l.b16 %v992
        %v1222 = vunpack.c.h.b16 %v992
        %v1223 = vunpack.c.l.b16 %v993
        %v1224 = vunpack.c.h.b16 %v993
        %v1225 = vunpack.c.l.b16 %v994
        %v1226 = vunpack.c.h.b16 %v994
        %v1227 = vunpack.c.l.b16 %v995
        %v1228 = vunpack.c.h.b16 %v995
        %v1229 = vunpack.c.l.b16 %v996
        %v1230 = vunpack.c.h.b16 %v996
        %v1231 = vunpack.c.l.b16 %v997
        %v1232 = vunpack.c.h.b16 %v997
        %v1233 = vunpack.c.l.b16 %v998
        %v1234 = vunpack.c.h.b16 %v998
        %v1235 = vunpack.c.l.b16 %v999
        %v1236 = vunpack.c.h.b16 %v999
        %v1237 = vunpack.c.l.b16 %v1000
        %v1238 = vunpack.c.h.b16 %v1000
        %v1239 = vunpack.c.l.b16 %v1001
        %v1240 = vunpack.c.h.b16 %v1001
        %v1241 = vunpack.c.l.b16 %v1002
        %v1242 = vunpack.c.h.b16 %v1002
        %v1243 = vunpack.c.l.b16 %v1003
        %v1244 = vunpack.c.h.b16 %v1003
        %v1245 = vunpack.c.l.b16 %v1004
        %v1246 = vunpack.c.h.b16 %v1004
        %v1247 = vunpack.c.l.b16 %v1005
        %v1248 = vunpack.c.h.b16 %v1005
        %v1249 = vunpack.c.l.b16 %v1006
        %v1250 = vunpack.c.h.b16 %v1006
        %v1251 = vunpack.c.l.b16 %v1007
        %v1252 = vunpack.c.h.b16 %v1007
        %v1253 = vunpack.c.l.b16 %v1008
        %v1254 = vunpack.c.h.b16 %v1008
        %v1255 = vunpack.c.l.b16 %v1009
        %v1256 = vunpack.c.h.b16 %v1009
        %v1257 = vunpack.c.l.b16 %v1010
        %v1258 = vunpack.c.h.b16 %v1010
        %v1259 = vunpack.c.l.b16 %v1011
        %v1260 = vunpack.c.h.b16 %v1011
        %v1261 = vunpack.c.l.b16 %v1012
        %v1262 = vunpack.c.h.b16 %v1012
        %v1263 = vunpack.c.l.b16 %v1013
        %v1264 = vunpack.c.h.b16 %v1013
        %v1265 = vunpack.c.l.b16 %v1014
        %v1266 = vunpack.c.h.b16 %v1014
        %v1267 = vunpack.c.l.b16 %v1015
        %v1268 = vunpack.c.h.b16 %v1015
        %v1269 = vunpack.c.l.b16 %v1016
        %v1270 = vunpack.c.h.b16 %v1016
        %v1271 = vunpack.c.l.b16 %v1017
        %v1272 = vunpack.c.h.b16 %v1017
        %v1273 = vunpack.c.l.b16 %v1018
        %v1274 = vunpack.c.h.b16 %v1018
        %v1275 = vunpack.c.l.b16 %v1019
        %v1276 = vunpack.c.h.b16 %v1019
        %v1277 = vunpack.c.l.b16 %v1020
        %v1278 = vunpack.c.h.b16 %v1020
        %v1279 = vunpack.c.l.b16 %v1021
        %v1280 = vunpack.c.h.b16 %v1021
        %v1281 = vunpack.c.l.b16 %v1022
        %v1282 = vunpack.c.h.b16 %v1022
        %v1283 = vunpack.c.l.b16 %v1023
        %v1284 = vunpack.c.h.b16 %v1023
        %v1285 = vunpack.c.l.b16 %v1024
        %v1286 = vunpack.c.h.b16 %v1024
        %v1287 = vunpack.c.l.b16 %v1025
        %v1288 = vunpack.c.h.b16 %v1025
        %v1289 = vunpack.c.l.b16 %v1026
        %v1290 = vunpack.c.h.b16 %v1026
        %v1291 = vunpack.c.l.b16 %v1027
        %v1292 = vunpack.c.h.b16 %v1027
        %v1293 = vunpack.c.l.b16 %v1028
        %v1294 = vunpack.c.h.b16 %v1028
        %v1295 = vunpack.c.l.b16 %v1029
        %v1296 = vunpack.c.h.b16 %v1029
        %v1297 = vunpack.c.l.b16 %v1030
        %v1298 = vunpack.c.h.b16 %v1030
        %v1299 = vunpack.c.l.b16 %v1031
        %v1300 = vunpack.c.h.b16 %v1031
        %v1301 = vunpack.c.l.b16 %v1032
        %v1302 = vunpack.c.h.b16 %v1032
        %v1303 = vunpack.c.l.b16 %v1033
        %v1304 = vunpack.c.h.b16 %v1033
        %v1305 = vunpack.c.l.b16 %v1034
        %v1306 = vunpack.c.h.b16 %v1034
        %v1307 = vunpack.c.l.b16 %v1035
        %v1308 = vunpack.c.h.b16 %v1035
        %v1309 = vunpack.c.l.b16 %v1036
        %v1310 = vunpack.c.h.b16 %v1036
        %v1311 = vunpack.c.l.b16 %v1037
        %v1312 = vunpack.c.h.b16 %v1037
        %v1313 = vunpack.c.l.b16 %v1038
        %v1314 = vunpack.c.h.b16 %v1038
        %v1315 = vunpack.c.l.b16 %v1039
        %v1316 = vunpack.c.h.b16 %v1039
        %v1317 = vunpack.c.l.b16 %v1040
        %v1318 = vunpack.c.h.b16 %v1040
        %v1319 = vunpack.c.l.b16 %v1041
        %v1320 = vunpack.c.h.b16 %v1041
        %v1321 = vunpack.c.l.b16 %v1042
        %v1322 = vunpack.c.h.b16 %v1042
        %v1323 = vunpack.c.l.b16 %v1043
        %v1324 = vunpack.c.h.b16 %v1043
        %v1325 = vunpack.c.l.b16 %v1044
        %v1326 = vunpack.c.h.b16 %v1044
        %v1327 = vunpack.c.l.b16 %v1045
        %v1328 = vunpack.c.h.b16 %v1045
        %v1329 = vunpack.c.l.b16 %v1046
        %v1330 = vunpack.c.h.b16 %v1046
        %v1331 = vunpack.c.l.b16 %v1047
        %v1332 = vunpack.c.h.b16 %v1047
        %v1333 = vunpack.c.l.b16 %v1048
        %v1334 = vunpack.c.h.b16 %v1048
        %v1335 = vunpack.c.l.b16 %v1049
        %v1336 = vunpack.c.h.b16 %v1049
        %v1337 = vunpack.c.l.b16 %v1050
        %v1338 = vunpack.c.h.b16 %v1050
        %v1339 = vunpack.c.l.b16 %v1051
        %v1340 = vunpack.c.h.b16 %v1051
        %v1341 = vunpack.c.l.b16 %v1052
        %v1342 = vunpack.c.h.b16 %v1052
        %v1343 = vunpack.c.l.b16 %v1053
        %v1344 = vunpack.c.h.b16 %v1053
        %v1345 = vunpack.c.l.b16 %v1054
        %v1346 = vunpack.c.h.b16 %v1054
        %v1347 = vunpack.c.l.b16 %v1055
        %v1348 = vunpack.c.h.b16 %v1055
        %v1349 = vunpack.c.l.b16 %v1056
        %v1350 = vunpack.c.h.b16 %v1056
        %v1351 = vunpack.c.l.b16 %v1057
        %v1352 = vunpack.c.h.b16 %v1057
        %v1353 = vunpack.c.l.b16 %v1058
        %v1354 = vunpack.c.h.b16 %v1058
        %v1355 = vunpack.c.l.b16 %v1059
        %v1356 = vunpack.c.h.b16 %v1059
        %v1357 = vunpack.c.l.b16 %v1060
        %v1358 = vunpack.c.h.b16 %v1060
        %v1359 = vunpack.c.l.b16 %v1061
        %v1360 = vunpack.c.h.b16 %v1061
        %v1361 = vunpack.c.l.b16 %v1062
        %v1362 = vunpack.c.h.b16 %v1062
        %v1363 = vunpack.c.l.b16 %v1063
        %v1364 = vunpack.c.h.b16 %v1063
        %v1365 = vunpack.c.l.b16 %v1064
        %v1366 = vunpack.c.h.b16 %v1064
        %v1367 = vunpack.c.l.b16 %v1065
        %v1368 = vunpack.c.h.b16 %v1065
        %v1369 = vunpack.c.l.b16 %v1066
        %v1370 = vunpack.c.h.b16 %v1066
        %v1371 = vpack.c.b16 %v1185, %v1179
        %v1372 = vpack.c.b16 %v1186, %v1180
        %v1373 = vpack.c.b16 %v1187, %v1181
        %v1374 = vpack.c.b16 %v1188, %v1182
        %v1375 = vpack.c.b16 %v1189, %v1183
        %v1376 = vpack.c.b16 %v1190, %v1184
        %v1377 = vpack.c.b16 %v1197, %v1191
        %v1378 = vpack.c.b16 %v1198, %v1192
        %v1379 = vpack.c.b16 %v1199, %v1193
        %v1380 = vpack.c.b16 %v1200, %v1194
        %v1381 = vpack.c.b16 %v1201, %v1195
        %v1382 = vpack.c.b16 %v1202, %v1196
        %v1383 = vpack.c.b16 %v1209, %v1203
        %v1384 = vpack.c.b16 %v1210, %v1204
        %v1385 = vpack.c.b16 %v1211, %v1205
        %v1386 = vpack.c.b16 %v1212, %v1206
        %v1387 = vpack.c.b16 %v1213, %v1207
        %v1388 = vpack.c.b16 %v1214, %v1208
        %v1389 = vpack.c.b16 %v1221, %v1215
        %v1390 = vpack.c.b16 %v1222, %v1216
        %v1391 = vpack.c.b16 %v1223, %v1217
        %v1392 = vpack.c.b16 %v1224, %v1218
        %v1393 = vpack.c.b16 %v1225, %v1219
        %v1394 = vpack.c.b16 %v1226, %v1220
        %v1395 = vpack.c.b16 %v1233, %v1227
        %v1396 = vpack.c.b16 %v1234, %v1228
        %v1397 = vpack.c.b16 %v1235, %v1229
        %v1398 = vpack.c.b16 %v1236, %v1230
        %v1399 = vpack.c.b16 %v1237, %v1231
        %v1400 = vpack.c.b16 %v1238, %v1232
        %v1401 = vpack.c.b16 %v1245, %v1239
        %v1402 = vpack.c.b16 %v1246, %v1240
        %v1403 = vpack.c.b16 %v1247, %v1241
        %v1404 = vpack.c.b16 %v1248, %v1242
        %v1405 = vpack.c.b16 %v1249, %v1243
        %v1406 = vpack.c.b16 %v1250, %v1244
        %v1407 = vpack.c.b16 %v1257, %v1251
        %v1408 = vpack.c.b16 %v1258, %v1252
        %v1409 = vpack.c.b16 %v1259, %v1253
        %v1410 = vpack.c.b16 %v1260, %v1254
        %v1411 = vpack.c.b16 %v1261, %v1255
        %v1412 = vpack.c.b16 %v1262, %v1256
        %v1413 = vpack.c.b16 %v1269, %v1263
        %v1414 = vpack.c.b16 %v1270, %v1264
        %v1415 = vpack.c.b16 %v1271, %v1265
        %v1416 = vpack.c.b16 %v1272, %v1266
        %v1417 = vpack.c.b16 %v1273, %v1267
        %v1418 = vpack.c.b16 %v1274, %v1268
        %v1419 = vpack.c.b16 %v1281, %v1275
        %v1420 = vpack.c.b16 %v1282, %v1276
        %v1421 = vpack.c.b16 %v1283, %v1277
        %v1422 = vpack.c.b16 %v1284, %v1278
        %v1423 = vpack.c.b16 %v1285, %v1279
        %v1424 = vpack.c.b16 %v1286, %v1280
        %v1425 = vpack.c.b16 %v1293, %v1287
        %v1426 = vpack.c.b16 %v1294, %v1288
        %v1427 = vpack.c.b16 %v1295, %v1289
        %v1428 = vpack.c.b16 %v1296, %v1290
        %v1429 = vpack.c.b16 %v1297, %v1291
        %v1430 = vpack.c.b16 %v1298, %v1292
        %v1431 = vpack.c.b16 %v1305, %v1299
        %v1432 = vpack.c.b16 %v1306, %v1300
        %v1433 = vpack.c.b16 %v1307, %v1301
        %v1434 = vpack.c.b16 %v1308, %v1302
        %v1435 = vpack.c.b16 %v1309, %v1303
        %v1436 = vpack.c.b16 %v1310, %v1304
        %v1437 = vpack.c.b16 %v1317, %v1311
        %v1438 = vpack.c.b16 %v1318, %v1312
        %v1439 = vpack.c.b16 %v1319, %v1313
        %v1440 = vpack.c.b16 %v1320, %v1314
        %v1441 = vpack.c.b16 %v1321, %v1315
        %v1442 = vpack.c.b16 %v1322, %v1316
        %v1443 = vpack.c.b16 %v1329, %v1323
        %v1444 = vpack.c.b16 %v1330, %v1324
        %v1445 = vpack.c.b16 %v1331, %v1325
        %v1446 = vpack.c.b16 %v1332, %v1326
        %v1447 = vpack.c.b16 %v1333, %v1327
        %v1448 = vpack.c.b16 %v1334, %v1328
        %v1449 = vpack.c.b16 %v1341, %v1335
        %v1450 = vpack.c.b16 %v1342, %v1336
        %v1451 = vpack.c.b16 %v1343, %v1337
        %v1452 = vpack.c.b16 %v1344, %v1338
        %v1453 = vpack.c.b16 %v1345, %v1339
        %v1454 = vpack.c.b16 %v1346, %v1340
        %v1455 = vpack.c.b16 %v1353, %v1347
        %v1456 = vpack.c.b16 %v1354, %v1348
        %v1457 = vpack.c.b16 %v1355, %v1349
        %v1458 = vpack.c.b16 %v1356, %v1350
        %v1459 = vpack.c.b16 %v1357, %v1351
        %v1460 = vpack.c.b16 %v1358, %v1352
        %v1461 = vpack.c.b16 %v1365, %v1359
        %v1462 = vpack.c.b16 %v1366, %v1360
        %v1463 = vpack.c.b16 %v1367, %v1361
        %v1464 = vpack.c.b16 %v1368, %v1362
        %v1465 = vpack.c.b16 %v1369, %v1363
        %v1466 = vpack.c.b16 %v1370, %v1364
        %1563 = vmatpush.bf16.msra.mxu0 %v1413
        %1564 = vmatpush.bf16.msra.mxu0 %v1407
        %1565 = vmatpush.bf16.msra.mxu0 %v1401
        %1566 = vmatpush.bf16.msra.mxu0 %v1395
        %1567 = vmatpush.bf16.msra.mxu0 %v1389
        %1568 = vmatpush.bf16.msra.mxu0 %v1383
        %1569 = vmatpush.bf16.msra.mxu0 %v1377
        %1570 = vmatpush.bf16.msra.mxu0 %v1371
        %1571 = vmatmul.bf16.gmra.mxu0 %v1067
        %v1572 = vpop.f32.mrf.mxu0
        %v1573 = vadd.f32 %v1071, %v1572
        %v1574 = vpop.f32.mrf.mxu0
        %v1575 = vadd.f32 %v1071, %v1574
        %1576 = vdwg.mxu0
        %1577 = vmatpush.bf16.msra.mxu0 %v1461
        %1578 = vmatpush.bf16.msra.mxu0 %v1455
        %1579 = vmatpush.bf16.msra.mxu0 %v1449
        %1580 = vmatpush.bf16.msra.mxu0 %v1443
        %1581 = vmatpush.bf16.msra.mxu0 %v1437
        %1582 = vmatpush.bf16.msra.mxu0 %v1431
        %1583 = vmatpush.bf16.msra.mxu0 %v1425
        %1584 = vmatpush.bf16.msra.mxu0 %v1419
        %1585 = vmatmul.bf16.gmra.mxu0 %v1068
        %v1586 = vpop.f32.mrf.mxu0
        %v1587 = vadd.f32 %v1573, %v1586
        %v1588 = vpop.f32.mrf.mxu0
        %v1589 = vadd.f32 %v1575, %v1588
        %1590 = vdwg.mxu0
        %1591 = vmatpush.bf16.msra.mxu0 %v1414
        %1592 = vmatpush.bf16.msra.mxu0 %v1408
        %1593 = vmatpush.bf16.msra.mxu0 %v1402
        %1594 = vmatpush.bf16.msra.mxu0 %v1396
        %1595 = vmatpush.bf16.msra.mxu0 %v1390
        %1596 = vmatpush.bf16.msra.mxu0 %v1384
        %1597 = vmatpush.bf16.msra.mxu0 %v1378
        %1598 = vmatpush.bf16.msra.mxu0 %v1372
        %1599 = vmatmul.bf16.gmra.mxu0 %v1067
        %v1600 = vpop.f32.mrf.mxu0
        %v1601 = vadd.f32 %v1072, %v1600
        %v1602 = vpop.f32.mrf.mxu0
        %v1603 = vadd.f32 %v1072, %v1602
        %1604 = vdwg.mxu0
        %1605 = vmatpush.bf16.msra.mxu0 %v1462
        %1606 = vmatpush.bf16.msra.mxu0 %v1456
        %1607 = vmatpush.bf16.msra.mxu0 %v1450
        %1608 = vmatpush.bf16.msra.mxu0 %v1444
        %1609 = vmatpush.bf16.msra.mxu0 %v1438
        %1610 = vmatpush.bf16.msra.mxu0 %v1432
        %1611 = vmatpush.bf16.msra.mxu0 %v1426
        %1612 = vmatpush.bf16.msra.mxu0 %v1420
        %1613 = vmatmul.bf16.gmra.mxu0 %v1068
        %v1614 = vpop.f32.mrf.mxu0
        %v1615 = vadd.f32 %v1601, %v1614
        %v1616 = vpop.f32.mrf.mxu0
        %v1617 = vadd.f32 %v1603, %v1616
        %1618 = vdwg.mxu0
        %1619 = vmatpush.bf16.msra.mxu0 %v1415
        %1620 = vmatpush.bf16.msra.mxu0 %v1409
        %1621 = vmatpush.bf16.msra.mxu0 %v1403
        %1622 = vmatpush.bf16.msra.mxu0 %v1397
        %1623 = vmatpush.bf16.msra.mxu0 %v1391
        %1624 = vmatpush.bf16.msra.mxu0 %v1385
        %1625 = vmatpush.bf16.msra.mxu0 %v1379
        %1626 = vmatpush.bf16.msra.mxu0 %v1373
        %1627 = vmatmul.bf16.gmra.mxu0 %v1067
        %v1628 = vpop.f32.mrf.mxu0
        %v1629 = vadd.f32 %v1073, %v1628
        %v1630 = vpop.f32.mrf.mxu0
        %v1631 = vadd.f32 %v1073, %v1630
        %1632 = vdwg.mxu0
        %1633 = vmatpush.bf16.msra.mxu0 %v1463
        %1634 = vmatpush.bf16.msra.mxu0 %v1457
        %1635 = vmatpush.bf16.msra.mxu0 %v1451
        %1636 = vmatpush.bf16.msra.mxu0 %v1445
        %1637 = vmatpush.bf16.msra.mxu0 %v1439
        %1638 = vmatpush.bf16.msra.mxu0 %v1433
        %1639 = vmatpush.bf16.msra.mxu0 %v1427
        %1640 = vmatpush.bf16.msra.mxu0 %v1421
        %1641 = vmatmul.bf16.gmra.mxu0 %v1068
        %v1642 = vpop.f32.mrf.mxu0
        %v1643 = vadd.f32 %v1629, %v1642
        %v1644 = vpop.f32.mrf.mxu0
        %v1645 = vadd.f32 %v1631, %v1644
        %1646 = vdwg.mxu0
        %1647 = vmatpush.bf16.msra.mxu0 %v1416
        %1648 = vmatpush.bf16.msra.mxu0 %v1410
        %1649 = vmatpush.bf16.msra.mxu0 %v1404
        %1650 = vmatpush.bf16.msra.mxu0 %v1398
        %1651 = vmatpush.bf16.msra.mxu0 %v1392
        %1652 = vmatpush.bf16.msra.mxu0 %v1386
        %1653 = vmatpush.bf16.msra.mxu0 %v1380
        %1654 = vmatpush.bf16.msra.mxu0 %v1374
        %1655 = vmatmul.bf16.gmra.mxu0 %v1067
        %v1656 = vpop.f32.mrf.mxu0
        %v1657 = vadd.f32 %v1074, %v1656
        %v1658 = vpop.f32.mrf.mxu0
        %v1659 = vadd.f32 %v1074, %v1658
        %1660 = vdwg.mxu0
        %1661 = vmatpush.bf16.msra.mxu0 %v1464
        %1662 = vmatpush.bf16.msra.mxu0 %v1458
        %1663 = vmatpush.bf16.msra.mxu0 %v1452
        %1664 = vmatpush.bf16.msra.mxu0 %v1446
        %1665 = vmatpush.bf16.msra.mxu0 %v1440
        %1666 = vmatpush.bf16.msra.mxu0 %v1434
        %1667 = vmatpush.bf16.msra.mxu0 %v1428
        %1668 = vmatpush.bf16.msra.mxu0 %v1422
        %1669 = vmatmul.bf16.gmra.mxu0 %v1068
        %v1670 = vpop.f32.mrf.mxu0
        %v1671 = vadd.f32 %v1657, %v1670
        %v1672 = vpop.f32.mrf.mxu0
        %v1673 = vadd.f32 %v1659, %v1672
        %1674 = vdwg.mxu0
        %1675 = vmatpush.bf16.msra.mxu0 %v1417
        %1676 = vmatpush.bf16.msra.mxu0 %v1411
        %1677 = vmatpush.bf16.msra.mxu0 %v1405
        %1678 = vmatpush.bf16.msra.mxu0 %v1399
        %1679 = vmatpush.bf16.msra.mxu0 %v1393
        %1680 = vmatpush.bf16.msra.mxu0 %v1387
        %1681 = vmatpush.bf16.msra.mxu0 %v1381
        %1682 = vmatpush.bf16.msra.mxu0 %v1375
        %1683 = vmatmul.bf16.gmra.mxu0 %v1067
        %v1684 = vpop.f32.mrf.mxu0
        %v1685 = vadd.f32 %v1075, %v1684
        %v1686 = vpop.f32.mrf.mxu0
        %v1687 = vadd.f32 %v1075, %v1686
        %1688 = vdwg.mxu0
        %1689 = vmatpush.bf16.msra.mxu0 %v1465
        %1690 = vmatpush.bf16.msra.mxu0 %v1459
        %1691 = vmatpush.bf16.msra.mxu0 %v1453
        %1692 = vmatpush.bf16.msra.mxu0 %v1447
        %1693 = vmatpush.bf16.msra.mxu0 %v1441
        %1694 = vmatpush.bf16.msra.mxu0 %v1435
        %1695 = vmatpush.bf16.msra.mxu0 %v1429
        %1696 = vmatpush.bf16.msra.mxu0 %v1423
        %1697 = vmatmul.bf16.gmra.mxu0 %v1068
        %v1698 = vpop.f32.mrf.mxu0
        %v1699 = vadd.f32 %v1685, %v1698
        %v1700 = vpop.f32.mrf.mxu0
        %v1701 = vadd.f32 %v1687, %v1700
        %1702 = vdwg.mxu0
        %1703 = vmatpush.bf16.msra.mxu0 %v1418
        %1704 = vmatpush.bf16.msra.mxu0 %v1412
        %1705 = vmatpush.bf16.msra.mxu0 %v1406
        %1706 = vmatpush.bf16.msra.mxu0 %v1400
        %1707 = vmatpush.bf16.msra.mxu0 %v1394
        %1708 = vmatpush.bf16.msra.mxu0 %v1388
        %1709 = vmatpush.bf16.msra.mxu0 %v1382
        %1710 = vmatpush.bf16.msra.mxu0 %v1376
        %1711 = vmatmul.bf16.gmra.mxu0 %v1067
        %v1712 = vpop.f32.mrf.mxu0
        %v1713 = vadd.f32 %v1076, %v1712
        %v1714 = vpop.f32.mrf.mxu0
        %v1715 = vadd.f32 %v1076, %v1714
        %1716 = vdwg.mxu0
        %1717 = vmatpush.bf16.msra.mxu0 %v1466
        %1718 = vmatpush.bf16.msra.mxu0 %v1460
        %1719 = vmatpush.bf16.msra.mxu0 %v1454
        %1720 = vmatpush.bf16.msra.mxu0 %v1448
        %1721 = vmatpush.bf16.msra.mxu0 %v1442
        %1722 = vmatpush.bf16.msra.mxu0 %v1436
        %1723 = vmatpush.bf16.msra.mxu0 %v1430
        %1724 = vmatpush.bf16.msra.mxu0 %v1424
        %1725 = vmatmul.bf16.gmra.mxu0 %v1068
        %v1726 = vpop.f32.mrf.mxu0
        %v1727 = vadd.f32 %v1713, %v1726
        %v1728 = vpop.f32.mrf.mxu0
        %v1729 = vadd.f32 %v1715, %v1728
        %1730 = vdwg.mxu0
        %v1731 = vpack.c.bf16 %v1587, %v1587
        %v1732 = vpack.c.bf16 %v1643, %v1643
        %v1733 = vpack.c.bf16 %v1699, %v1699
        %1734 = vmatpush.bf16.xpose.msra.mxu0 0
        %1735 = vmatpush.bf16.xpose.msra.mxu0 0
        %1736 = vmatpush.bf16.xpose.msra.mxu0 0
        %1737 = vmatpush.bf16.xpose.msra.mxu0 0
        %1738 = vmatpush.bf16.xpose.msra.mxu0 0
        %1739 = vmatpush.bf16.xpose.msra.mxu0 0
        %1740 = vmatpush.bf16.xpose.msra.mxu0 0
        %1741 = vmatpush.bf16.xpose.msra.mxu0 %v1732
        %1742 = vmatmul.bf16.gmra.mxu0 %v1731
        %v1743 = vpop.f32.mrf.mxu0
        %v1744 = vadd.f32 0.0, %v1743
        %v1745 = vpop.f32.mrf.mxu0
        %1746 = vdwg.mxu0
        %v1747 = vmul.f32 %v1744, 0.088388346
        %v1748 = vadd.f32 %v1747, %v893
        %vm1749 = vcmask 64512
        %v1750 = vsel %vm1749, %v1748, -inf
        %1751 = vmax.xlane.f32.xlu0 %v1750
        %v1752 = vpop.xlane.xlu0 %1751
        %v1753 = vsub.f32 %v1748, %v1752
        %v1754 = vmul.f32 %v1753, 1.442695
        %v1755 = vpow.pop %v1754
        %v1756 = vsel %vm1749, %v1755, 0.0
        %1757 = vadd.xlane.f32.xlu0 %v1756
        %v1758 = vpop.xlane.xlu0 %1757
        %v1759 = vrcp.pop %v1758
        %v1760 = vmul.f32 %v1755, %v1759
        %v1761 = vpack.c.bf16 %v1760, %v1760
        %v1763 = vsel %vm1749, %v1761, 0
        %vm1765 = vcmask 1043456
        %v1767 = vsel %vm1765, %v1733, 0
        %1769 = vmatpush.bf16.msra.mxu0 0
        %1770 = vmatpush.bf16.msra.mxu0 0
        %1771 = vmatpush.bf16.msra.mxu0 0
        %1772 = vmatpush.bf16.msra.mxu0 0
        %1773 = vmatpush.bf16.msra.mxu0 0
        %1774 = vmatpush.bf16.msra.mxu0 0
        %1775 = vmatpush.bf16.msra.mxu0 0
        %1776 = vmatpush.bf16.msra.mxu0 %v1767
        %1777 = vmatmul.bf16.gmra.mxu0 %v1763
        %v1778 = vpop.f32.mrf.mxu0
        %v1779 = vadd.f32 0.0, %v1778
        %v1780 = vpop.f32.mrf.mxu0
        %1781 = vdwg.mxu0
        %v1782 = vpack.c.bf16 %v1615, %v1615
        %v1783 = vpack.c.bf16 %v1671, %v1671
        %v1784 = vpack.c.bf16 %v1727, %v1727
        %1785 = vmatpush.bf16.xpose.msra.mxu0 0
        %1786 = vmatpush.bf16.xpose.msra.mxu0 0
        %1787 = vmatpush.bf16.xpose.msra.mxu0 0
        %1788 = vmatpush.bf16.xpose.msra.mxu0 0
        %1789 = vmatpush.bf16.xpose.msra.mxu0 0
        %1790 = vmatpush.bf16.xpose.msra.mxu0 0
        %1791 = vmatpush.bf16.xpose.msra.mxu0 0
        %1792 = vmatpush.bf16.xpose.msra.mxu0 %v1783
        %1793 = vmatmul.bf16.gmra.mxu0 %v1782
        %v1794 = vpop.f32.mrf.mxu0
        %v1795 = vadd.f32 0.0, %v1794
        %v1796 = vpop.f32.mrf.mxu0
        %1797 = vdwg.mxu0
        %v1798 = vmul.f32 %v1795, 0.088388346
        %v1799 = vadd.f32 %v1798, %v893
        %v1800 = vsel %vm1749, %v1799, -inf
        %1801 = vmax.xlane.f32.xlu0 %v1800
        %v1802 = vpop.xlane.xlu0 %1801
        %v1803 = vsub.f32 %v1799, %v1802
        %v1804 = vmul.f32 %v1803, 1.442695
        %v1805 = vpow.pop %v1804
        %v1806 = vsel %vm1749, %v1805, 0.0
        %1807 = vadd.xlane.f32.xlu0 %v1806
        %v1808 = vpop.xlane.xlu0 %1807
        %v1809 = vrcp.pop %v1808
        %v1810 = vmul.f32 %v1805, %v1809
        %v1811 = vpack.c.bf16 %v1810, %v1810
        %v1813 = vsel %vm1749, %v1811, 0
        %v1816 = vsel %vm1765, %v1784, 0
        %1818 = vmatpush.bf16.msra.mxu0 0
        %1819 = vmatpush.bf16.msra.mxu0 0
        %1820 = vmatpush.bf16.msra.mxu0 0
        %1821 = vmatpush.bf16.msra.mxu0 0
        %1822 = vmatpush.bf16.msra.mxu0 0
        %1823 = vmatpush.bf16.msra.mxu0 0
        %1824 = vmatpush.bf16.msra.mxu0 0
        %1825 = vmatpush.bf16.msra.mxu0 %v1816
        %1826 = vmatmul.bf16.gmra.mxu0 %v1813
        %v1827 = vpop.f32.mrf.mxu0
        %v1828 = vadd.f32 0.0, %v1827
        %v1829 = vpop.f32.mrf.mxu0
        %1830 = vdwg.mxu0
        %v1831 = vpack.c.bf16 %v1589, %v1589
        %v1832 = vpack.c.bf16 %v1645, %v1645
        %v1833 = vpack.c.bf16 %v1701, %v1701
        %1834 = vmatpush.bf16.xpose.msra.mxu0 0
        %1835 = vmatpush.bf16.xpose.msra.mxu0 0
        %1836 = vmatpush.bf16.xpose.msra.mxu0 0
        %1837 = vmatpush.bf16.xpose.msra.mxu0 0
        %1838 = vmatpush.bf16.xpose.msra.mxu0 0
        %1839 = vmatpush.bf16.xpose.msra.mxu0 0
        %1840 = vmatpush.bf16.xpose.msra.mxu0 0
        %1841 = vmatpush.bf16.xpose.msra.mxu0 %v1832
        %1842 = vmatmul.bf16.gmra.mxu0 %v1831
        %v1843 = vpop.f32.mrf.mxu0
        %v1844 = vadd.f32 0.0, %v1843
        %v1845 = vpop.f32.mrf.mxu0
        %1846 = vdwg.mxu0
        %v1847 = vmul.f32 %v1844, 0.088388346
        %v1848 = vadd.f32 %v1847, %v893
        %v1849 = vsel %vm1749, %v1848, -inf
        %1850 = vmax.xlane.f32.xlu0 %v1849
        %v1851 = vpop.xlane.xlu0 %1850
        %v1852 = vsub.f32 %v1848, %v1851
        %v1853 = vmul.f32 %v1852, 1.442695
        %v1854 = vpow.pop %v1853
        %v1855 = vsel %vm1749, %v1854, 0.0
        %1856 = vadd.xlane.f32.xlu0 %v1855
        %v1857 = vpop.xlane.xlu0 %1856
        %v1858 = vrcp.pop %v1857
        %v1859 = vmul.f32 %v1854, %v1858
        %v1860 = vpack.c.bf16 %v1859, %v1859
        %v1862 = vsel %vm1749, %v1860, 0
        %v1865 = vsel %vm1765, %v1833, 0
        %1867 = vmatpush.bf16.msra.mxu0 0
        %1868 = vmatpush.bf16.msra.mxu0 0
        %1869 = vmatpush.bf16.msra.mxu0 0
        %1870 = vmatpush.bf16.msra.mxu0 0
        %1871 = vmatpush.bf16.msra.mxu0 0
        %1872 = vmatpush.bf16.msra.mxu0 0
        %1873 = vmatpush.bf16.msra.mxu0 0
        %1874 = vmatpush.bf16.msra.mxu0 %v1865
        %1875 = vmatmul.bf16.gmra.mxu0 %v1862
        %v1876 = vpop.f32.mrf.mxu0
        %v1877 = vadd.f32 0.0, %v1876
        %v1878 = vpop.f32.mrf.mxu0
        %1879 = vdwg.mxu0
        %v1880 = vpack.c.bf16 %v1617, %v1617
        %v1881 = vpack.c.bf16 %v1673, %v1673
        %v1882 = vpack.c.bf16 %v1729, %v1729
        %1883 = vmatpush.bf16.xpose.msra.mxu0 0
        %1884 = vmatpush.bf16.xpose.msra.mxu0 0
        %1885 = vmatpush.bf16.xpose.msra.mxu0 0
        %1886 = vmatpush.bf16.xpose.msra.mxu0 0
        %1887 = vmatpush.bf16.xpose.msra.mxu0 0
        %1888 = vmatpush.bf16.xpose.msra.mxu0 0
        %1889 = vmatpush.bf16.xpose.msra.mxu0 0
        %1890 = vmatpush.bf16.xpose.msra.mxu0 %v1881
        %1891 = vmatmul.bf16.gmra.mxu0 %v1880
        %v1892 = vpop.f32.mrf.mxu0
        %v1893 = vadd.f32 0.0, %v1892
        %v1894 = vpop.f32.mrf.mxu0
        %1895 = vdwg.mxu0
        %v1896 = vmul.f32 %v1893, 0.088388346
        %v1897 = vadd.f32 %v1896, %v893
        %v1898 = vsel %vm1749, %v1897, -inf
        %1899 = vmax.xlane.f32.xlu0 %v1898
        %v1900 = vpop.xlane.xlu0 %1899
        %v1901 = vsub.f32 %v1897, %v1900
        %v1902 = vmul.f32 %v1901, 1.442695
        %v1903 = vpow.pop %v1902
        %v1904 = vsel %vm1749, %v1903, 0.0
        %1905 = vadd.xlane.f32.xlu0 %v1904
        %v1906 = vpop.xlane.xlu0 %1905
        %v1907 = vrcp.pop %v1906
        %v1908 = vmul.f32 %v1903, %v1907
        %v1909 = vpack.c.bf16 %v1908, %v1908
        %v1911 = vsel %vm1749, %v1909, 0
        %v1914 = vsel %vm1765, %v1882, 0
        %1916 = vmatpush.bf16.msra.mxu0 0
        %1917 = vmatpush.bf16.msra.mxu0 0
        %1918 = vmatpush.bf16.msra.mxu0 0
        %1919 = vmatpush.bf16.msra.mxu0 0
        %1920 = vmatpush.bf16.msra.mxu0 0
        %1921 = vmatpush.bf16.msra.mxu0 0
        %1922 = vmatpush.bf16.msra.mxu0 0
        %1923 = vmatpush.bf16.msra.mxu0 %v1914
        %1924 = vmatmul.bf16.gmra.mxu0 %v1911
        %v1925 = vpop.f32.mrf.mxu0
        %v1926 = vadd.f32 0.0, %v1925
        %v1927 = vpop.f32.mrf.mxu0
        %1928 = vdwg.mxu0
        %v1929 = vld [vmem:[%s720] sm:$0xff]
        %v1930 = vld [vmem:[%s720 + $0x8] sm:$0xff]
        %v1931 = vld [vmem:[%s720 + $0x10] sm:$0xff]
        %v1932 = vld [vmem:[%s720 + $0x18] sm:$0xff]
        %v1933 = vld [vmem:[%s720 + $0x20] sm:$0xff]
        %v1934 = vld [vmem:[%s720 + $0x28] sm:$0xff]
        %v1935 = vld [vmem:[%s720 + $0x30] sm:$0xff]
        %v1936 = vld [vmem:[%s720 + $0x38] sm:$0xff]
        %v1937 = vld [vmem:[%s720 + $0x40] sm:$0xff]
        %v1938 = vld [vmem:[%s720 + $0x48] sm:$0xff]
        %v1939 = vld [vmem:[%s720 + $0x50] sm:$0xff]
        %v1940 = vld [vmem:[%s720 + $0x58] sm:$0xff]
        %v1941 = vld [vmem:[%s720 + $0x60] sm:$0xff]
        %v1942 = vld [vmem:[%s720 + $0x68] sm:$0xff]
        %v1943 = vld [vmem:[%s720 + $0x70] sm:$0xff]
        %v1944 = vld [vmem:[%s720 + $0x78] sm:$0xff]
        %v1945 = vld [vmem:[%s720 + $0x80] sm:$0xff]
        %v1946 = vld [vmem:[%s720 + $0x88] sm:$0xff]
        %v1947 = vld [vmem:[%s720 + $0x90] sm:$0xff]
        %v1948 = vld [vmem:[%s720 + $0x98] sm:$0xff]
        %v1949 = vld [vmem:[%s720 + $0xa0] sm:$0xff]
        %v1950 = vld [vmem:[%s720 + $0xa8] sm:$0xff]
        %v1951 = vld [vmem:[%s720 + $0xb0] sm:$0xff]
        %v1952 = vld [vmem:[%s720 + $0xb8] sm:$0xff]
        %v1953 = vld [vmem:[%s720 + $0xc0] sm:$0xff]
        %v1954 = vld [vmem:[%s720 + $0xc8] sm:$0xff]
        %v1955 = vld [vmem:[%s720 + $0xd0] sm:$0xff]
        %v1956 = vld [vmem:[%s720 + $0xd8] sm:$0xff]
        %v1957 = vld [vmem:[%s720 + $0xe0] sm:$0xff]
        %v1958 = vld [vmem:[%s720 + $0xe8] sm:$0xff]
        %v1959 = vld [vmem:[%s720 + $0xf0] sm:$0xff]
        %v1960 = vld [vmem:[%s720 + $0xf8] sm:$0xff]
        %v1961 = vpack.c.bf16 %v1877, %v1779
        %v1962 = vpack.c.bf16 %v1926, %v1828
        %v1995 = vunpack.c.l.b16 %v1929
        %v1996 = vunpack.c.h.b16 %v1929
        %v1997 = vunpack.c.l.b16 %v1930
        %v1998 = vunpack.c.h.b16 %v1930
        %v1999 = vunpack.c.l.b16 %v1931
        %v2000 = vunpack.c.h.b16 %v1931
        %v2001 = vunpack.c.l.b16 %v1932
        %v2002 = vunpack.c.h.b16 %v1932
        %v2003 = vunpack.c.l.b16 %v1933
        %v2004 = vunpack.c.h.b16 %v1933
        %v2005 = vunpack.c.l.b16 %v1934
        %v2006 = vunpack.c.h.b16 %v1934
        %v2007 = vunpack.c.l.b16 %v1935
        %v2008 = vunpack.c.h.b16 %v1935
        %v2009 = vunpack.c.l.b16 %v1936
        %v2010 = vunpack.c.h.b16 %v1936
        %v2011 = vunpack.c.l.b16 %v1937
        %v2012 = vunpack.c.h.b16 %v1937
        %v2013 = vunpack.c.l.b16 %v1938
        %v2014 = vunpack.c.h.b16 %v1938
        %v2015 = vunpack.c.l.b16 %v1939
        %v2016 = vunpack.c.h.b16 %v1939
        %v2017 = vunpack.c.l.b16 %v1940
        %v2018 = vunpack.c.h.b16 %v1940
        %v2019 = vunpack.c.l.b16 %v1941
        %v2020 = vunpack.c.h.b16 %v1941
        %v2021 = vunpack.c.l.b16 %v1942
        %v2022 = vunpack.c.h.b16 %v1942
        %v2023 = vunpack.c.l.b16 %v1943
        %v2024 = vunpack.c.h.b16 %v1943
        %v2025 = vunpack.c.l.b16 %v1944
        %v2026 = vunpack.c.h.b16 %v1944
        %v2027 = vunpack.c.l.b16 %v1945
        %v2028 = vunpack.c.h.b16 %v1945
        %v2029 = vunpack.c.l.b16 %v1946
        %v2030 = vunpack.c.h.b16 %v1946
        %v2031 = vunpack.c.l.b16 %v1947
        %v2032 = vunpack.c.h.b16 %v1947
        %v2033 = vunpack.c.l.b16 %v1948
        %v2034 = vunpack.c.h.b16 %v1948
        %v2035 = vunpack.c.l.b16 %v1949
        %v2036 = vunpack.c.h.b16 %v1949
        %v2037 = vunpack.c.l.b16 %v1950
        %v2038 = vunpack.c.h.b16 %v1950
        %v2039 = vunpack.c.l.b16 %v1951
        %v2040 = vunpack.c.h.b16 %v1951
        %v2041 = vunpack.c.l.b16 %v1952
        %v2042 = vunpack.c.h.b16 %v1952
        %v2043 = vunpack.c.l.b16 %v1953
        %v2044 = vunpack.c.h.b16 %v1953
        %v2045 = vunpack.c.l.b16 %v1954
        %v2046 = vunpack.c.h.b16 %v1954
        %v2047 = vunpack.c.l.b16 %v1955
        %v2048 = vunpack.c.h.b16 %v1955
        %v2049 = vunpack.c.l.b16 %v1956
        %v2050 = vunpack.c.h.b16 %v1956
        %v2051 = vunpack.c.l.b16 %v1957
        %v2052 = vunpack.c.h.b16 %v1957
        %v2053 = vunpack.c.l.b16 %v1958
        %v2054 = vunpack.c.h.b16 %v1958
        %v2055 = vunpack.c.l.b16 %v1959
        %v2056 = vunpack.c.h.b16 %v1959
        %v2057 = vunpack.c.l.b16 %v1960
        %v2058 = vunpack.c.h.b16 %v1960
        %v2059 = vpack.c.b16 %v1997, %v1995
        %v2060 = vpack.c.b16 %v1998, %v1996
        %v2061 = vpack.c.b16 %v2001, %v1999
        %v2062 = vpack.c.b16 %v2002, %v2000
        %v2063 = vpack.c.b16 %v2005, %v2003
        %v2064 = vpack.c.b16 %v2006, %v2004
        %v2065 = vpack.c.b16 %v2009, %v2007
        %v2066 = vpack.c.b16 %v2010, %v2008
        %v2067 = vpack.c.b16 %v2013, %v2011
        %v2068 = vpack.c.b16 %v2014, %v2012
        %v2069 = vpack.c.b16 %v2017, %v2015
        %v2070 = vpack.c.b16 %v2018, %v2016
        %v2071 = vpack.c.b16 %v2021, %v2019
        %v2072 = vpack.c.b16 %v2022, %v2020
        %v2073 = vpack.c.b16 %v2025, %v2023
        %v2074 = vpack.c.b16 %v2026, %v2024
        %v2075 = vpack.c.b16 %v2029, %v2027
        %v2076 = vpack.c.b16 %v2030, %v2028
        %v2077 = vpack.c.b16 %v2033, %v2031
        %v2078 = vpack.c.b16 %v2034, %v2032
        %v2079 = vpack.c.b16 %v2037, %v2035
        %v2080 = vpack.c.b16 %v2038, %v2036
        %v2081 = vpack.c.b16 %v2041, %v2039
        %v2082 = vpack.c.b16 %v2042, %v2040
        %v2083 = vpack.c.b16 %v2045, %v2043
        %v2084 = vpack.c.b16 %v2046, %v2044
        %v2085 = vpack.c.b16 %v2049, %v2047
        %v2086 = vpack.c.b16 %v2050, %v2048
        %v2087 = vpack.c.b16 %v2053, %v2051
        %v2088 = vpack.c.b16 %v2054, %v2052
        %v2089 = vpack.c.b16 %v2057, %v2055
        %v2090 = vpack.c.b16 %v2058, %v2056
        %2123 = vmatpush.bf16.msra.mxu0 %v2073
        %2124 = vmatpush.bf16.msra.mxu0 %v2071
        %2125 = vmatpush.bf16.msra.mxu0 %v2069
        %2126 = vmatpush.bf16.msra.mxu0 %v2067
        %2127 = vmatpush.bf16.msra.mxu0 %v2065
        %2128 = vmatpush.bf16.msra.mxu0 %v2063
        %2129 = vmatpush.bf16.msra.mxu0 %v2061
        %2130 = vmatpush.bf16.msra.mxu0 %v2059
        %2131 = vmatmul.bf16.gmra.mxu0 %v1961
        %v2132 = vpop.f32.mrf.mxu0
        %v2133 = vadd.f32 0.0, %v2132
        %v2134 = vpop.f32.mrf.mxu0
        %v2135 = vadd.f32 0.0, %v2134
        %2136 = vdwg.mxu0
        %2137 = vmatpush.bf16.msra.mxu0 %v2089
        %2138 = vmatpush.bf16.msra.mxu0 %v2087
        %2139 = vmatpush.bf16.msra.mxu0 %v2085
        %2140 = vmatpush.bf16.msra.mxu0 %v2083
        %2141 = vmatpush.bf16.msra.mxu0 %v2081
        %2142 = vmatpush.bf16.msra.mxu0 %v2079
        %2143 = vmatpush.bf16.msra.mxu0 %v2077
        %2144 = vmatpush.bf16.msra.mxu0 %v2075
        %2145 = vmatmul.bf16.gmra.mxu0 %v1962
        %v2146 = vpop.f32.mrf.mxu0
        %v2147 = vadd.f32 %v2133, %v2146
        %v2148 = vpop.f32.mrf.mxu0
        %v2149 = vadd.f32 %v2135, %v2148
        %2150 = vdwg.mxu0
        %2151 = vmatpush.bf16.msra.mxu0 %v2074
        %2152 = vmatpush.bf16.msra.mxu0 %v2072
        %2153 = vmatpush.bf16.msra.mxu0 %v2070
        %2154 = vmatpush.bf16.msra.mxu0 %v2068
        %2155 = vmatpush.bf16.msra.mxu0 %v2066
        %2156 = vmatpush.bf16.msra.mxu0 %v2064
        %2157 = vmatpush.bf16.msra.mxu0 %v2062
        %2158 = vmatpush.bf16.msra.mxu0 %v2060
        %2159 = vmatmul.bf16.gmra.mxu0 %v1961
        %v2160 = vpop.f32.mrf.mxu0
        %v2161 = vadd.f32 0.0, %v2160
        %v2162 = vpop.f32.mrf.mxu0
        %v2163 = vadd.f32 0.0, %v2162
        %2164 = vdwg.mxu0
        %2165 = vmatpush.bf16.msra.mxu0 %v2090
        %2166 = vmatpush.bf16.msra.mxu0 %v2088
        %2167 = vmatpush.bf16.msra.mxu0 %v2086
        %2168 = vmatpush.bf16.msra.mxu0 %v2084
        %2169 = vmatpush.bf16.msra.mxu0 %v2082
        %2170 = vmatpush.bf16.msra.mxu0 %v2080
        %2171 = vmatpush.bf16.msra.mxu0 %v2078
        %2172 = vmatpush.bf16.msra.mxu0 %v2076
        %2173 = vmatmul.bf16.gmra.mxu0 %v1962
        %v2174 = vpop.f32.mrf.mxu0
        %v2175 = vadd.f32 %v2161, %v2174
        %v2176 = vpop.f32.mrf.mxu0
        %v2177 = vadd.f32 %v2163, %v2176
        %2178 = vdwg.mxu0
        %v2179 = vadd.f32 %v889, %v2147
        %v2180 = vadd.f32 %v890, %v2175
        %v2181 = vadd.f32 %v891, %v2149
        %v2182 = vadd.f32 %v892, %v2177
        %v2183 = vld [vmem:[%s853] sm:$0x3]
        %v2185 = vperm.slane %v2183, 0
        %v2186 = vperm.slane %v2183, 1
        %v2189 = vadd.f32 %v2179, %v2185
        %v2190 = vadd.f32 %v2180, %v2186
        %v2191 = vadd.f32 %v2181, %v2185
        %v2192 = vadd.f32 %v2182, %v2186
        %v2193 = vld [vmem:[%s857] sm:$0x3]
        %v2194 = vld [vmem:[%s861] sm:$0x3]
        %v2195 = vadd.f32 %v2189, %v2190
        %2196 = vadd.xlane.f32.xlu0 %v2195
        %v2197 = vpop.xlane.xlu0 %2196
        %v2198 = vadd.f32 %v2191, %v2192
        %2199 = vadd.xlane.f32.xlu0 %v2198
        %v2200 = vpop.xlane.xlu0 %2199
        %v2201 = vmul.f32 %v2197, %v908
        %v2202 = vmul.f32 %v2200, %v908
        %v2203 = vsub.f32 %v2189, %v2201
        %v2204 = vsub.f32 %v2190, %v2201
        %v2205 = vsub.f32 %v2191, %v2202
        %v2206 = vsub.f32 %v2192, %v2202
        %v2207 = vmul.f32 %v2203, %v2203
        %v2208 = vmul.f32 %v2204, %v2204
        %v2209 = vmul.f32 %v2205, %v2205
        %v2210 = vmul.f32 %v2206, %v2206
        %v2211 = vadd.f32 %v2207, %v2208
        %2212 = vadd.xlane.f32.xlu0 %v2211
        %v2213 = vpop.xlane.xlu0 %2212
        %v2214 = vadd.f32 %v2209, %v2210
        %2215 = vadd.xlane.f32.xlu0 %v2214
        %v2216 = vpop.xlane.xlu0 %2215
        %v2217 = vmul.f32 %v2213, %v908
        %v2218 = vmul.f32 %v2216, %v908
        %v2219 = vadd.f32 %v2217, 1e-05
        %v2220 = vadd.f32 %v2218, 1e-05
        %v2221 = vrsqrt.pop %v2219
        %v2222 = vmul.f32 %v2221, %v2219
        %v2223 = vmul.f32 %v2222, %v2221
        %v2224 = vmul.f32 0.5, %v2223
        %v2225 = vsub.f32 1.5, %v2224
        %v2226 = vmul.f32 %v2221, %v2225
        %vm2227 = vweird.f32 %v2219
        %vm2228 = vweird.f32 %v2221
        %vm2229 = vmor %vm2227, %vm2228
        %v2230 = vsel %vm2229, %v2221, %v2226
        %v2231 = vrsqrt.pop %v2220
        %v2232 = vmul.f32 %v2231, %v2220
        %v2233 = vmul.f32 %v2232, %v2231
        %v2234 = vmul.f32 0.5, %v2233
        %v2235 = vsub.f32 1.5, %v2234
        %v2236 = vmul.f32 %v2231, %v2235
        %vm2237 = vweird.f32 %v2220
        %vm2238 = vweird.f32 %v2231
        %vm2239 = vmor %vm2237, %vm2238
        %v2240 = vsel %vm2239, %v2231, %v2236
        %v2241 = vmul.f32 %v2203, %v2230
        %v2242 = vmul.f32 %v2204, %v2230
        %v2243 = vmul.f32 %v2205, %v2240
        %v2244 = vmul.f32 %v2206, %v2240
        %v2246 = vperm.slane %v2193, 0
        %v2247 = vperm.slane %v2193, 1
        %v2250 = vmul.f32 %v2241, %v2246
        %v2251 = vmul.f32 %v2242, %v2247
        %v2252 = vmul.f32 %v2243, %v2246
        %v2253 = vmul.f32 %v2244, %v2247
        %v2255 = vperm.slane %v2194, 0
        %v2256 = vperm.slane %v2194, 1
        %v2259 = vadd.f32 %v2250, %v2255
        %v2260 = vadd.f32 %v2251, %v2256
        %v2261 = vadd.f32 %v2252, %v2255
        %v2262 = vadd.f32 %v2253, %v2256
        %v2263 = vld [vmem:[%s730] sm:$0xff]
        %v2264 = vld [vmem:[%s730 + $0x8] sm:$0xff]
        %v2265 = vld [vmem:[%s730 + $0x10] sm:$0xff]
        %v2266 = vld [vmem:[%s730 + $0x18] sm:$0xff]
        %v2267 = vld [vmem:[%s730 + $0x20] sm:$0xff]
        %v2268 = vld [vmem:[%s730 + $0x28] sm:$0xff]
        %v2269 = vld [vmem:[%s730 + $0x30] sm:$0xff]
        %v2270 = vld [vmem:[%s730 + $0x38] sm:$0xff]
        %v2271 = vld [vmem:[%s730 + $0x40] sm:$0xff]
        %v2272 = vld [vmem:[%s730 + $0x48] sm:$0xff]
        %v2273 = vld [vmem:[%s730 + $0x50] sm:$0xff]
        %v2274 = vld [vmem:[%s730 + $0x58] sm:$0xff]
        %v2275 = vld [vmem:[%s730 + $0x60] sm:$0xff]
        %v2276 = vld [vmem:[%s730 + $0x68] sm:$0xff]
        %v2277 = vld [vmem:[%s730 + $0x70] sm:$0xff]
        %v2278 = vld [vmem:[%s730 + $0x78] sm:$0xff]
        %v2279 = vld [vmem:[%s730 + $0x80] sm:$0xff]
        %v2280 = vld [vmem:[%s730 + $0x88] sm:$0xff]
        %v2281 = vld [vmem:[%s730 + $0x90] sm:$0xff]
        %v2282 = vld [vmem:[%s730 + $0x98] sm:$0xff]
        %v2283 = vld [vmem:[%s730 + $0xa0] sm:$0xff]
        %v2284 = vld [vmem:[%s730 + $0xa8] sm:$0xff]
        %v2285 = vld [vmem:[%s730 + $0xb0] sm:$0xff]
        %v2286 = vld [vmem:[%s730 + $0xb8] sm:$0xff]
        %v2287 = vld [vmem:[%s730 + $0xc0] sm:$0xff]
        %v2288 = vld [vmem:[%s730 + $0xc8] sm:$0xff]
        %v2289 = vld [vmem:[%s730 + $0xd0] sm:$0xff]
        %v2290 = vld [vmem:[%s730 + $0xd8] sm:$0xff]
        %v2291 = vld [vmem:[%s730 + $0xe0] sm:$0xff]
        %v2292 = vld [vmem:[%s730 + $0xe8] sm:$0xff]
        %v2293 = vld [vmem:[%s730 + $0xf0] sm:$0xff]
        %v2294 = vld [vmem:[%s730 + $0xf8] sm:$0xff]
        %v2295 = vld [vmem:[%s730 + $0x100] sm:$0xff]
        %v2296 = vld [vmem:[%s730 + $0x108] sm:$0xff]
        %v2297 = vld [vmem:[%s730 + $0x110] sm:$0xff]
        %v2298 = vld [vmem:[%s730 + $0x118] sm:$0xff]
        %v2299 = vld [vmem:[%s730 + $0x120] sm:$0xff]
        %v2300 = vld [vmem:[%s730 + $0x128] sm:$0xff]
        %v2301 = vld [vmem:[%s730 + $0x130] sm:$0xff]
        %v2302 = vld [vmem:[%s730 + $0x138] sm:$0xff]
        %v2303 = vld [vmem:[%s730 + $0x140] sm:$0xff]
        %v2304 = vld [vmem:[%s730 + $0x148] sm:$0xff]
        %v2305 = vld [vmem:[%s730 + $0x150] sm:$0xff]
        %v2306 = vld [vmem:[%s730 + $0x158] sm:$0xff]
        %v2307 = vld [vmem:[%s730 + $0x160] sm:$0xff]
        %v2308 = vld [vmem:[%s730 + $0x168] sm:$0xff]
        %v2309 = vld [vmem:[%s730 + $0x170] sm:$0xff]
        %v2310 = vld [vmem:[%s730 + $0x178] sm:$0xff]
        %v2311 = vld [vmem:[%s730 + $0x180] sm:$0xff]
        %v2312 = vld [vmem:[%s730 + $0x188] sm:$0xff]
        %v2313 = vld [vmem:[%s730 + $0x190] sm:$0xff]
        %v2314 = vld [vmem:[%s730 + $0x198] sm:$0xff]
        %v2315 = vld [vmem:[%s730 + $0x1a0] sm:$0xff]
        %v2316 = vld [vmem:[%s730 + $0x1a8] sm:$0xff]
        %v2317 = vld [vmem:[%s730 + $0x1b0] sm:$0xff]
        %v2318 = vld [vmem:[%s730 + $0x1b8] sm:$0xff]
        %v2319 = vld [vmem:[%s730 + $0x1c0] sm:$0xff]
        %v2320 = vld [vmem:[%s730 + $0x1c8] sm:$0xff]
        %v2321 = vld [vmem:[%s730 + $0x1d0] sm:$0xff]
        %v2322 = vld [vmem:[%s730 + $0x1d8] sm:$0xff]
        %v2323 = vld [vmem:[%s730 + $0x1e0] sm:$0xff]
        %v2324 = vld [vmem:[%s730 + $0x1e8] sm:$0xff]
        %v2325 = vld [vmem:[%s730 + $0x1f0] sm:$0xff]
        %v2326 = vld [vmem:[%s730 + $0x1f8] sm:$0xff]
        %v2327 = vld [vmem:[%s730 + $0x200] sm:$0xff]
        %v2328 = vld [vmem:[%s730 + $0x208] sm:$0xff]
        %v2329 = vld [vmem:[%s730 + $0x210] sm:$0xff]
        %v2330 = vld [vmem:[%s730 + $0x218] sm:$0xff]
        %v2331 = vld [vmem:[%s730 + $0x220] sm:$0xff]
        %v2332 = vld [vmem:[%s730 + $0x228] sm:$0xff]
        %v2333 = vld [vmem:[%s730 + $0x230] sm:$0xff]
        %v2334 = vld [vmem:[%s730 + $0x238] sm:$0xff]
        %v2335 = vld [vmem:[%s730 + $0x240] sm:$0xff]
        %v2336 = vld [vmem:[%s730 + $0x248] sm:$0xff]
        %v2337 = vld [vmem:[%s730 + $0x250] sm:$0xff]
        %v2338 = vld [vmem:[%s730 + $0x258] sm:$0xff]
        %v2339 = vld [vmem:[%s730 + $0x260] sm:$0xff]
        %v2340 = vld [vmem:[%s730 + $0x268] sm:$0xff]
        %v2341 = vld [vmem:[%s730 + $0x270] sm:$0xff]
        %v2342 = vld [vmem:[%s730 + $0x278] sm:$0xff]
        %v2343 = vld [vmem:[%s730 + $0x280] sm:$0xff]
        %v2344 = vld [vmem:[%s730 + $0x288] sm:$0xff]
        %v2345 = vld [vmem:[%s730 + $0x290] sm:$0xff]
        %v2346 = vld [vmem:[%s730 + $0x298] sm:$0xff]
        %v2347 = vld [vmem:[%s730 + $0x2a0] sm:$0xff]
        %v2348 = vld [vmem:[%s730 + $0x2a8] sm:$0xff]
        %v2349 = vld [vmem:[%s730 + $0x2b0] sm:$0xff]
        %v2350 = vld [vmem:[%s730 + $0x2b8] sm:$0xff]
        %v2351 = vld [vmem:[%s730 + $0x2c0] sm:$0xff]
        %v2352 = vld [vmem:[%s730 + $0x2c8] sm:$0xff]
        %v2353 = vld [vmem:[%s730 + $0x2d0] sm:$0xff]
        %v2354 = vld [vmem:[%s730 + $0x2d8] sm:$0xff]
        %v2355 = vld [vmem:[%s730 + $0x2e0] sm:$0xff]
        %v2356 = vld [vmem:[%s730 + $0x2e8] sm:$0xff]
        %v2357 = vld [vmem:[%s730 + $0x2f0] sm:$0xff]
        %v2358 = vld [vmem:[%s730 + $0x2f8] sm:$0xff]
        %v2359 = vld [vmem:[%s730 + $0x300] sm:$0xff]
        %v2360 = vld [vmem:[%s730 + $0x308] sm:$0xff]
        %v2361 = vld [vmem:[%s730 + $0x310] sm:$0xff]
        %v2362 = vld [vmem:[%s730 + $0x318] sm:$0xff]
        %v2363 = vld [vmem:[%s730 + $0x320] sm:$0xff]
        %v2364 = vld [vmem:[%s730 + $0x328] sm:$0xff]
        %v2365 = vld [vmem:[%s730 + $0x330] sm:$0xff]
        %v2366 = vld [vmem:[%s730 + $0x338] sm:$0xff]
        %v2367 = vld [vmem:[%s730 + $0x340] sm:$0xff]
        %v2368 = vld [vmem:[%s730 + $0x348] sm:$0xff]
        %v2369 = vld [vmem:[%s730 + $0x350] sm:$0xff]
        %v2370 = vld [vmem:[%s730 + $0x358] sm:$0xff]
        %v2371 = vld [vmem:[%s730 + $0x360] sm:$0xff]
        %v2372 = vld [vmem:[%s730 + $0x368] sm:$0xff]
        %v2373 = vld [vmem:[%s730 + $0x370] sm:$0xff]
        %v2374 = vld [vmem:[%s730 + $0x378] sm:$0xff]
        %v2375 = vld [vmem:[%s730 + $0x380] sm:$0xff]
        %v2376 = vld [vmem:[%s730 + $0x388] sm:$0xff]
        %v2377 = vld [vmem:[%s730 + $0x390] sm:$0xff]
        %v2378 = vld [vmem:[%s730 + $0x398] sm:$0xff]
        %v2379 = vld [vmem:[%s730 + $0x3a0] sm:$0xff]
        %v2380 = vld [vmem:[%s730 + $0x3a8] sm:$0xff]
        %v2381 = vld [vmem:[%s730 + $0x3b0] sm:$0xff]
        %v2382 = vld [vmem:[%s730 + $0x3b8] sm:$0xff]
        %v2383 = vld [vmem:[%s730 + $0x3c0] sm:$0xff]
        %v2384 = vld [vmem:[%s730 + $0x3c8] sm:$0xff]
        %v2385 = vld [vmem:[%s730 + $0x3d0] sm:$0xff]
        %v2386 = vld [vmem:[%s730 + $0x3d8] sm:$0xff]
        %v2387 = vld [vmem:[%s730 + $0x3e0] sm:$0xff]
        %v2388 = vld [vmem:[%s730 + $0x3e8] sm:$0xff]
        %v2389 = vld [vmem:[%s730 + $0x3f0] sm:$0xff]
        %v2390 = vld [vmem:[%s730 + $0x3f8] sm:$0xff]
        %v2391 = vpack.c.bf16 %v2261, %v2259
        %v2392 = vpack.c.bf16 %v2262, %v2260
        %v2393 = vld [vmem:[%s865] sm:$0xff]
        %v2395 = vperm.slane %v2393, 0
        %v2396 = vperm.slane %v2393, 1
        %v2397 = vperm.slane %v2393, 2
        %v2398 = vperm.slane %v2393, 3
        %v2399 = vperm.slane %v2393, 4
        %v2400 = vperm.slane %v2393, 5
        %v2401 = vperm.slane %v2393, 6
        %v2402 = vperm.slane %v2393, 7
        %v2539 = vunpack.c.l.b16 %v2263
        %v2540 = vunpack.c.h.b16 %v2263
        %v2541 = vunpack.c.l.b16 %v2264
        %v2542 = vunpack.c.h.b16 %v2264
        %v2543 = vunpack.c.l.b16 %v2265
        %v2544 = vunpack.c.h.b16 %v2265
        %v2545 = vunpack.c.l.b16 %v2266
        %v2546 = vunpack.c.h.b16 %v2266
        %v2547 = vunpack.c.l.b16 %v2267
        %v2548 = vunpack.c.h.b16 %v2267
        %v2549 = vunpack.c.l.b16 %v2268
        %v2550 = vunpack.c.h.b16 %v2268
        %v2551 = vunpack.c.l.b16 %v2269
        %v2552 = vunpack.c.h.b16 %v2269
        %v2553 = vunpack.c.l.b16 %v2270
        %v2554 = vunpack.c.h.b16 %v2270
        %v2555 = vunpack.c.l.b16 %v2271
        %v2556 = vunpack.c.h.b16 %v2271
        %v2557 = vunpack.c.l.b16 %v2272
        %v2558 = vunpack.c.h.b16 %v2272
        %v2559 = vunpack.c.l.b16 %v2273
        %v2560 = vunpack.c.h.b16 %v2273
        %v2561 = vunpack.c.l.b16 %v2274
        %v2562 = vunpack.c.h.b16 %v2274
        %v2563 = vunpack.c.l.b16 %v2275
        %v2564 = vunpack.c.h.b16 %v2275
        %v2565 = vunpack.c.l.b16 %v2276
        %v2566 = vunpack.c.h.b16 %v2276
        %v2567 = vunpack.c.l.b16 %v2277
        %v2568 = vunpack.c.h.b16 %v2277
        %v2569 = vunpack.c.l.b16 %v2278
        %v2570 = vunpack.c.h.b16 %v2278
        %v2571 = vunpack.c.l.b16 %v2279
        %v2572 = vunpack.c.h.b16 %v2279
        %v2573 = vunpack.c.l.b16 %v2280
        %v2574 = vunpack.c.h.b16 %v2280
        %v2575 = vunpack.c.l.b16 %v2281
        %v2576 = vunpack.c.h.b16 %v2281
        %v2577 = vunpack.c.l.b16 %v2282
        %v2578 = vunpack.c.h.b16 %v2282
        %v2579 = vunpack.c.l.b16 %v2283
        %v2580 = vunpack.c.h.b16 %v2283
        %v2581 = vunpack.c.l.b16 %v2284
        %v2582 = vunpack.c.h.b16 %v2284
        %v2583 = vunpack.c.l.b16 %v2285
        %v2584 = vunpack.c.h.b16 %v2285
        %v2585 = vunpack.c.l.b16 %v2286
        %v2586 = vunpack.c.h.b16 %v2286
        %v2587 = vunpack.c.l.b16 %v2287
        %v2588 = vunpack.c.h.b16 %v2287
        %v2589 = vunpack.c.l.b16 %v2288
        %v2590 = vunpack.c.h.b16 %v2288
        %v2591 = vunpack.c.l.b16 %v2289
        %v2592 = vunpack.c.h.b16 %v2289
        %v2593 = vunpack.c.l.b16 %v2290
        %v2594 = vunpack.c.h.b16 %v2290
        %v2595 = vunpack.c.l.b16 %v2291
        %v2596 = vunpack.c.h.b16 %v2291
        %v2597 = vunpack.c.l.b16 %v2292
        %v2598 = vunpack.c.h.b16 %v2292
        %v2599 = vunpack.c.l.b16 %v2293
        %v2600 = vunpack.c.h.b16 %v2293
        %v2601 = vunpack.c.l.b16 %v2294
        %v2602 = vunpack.c.h.b16 %v2294
        %v2603 = vunpack.c.l.b16 %v2295
        %v2604 = vunpack.c.h.b16 %v2295
        %v2605 = vunpack.c.l.b16 %v2296
        %v2606 = vunpack.c.h.b16 %v2296
        %v2607 = vunpack.c.l.b16 %v2297
        %v2608 = vunpack.c.h.b16 %v2297
        %v2609 = vunpack.c.l.b16 %v2298
        %v2610 = vunpack.c.h.b16 %v2298
        %v2611 = vunpack.c.l.b16 %v2299
        %v2612 = vunpack.c.h.b16 %v2299
        %v2613 = vunpack.c.l.b16 %v2300
        %v2614 = vunpack.c.h.b16 %v2300
        %v2615 = vunpack.c.l.b16 %v2301
        %v2616 = vunpack.c.h.b16 %v2301
        %v2617 = vunpack.c.l.b16 %v2302
        %v2618 = vunpack.c.h.b16 %v2302
        %v2619 = vunpack.c.l.b16 %v2303
        %v2620 = vunpack.c.h.b16 %v2303
        %v2621 = vunpack.c.l.b16 %v2304
        %v2622 = vunpack.c.h.b16 %v2304
        %v2623 = vunpack.c.l.b16 %v2305
        %v2624 = vunpack.c.h.b16 %v2305
        %v2625 = vunpack.c.l.b16 %v2306
        %v2626 = vunpack.c.h.b16 %v2306
        %v2627 = vunpack.c.l.b16 %v2307
        %v2628 = vunpack.c.h.b16 %v2307
        %v2629 = vunpack.c.l.b16 %v2308
        %v2630 = vunpack.c.h.b16 %v2308
        %v2631 = vunpack.c.l.b16 %v2309
        %v2632 = vunpack.c.h.b16 %v2309
        %v2633 = vunpack.c.l.b16 %v2310
        %v2634 = vunpack.c.h.b16 %v2310
        %v2635 = vunpack.c.l.b16 %v2311
        %v2636 = vunpack.c.h.b16 %v2311
        %v2637 = vunpack.c.l.b16 %v2312
        %v2638 = vunpack.c.h.b16 %v2312
        %v2639 = vunpack.c.l.b16 %v2313
        %v2640 = vunpack.c.h.b16 %v2313
        %v2641 = vunpack.c.l.b16 %v2314
        %v2642 = vunpack.c.h.b16 %v2314
        %v2643 = vunpack.c.l.b16 %v2315
        %v2644 = vunpack.c.h.b16 %v2315
        %v2645 = vunpack.c.l.b16 %v2316
        %v2646 = vunpack.c.h.b16 %v2316
        %v2647 = vunpack.c.l.b16 %v2317
        %v2648 = vunpack.c.h.b16 %v2317
        %v2649 = vunpack.c.l.b16 %v2318
        %v2650 = vunpack.c.h.b16 %v2318
        %v2651 = vunpack.c.l.b16 %v2319
        %v2652 = vunpack.c.h.b16 %v2319
        %v2653 = vunpack.c.l.b16 %v2320
        %v2654 = vunpack.c.h.b16 %v2320
        %v2655 = vunpack.c.l.b16 %v2321
        %v2656 = vunpack.c.h.b16 %v2321
        %v2657 = vunpack.c.l.b16 %v2322
        %v2658 = vunpack.c.h.b16 %v2322
        %v2659 = vunpack.c.l.b16 %v2323
        %v2660 = vunpack.c.h.b16 %v2323
        %v2661 = vunpack.c.l.b16 %v2324
        %v2662 = vunpack.c.h.b16 %v2324
        %v2663 = vunpack.c.l.b16 %v2325
        %v2664 = vunpack.c.h.b16 %v2325
        %v2665 = vunpack.c.l.b16 %v2326
        %v2666 = vunpack.c.h.b16 %v2326
        %v2667 = vunpack.c.l.b16 %v2327
        %v2668 = vunpack.c.h.b16 %v2327
        %v2669 = vunpack.c.l.b16 %v2328
        %v2670 = vunpack.c.h.b16 %v2328
        %v2671 = vunpack.c.l.b16 %v2329
        %v2672 = vunpack.c.h.b16 %v2329
        %v2673 = vunpack.c.l.b16 %v2330
        %v2674 = vunpack.c.h.b16 %v2330
        %v2675 = vunpack.c.l.b16 %v2331
        %v2676 = vunpack.c.h.b16 %v2331
        %v2677 = vunpack.c.l.b16 %v2332
        %v2678 = vunpack.c.h.b16 %v2332
        %v2679 = vunpack.c.l.b16 %v2333
        %v2680 = vunpack.c.h.b16 %v2333
        %v2681 = vunpack.c.l.b16 %v2334
        %v2682 = vunpack.c.h.b16 %v2334
        %v2683 = vunpack.c.l.b16 %v2335
        %v2684 = vunpack.c.h.b16 %v2335
        %v2685 = vunpack.c.l.b16 %v2336
        %v2686 = vunpack.c.h.b16 %v2336
        %v2687 = vunpack.c.l.b16 %v2337
        %v2688 = vunpack.c.h.b16 %v2337
        %v2689 = vunpack.c.l.b16 %v2338
        %v2690 = vunpack.c.h.b16 %v2338
        %v2691 = vunpack.c.l.b16 %v2339
        %v2692 = vunpack.c.h.b16 %v2339
        %v2693 = vunpack.c.l.b16 %v2340
        %v2694 = vunpack.c.h.b16 %v2340
        %v2695 = vunpack.c.l.b16 %v2341
        %v2696 = vunpack.c.h.b16 %v2341
        %v2697 = vunpack.c.l.b16 %v2342
        %v2698 = vunpack.c.h.b16 %v2342
        %v2699 = vunpack.c.l.b16 %v2343
        %v2700 = vunpack.c.h.b16 %v2343
        %v2701 = vunpack.c.l.b16 %v2344
        %v2702 = vunpack.c.h.b16 %v2344
        %v2703 = vunpack.c.l.b16 %v2345
        %v2704 = vunpack.c.h.b16 %v2345
        %v2705 = vunpack.c.l.b16 %v2346
        %v2706 = vunpack.c.h.b16 %v2346
        %v2707 = vunpack.c.l.b16 %v2347
        %v2708 = vunpack.c.h.b16 %v2347
        %v2709 = vunpack.c.l.b16 %v2348
        %v2710 = vunpack.c.h.b16 %v2348
        %v2711 = vunpack.c.l.b16 %v2349
        %v2712 = vunpack.c.h.b16 %v2349
        %v2713 = vunpack.c.l.b16 %v2350
        %v2714 = vunpack.c.h.b16 %v2350
        %v2715 = vunpack.c.l.b16 %v2351
        %v2716 = vunpack.c.h.b16 %v2351
        %v2717 = vunpack.c.l.b16 %v2352
        %v2718 = vunpack.c.h.b16 %v2352
        %v2719 = vunpack.c.l.b16 %v2353
        %v2720 = vunpack.c.h.b16 %v2353
        %v2721 = vunpack.c.l.b16 %v2354
        %v2722 = vunpack.c.h.b16 %v2354
        %v2723 = vunpack.c.l.b16 %v2355
        %v2724 = vunpack.c.h.b16 %v2355
        %v2725 = vunpack.c.l.b16 %v2356
        %v2726 = vunpack.c.h.b16 %v2356
        %v2727 = vunpack.c.l.b16 %v2357
        %v2728 = vunpack.c.h.b16 %v2357
        %v2729 = vunpack.c.l.b16 %v2358
        %v2730 = vunpack.c.h.b16 %v2358
        %v2731 = vunpack.c.l.b16 %v2359
        %v2732 = vunpack.c.h.b16 %v2359
        %v2733 = vunpack.c.l.b16 %v2360
        %v2734 = vunpack.c.h.b16 %v2360
        %v2735 = vunpack.c.l.b16 %v2361
        %v2736 = vunpack.c.h.b16 %v2361
        %v2737 = vunpack.c.l.b16 %v2362
        %v2738 = vunpack.c.h.b16 %v2362
        %v2739 = vunpack.c.l.b16 %v2363
        %v2740 = vunpack.c.h.b16 %v2363
        %v2741 = vunpack.c.l.b16 %v2364
        %v2742 = vunpack.c.h.b16 %v2364
        %v2743 = vunpack.c.l.b16 %v2365
        %v2744 = vunpack.c.h.b16 %v2365
        %v2745 = vunpack.c.l.b16 %v2366
        %v2746 = vunpack.c.h.b16 %v2366
        %v2747 = vunpack.c.l.b16 %v2367
        %v2748 = vunpack.c.h.b16 %v2367
        %v2749 = vunpack.c.l.b16 %v2368
        %v2750 = vunpack.c.h.b16 %v2368
        %v2751 = vunpack.c.l.b16 %v2369
        %v2752 = vunpack.c.h.b16 %v2369
        %v2753 = vunpack.c.l.b16 %v2370
        %v2754 = vunpack.c.h.b16 %v2370
        %v2755 = vunpack.c.l.b16 %v2371
        %v2756 = vunpack.c.h.b16 %v2371
        %v2757 = vunpack.c.l.b16 %v2372
        %v2758 = vunpack.c.h.b16 %v2372
        %v2759 = vunpack.c.l.b16 %v2373
        %v2760 = vunpack.c.h.b16 %v2373
        %v2761 = vunpack.c.l.b16 %v2374
        %v2762 = vunpack.c.h.b16 %v2374
        %v2763 = vunpack.c.l.b16 %v2375
        %v2764 = vunpack.c.h.b16 %v2375
        %v2765 = vunpack.c.l.b16 %v2376
        %v2766 = vunpack.c.h.b16 %v2376
        %v2767 = vunpack.c.l.b16 %v2377
        %v2768 = vunpack.c.h.b16 %v2377
        %v2769 = vunpack.c.l.b16 %v2378
        %v2770 = vunpack.c.h.b16 %v2378
        %v2771 = vunpack.c.l.b16 %v2379
        %v2772 = vunpack.c.h.b16 %v2379
        %v2773 = vunpack.c.l.b16 %v2380
        %v2774 = vunpack.c.h.b16 %v2380
        %v2775 = vunpack.c.l.b16 %v2381
        %v2776 = vunpack.c.h.b16 %v2381
        %v2777 = vunpack.c.l.b16 %v2382
        %v2778 = vunpack.c.h.b16 %v2382
        %v2779 = vunpack.c.l.b16 %v2383
        %v2780 = vunpack.c.h.b16 %v2383
        %v2781 = vunpack.c.l.b16 %v2384
        %v2782 = vunpack.c.h.b16 %v2384
        %v2783 = vunpack.c.l.b16 %v2385
        %v2784 = vunpack.c.h.b16 %v2385
        %v2785 = vunpack.c.l.b16 %v2386
        %v2786 = vunpack.c.h.b16 %v2386
        %v2787 = vunpack.c.l.b16 %v2387
        %v2788 = vunpack.c.h.b16 %v2387
        %v2789 = vunpack.c.l.b16 %v2388
        %v2790 = vunpack.c.h.b16 %v2388
        %v2791 = vunpack.c.l.b16 %v2389
        %v2792 = vunpack.c.h.b16 %v2389
        %v2793 = vunpack.c.l.b16 %v2390
        %v2794 = vunpack.c.h.b16 %v2390
        %v2795 = vpack.c.b16 %v2547, %v2539
        %v2796 = vpack.c.b16 %v2548, %v2540
        %v2797 = vpack.c.b16 %v2549, %v2541
        %v2798 = vpack.c.b16 %v2550, %v2542
        %v2799 = vpack.c.b16 %v2551, %v2543
        %v2800 = vpack.c.b16 %v2552, %v2544
        %v2801 = vpack.c.b16 %v2553, %v2545
        %v2802 = vpack.c.b16 %v2554, %v2546
        %v2803 = vpack.c.b16 %v2563, %v2555
        %v2804 = vpack.c.b16 %v2564, %v2556
        %v2805 = vpack.c.b16 %v2565, %v2557
        %v2806 = vpack.c.b16 %v2566, %v2558
        %v2807 = vpack.c.b16 %v2567, %v2559
        %v2808 = vpack.c.b16 %v2568, %v2560
        %v2809 = vpack.c.b16 %v2569, %v2561
        %v2810 = vpack.c.b16 %v2570, %v2562
        %v2811 = vpack.c.b16 %v2579, %v2571
        %v2812 = vpack.c.b16 %v2580, %v2572
        %v2813 = vpack.c.b16 %v2581, %v2573
        %v2814 = vpack.c.b16 %v2582, %v2574
        %v2815 = vpack.c.b16 %v2583, %v2575
        %v2816 = vpack.c.b16 %v2584, %v2576
        %v2817 = vpack.c.b16 %v2585, %v2577
        %v2818 = vpack.c.b16 %v2586, %v2578
        %v2819 = vpack.c.b16 %v2595, %v2587
        %v2820 = vpack.c.b16 %v2596, %v2588
        %v2821 = vpack.c.b16 %v2597, %v2589
        %v2822 = vpack.c.b16 %v2598, %v2590
        %v2823 = vpack.c.b16 %v2599, %v2591
        %v2824 = vpack.c.b16 %v2600, %v2592
        %v2825 = vpack.c.b16 %v2601, %v2593
        %v2826 = vpack.c.b16 %v2602, %v2594
        %v2827 = vpack.c.b16 %v2611, %v2603
        %v2828 = vpack.c.b16 %v2612, %v2604
        %v2829 = vpack.c.b16 %v2613, %v2605
        %v2830 = vpack.c.b16 %v2614, %v2606
        %v2831 = vpack.c.b16 %v2615, %v2607
        %v2832 = vpack.c.b16 %v2616, %v2608
        %v2833 = vpack.c.b16 %v2617, %v2609
        %v2834 = vpack.c.b16 %v2618, %v2610
        %v2835 = vpack.c.b16 %v2627, %v2619
        %v2836 = vpack.c.b16 %v2628, %v2620
        %v2837 = vpack.c.b16 %v2629, %v2621
        %v2838 = vpack.c.b16 %v2630, %v2622
        %v2839 = vpack.c.b16 %v2631, %v2623
        %v2840 = vpack.c.b16 %v2632, %v2624
        %v2841 = vpack.c.b16 %v2633, %v2625
        %v2842 = vpack.c.b16 %v2634, %v2626
        %v2843 = vpack.c.b16 %v2643, %v2635
        %v2844 = vpack.c.b16 %v2644, %v2636
        %v2845 = vpack.c.b16 %v2645, %v2637
        %v2846 = vpack.c.b16 %v2646, %v2638
        %v2847 = vpack.c.b16 %v2647, %v2639
        %v2848 = vpack.c.b16 %v2648, %v2640
        %v2849 = vpack.c.b16 %v2649, %v2641
        %v2850 = vpack.c.b16 %v2650, %v2642
        %v2851 = vpack.c.b16 %v2659, %v2651
        %v2852 = vpack.c.b16 %v2660, %v2652
        %v2853 = vpack.c.b16 %v2661, %v2653
        %v2854 = vpack.c.b16 %v2662, %v2654
        %v2855 = vpack.c.b16 %v2663, %v2655
        %v2856 = vpack.c.b16 %v2664, %v2656
        %v2857 = vpack.c.b16 %v2665, %v2657
        %v2858 = vpack.c.b16 %v2666, %v2658
        %v2859 = vpack.c.b16 %v2675, %v2667
        %v2860 = vpack.c.b16 %v2676, %v2668
        %v2861 = vpack.c.b16 %v2677, %v2669
        %v2862 = vpack.c.b16 %v2678, %v2670
        %v2863 = vpack.c.b16 %v2679, %v2671
        %v2864 = vpack.c.b16 %v2680, %v2672
        %v2865 = vpack.c.b16 %v2681, %v2673
        %v2866 = vpack.c.b16 %v2682, %v2674
        %v2867 = vpack.c.b16 %v2691, %v2683
        %v2868 = vpack.c.b16 %v2692, %v2684
        %v2869 = vpack.c.b16 %v2693, %v2685
        %v2870 = vpack.c.b16 %v2694, %v2686
        %v2871 = vpack.c.b16 %v2695, %v2687
        %v2872 = vpack.c.b16 %v2696, %v2688
        %v2873 = vpack.c.b16 %v2697, %v2689
        %v2874 = vpack.c.b16 %v2698, %v2690
        %v2875 = vpack.c.b16 %v2707, %v2699
        %v2876 = vpack.c.b16 %v2708, %v2700
        %v2877 = vpack.c.b16 %v2709, %v2701
        %v2878 = vpack.c.b16 %v2710, %v2702
        %v2879 = vpack.c.b16 %v2711, %v2703
        %v2880 = vpack.c.b16 %v2712, %v2704
        %v2881 = vpack.c.b16 %v2713, %v2705
        %v2882 = vpack.c.b16 %v2714, %v2706
        %v2883 = vpack.c.b16 %v2723, %v2715
        %v2884 = vpack.c.b16 %v2724, %v2716
        %v2885 = vpack.c.b16 %v2725, %v2717
        %v2886 = vpack.c.b16 %v2726, %v2718
        %v2887 = vpack.c.b16 %v2727, %v2719
        %v2888 = vpack.c.b16 %v2728, %v2720
        %v2889 = vpack.c.b16 %v2729, %v2721
        %v2890 = vpack.c.b16 %v2730, %v2722
        %v2891 = vpack.c.b16 %v2739, %v2731
        %v2892 = vpack.c.b16 %v2740, %v2732
        %v2893 = vpack.c.b16 %v2741, %v2733
        %v2894 = vpack.c.b16 %v2742, %v2734
        %v2895 = vpack.c.b16 %v2743, %v2735
        %v2896 = vpack.c.b16 %v2744, %v2736
        %v2897 = vpack.c.b16 %v2745, %v2737
        %v2898 = vpack.c.b16 %v2746, %v2738
        %v2899 = vpack.c.b16 %v2755, %v2747
        %v2900 = vpack.c.b16 %v2756, %v2748
        %v2901 = vpack.c.b16 %v2757, %v2749
        %v2902 = vpack.c.b16 %v2758, %v2750
        %v2903 = vpack.c.b16 %v2759, %v2751
        %v2904 = vpack.c.b16 %v2760, %v2752
        %v2905 = vpack.c.b16 %v2761, %v2753
        %v2906 = vpack.c.b16 %v2762, %v2754
        %v2907 = vpack.c.b16 %v2771, %v2763
        %v2908 = vpack.c.b16 %v2772, %v2764
        %v2909 = vpack.c.b16 %v2773, %v2765
        %v2910 = vpack.c.b16 %v2774, %v2766
        %v2911 = vpack.c.b16 %v2775, %v2767
        %v2912 = vpack.c.b16 %v2776, %v2768
        %v2913 = vpack.c.b16 %v2777, %v2769
        %v2914 = vpack.c.b16 %v2778, %v2770
        %v2915 = vpack.c.b16 %v2787, %v2779
        %v2916 = vpack.c.b16 %v2788, %v2780
        %v2917 = vpack.c.b16 %v2789, %v2781
        %v2918 = vpack.c.b16 %v2790, %v2782
        %v2919 = vpack.c.b16 %v2791, %v2783
        %v2920 = vpack.c.b16 %v2792, %v2784
        %v2921 = vpack.c.b16 %v2793, %v2785
        %v2922 = vpack.c.b16 %v2794, %v2786
        %3051 = vmatpush.bf16.msra.mxu0 %v2851
        %3052 = vmatpush.bf16.msra.mxu0 %v2843
        %3053 = vmatpush.bf16.msra.mxu0 %v2835
        %3054 = vmatpush.bf16.msra.mxu0 %v2827
        %3055 = vmatpush.bf16.msra.mxu0 %v2819
        %3056 = vmatpush.bf16.msra.mxu0 %v2811
        %3057 = vmatpush.bf16.msra.mxu0 %v2803
        %3058 = vmatpush.bf16.msra.mxu0 %v2795
        %3059 = vmatmul.bf16.gmra.mxu0 %v2391
        %v3060 = vpop.f32.mrf.mxu0
        %v3061 = vadd.f32 %v2395, %v3060
        %v3062 = vpop.f32.mrf.mxu0
        %v3063 = vadd.f32 %v2395, %v3062
        %3064 = vdwg.mxu0
        %3065 = vmatpush.bf16.msra.mxu0 %v2915
        %3066 = vmatpush.bf16.msra.mxu0 %v2907
        %3067 = vmatpush.bf16.msra.mxu0 %v2899
        %3068 = vmatpush.bf16.msra.mxu0 %v2891
        %3069 = vmatpush.bf16.msra.mxu0 %v2883
        %3070 = vmatpush.bf16.msra.mxu0 %v2875
        %3071 = vmatpush.bf16.msra.mxu0 %v2867
        %3072 = vmatpush.bf16.msra.mxu0 %v2859
        %3073 = vmatmul.bf16.gmra.mxu0 %v2392
        %v3074 = vpop.f32.mrf.mxu0
        %v3075 = vadd.f32 %v3061, %v3074
        %v3076 = vpop.f32.mrf.mxu0
        %v3077 = vadd.f32 %v3063, %v3076
        %3078 = vdwg.mxu0
        %3079 = vmatpush.bf16.msra.mxu0 %v2852
        %3080 = vmatpush.bf16.msra.mxu0 %v2844
        %3081 = vmatpush.bf16.msra.mxu0 %v2836
        %3082 = vmatpush.bf16.msra.mxu0 %v2828
        %3083 = vmatpush.bf16.msra.mxu0 %v2820
        %3084 = vmatpush.bf16.msra.mxu0 %v2812
        %3085 = vmatpush.bf16.msra.mxu0 %v2804
        %3086 = vmatpush.bf16.msra.mxu0 %v2796
        %3087 = vmatmul.bf16.gmra.mxu0 %v2391
        %v3088 = vpop.f32.mrf.mxu0
        %v3089 = vadd.f32 %v2396, %v3088
        %v3090 = vpop.f32.mrf.mxu0
        %v3091 = vadd.f32 %v2396, %v3090
        %3092 = vdwg.mxu0
        %3093 = vmatpush.bf16.msra.mxu0 %v2916
        %3094 = vmatpush.bf16.msra.mxu0 %v2908
        %3095 = vmatpush.bf16.msra.mxu0 %v2900
        %3096 = vmatpush.bf16.msra.mxu0 %v2892
        %3097 = vmatpush.bf16.msra.mxu0 %v2884
        %3098 = vmatpush.bf16.msra.mxu0 %v2876
        %3099 = vmatpush.bf16.msra.mxu0 %v2868
        %3100 = vmatpush.bf16.msra.mxu0 %v2860
        %3101 = vmatmul.bf16.gmra.mxu0 %v2392
        %v3102 = vpop.f32.mrf.mxu0
        %v3103 = vadd.f32 %v3089, %v3102
        %v3104 = vpop.f32.mrf.mxu0
        %v3105 = vadd.f32 %v3091, %v3104
        %3106 = vdwg.mxu0
        %3107 = vmatpush.bf16.msra.mxu0 %v2853
        %3108 = vmatpush.bf16.msra.mxu0 %v2845
        %3109 = vmatpush.bf16.msra.mxu0 %v2837
        %3110 = vmatpush.bf16.msra.mxu0 %v2829
        %3111 = vmatpush.bf16.msra.mxu0 %v2821
        %3112 = vmatpush.bf16.msra.mxu0 %v2813
        %3113 = vmatpush.bf16.msra.mxu0 %v2805
        %3114 = vmatpush.bf16.msra.mxu0 %v2797
        %3115 = vmatmul.bf16.gmra.mxu0 %v2391
        %v3116 = vpop.f32.mrf.mxu0
        %v3117 = vadd.f32 %v2397, %v3116
        %v3118 = vpop.f32.mrf.mxu0
        %v3119 = vadd.f32 %v2397, %v3118
        %3120 = vdwg.mxu0
        %3121 = vmatpush.bf16.msra.mxu0 %v2917
        %3122 = vmatpush.bf16.msra.mxu0 %v2909
        %3123 = vmatpush.bf16.msra.mxu0 %v2901
        %3124 = vmatpush.bf16.msra.mxu0 %v2893
        %3125 = vmatpush.bf16.msra.mxu0 %v2885
        %3126 = vmatpush.bf16.msra.mxu0 %v2877
        %3127 = vmatpush.bf16.msra.mxu0 %v2869
        %3128 = vmatpush.bf16.msra.mxu0 %v2861
        %3129 = vmatmul.bf16.gmra.mxu0 %v2392
        %v3130 = vpop.f32.mrf.mxu0
        %v3131 = vadd.f32 %v3117, %v3130
        %v3132 = vpop.f32.mrf.mxu0
        %v3133 = vadd.f32 %v3119, %v3132
        %3134 = vdwg.mxu0
        %3135 = vmatpush.bf16.msra.mxu0 %v2854
        %3136 = vmatpush.bf16.msra.mxu0 %v2846
        %3137 = vmatpush.bf16.msra.mxu0 %v2838
        %3138 = vmatpush.bf16.msra.mxu0 %v2830
        %3139 = vmatpush.bf16.msra.mxu0 %v2822
        %3140 = vmatpush.bf16.msra.mxu0 %v2814
        %3141 = vmatpush.bf16.msra.mxu0 %v2806
        %3142 = vmatpush.bf16.msra.mxu0 %v2798
        %3143 = vmatmul.bf16.gmra.mxu0 %v2391
        %v3144 = vpop.f32.mrf.mxu0
        %v3145 = vadd.f32 %v2398, %v3144
        %v3146 = vpop.f32.mrf.mxu0
        %v3147 = vadd.f32 %v2398, %v3146
        %3148 = vdwg.mxu0
        %3149 = vmatpush.bf16.msra.mxu0 %v2918
        %3150 = vmatpush.bf16.msra.mxu0 %v2910
        %3151 = vmatpush.bf16.msra.mxu0 %v2902
        %3152 = vmatpush.bf16.msra.mxu0 %v2894
        %3153 = vmatpush.bf16.msra.mxu0 %v2886
        %3154 = vmatpush.bf16.msra.mxu0 %v2878
        %3155 = vmatpush.bf16.msra.mxu0 %v2870
        %3156 = vmatpush.bf16.msra.mxu0 %v2862
        %3157 = vmatmul.bf16.gmra.mxu0 %v2392
        %v3158 = vpop.f32.mrf.mxu0
        %v3159 = vadd.f32 %v3145, %v3158
        %v3160 = vpop.f32.mrf.mxu0
        %v3161 = vadd.f32 %v3147, %v3160
        %3162 = vdwg.mxu0
        %3163 = vmatpush.bf16.msra.mxu0 %v2855
        %3164 = vmatpush.bf16.msra.mxu0 %v2847
        %3165 = vmatpush.bf16.msra.mxu0 %v2839
        %3166 = vmatpush.bf16.msra.mxu0 %v2831
        %3167 = vmatpush.bf16.msra.mxu0 %v2823
        %3168 = vmatpush.bf16.msra.mxu0 %v2815
        %3169 = vmatpush.bf16.msra.mxu0 %v2807
        %3170 = vmatpush.bf16.msra.mxu0 %v2799
        %3171 = vmatmul.bf16.gmra.mxu0 %v2391
        %v3172 = vpop.f32.mrf.mxu0
        %v3173 = vadd.f32 %v2399, %v3172
        %v3174 = vpop.f32.mrf.mxu0
        %v3175 = vadd.f32 %v2399, %v3174
        %3176 = vdwg.mxu0
        %3177 = vmatpush.bf16.msra.mxu0 %v2919
        %3178 = vmatpush.bf16.msra.mxu0 %v2911
        %3179 = vmatpush.bf16.msra.mxu0 %v2903
        %3180 = vmatpush.bf16.msra.mxu0 %v2895
        %3181 = vmatpush.bf16.msra.mxu0 %v2887
        %3182 = vmatpush.bf16.msra.mxu0 %v2879
        %3183 = vmatpush.bf16.msra.mxu0 %v2871
        %3184 = vmatpush.bf16.msra.mxu0 %v2863
        %3185 = vmatmul.bf16.gmra.mxu0 %v2392
        %v3186 = vpop.f32.mrf.mxu0
        %v3187 = vadd.f32 %v3173, %v3186
        %v3188 = vpop.f32.mrf.mxu0
        %v3189 = vadd.f32 %v3175, %v3188
        %3190 = vdwg.mxu0
        %3191 = vmatpush.bf16.msra.mxu0 %v2856
        %3192 = vmatpush.bf16.msra.mxu0 %v2848
        %3193 = vmatpush.bf16.msra.mxu0 %v2840
        %3194 = vmatpush.bf16.msra.mxu0 %v2832
        %3195 = vmatpush.bf16.msra.mxu0 %v2824
        %3196 = vmatpush.bf16.msra.mxu0 %v2816
        %3197 = vmatpush.bf16.msra.mxu0 %v2808
        %3198 = vmatpush.bf16.msra.mxu0 %v2800
        %3199 = vmatmul.bf16.gmra.mxu0 %v2391
        %v3200 = vpop.f32.mrf.mxu0
        %v3201 = vadd.f32 %v2400, %v3200
        %v3202 = vpop.f32.mrf.mxu0
        %v3203 = vadd.f32 %v2400, %v3202
        %3204 = vdwg.mxu0
        %3205 = vmatpush.bf16.msra.mxu0 %v2920
        %3206 = vmatpush.bf16.msra.mxu0 %v2912
        %3207 = vmatpush.bf16.msra.mxu0 %v2904
        %3208 = vmatpush.bf16.msra.mxu0 %v2896
        %3209 = vmatpush.bf16.msra.mxu0 %v2888
        %3210 = vmatpush.bf16.msra.mxu0 %v2880
        %3211 = vmatpush.bf16.msra.mxu0 %v2872
        %3212 = vmatpush.bf16.msra.mxu0 %v2864
        %3213 = vmatmul.bf16.gmra.mxu0 %v2392
        %v3214 = vpop.f32.mrf.mxu0
        %v3215 = vadd.f32 %v3201, %v3214
        %v3216 = vpop.f32.mrf.mxu0
        %v3217 = vadd.f32 %v3203, %v3216
        %3218 = vdwg.mxu0
        %3219 = vmatpush.bf16.msra.mxu0 %v2857
        %3220 = vmatpush.bf16.msra.mxu0 %v2849
        %3221 = vmatpush.bf16.msra.mxu0 %v2841
        %3222 = vmatpush.bf16.msra.mxu0 %v2833
        %3223 = vmatpush.bf16.msra.mxu0 %v2825
        %3224 = vmatpush.bf16.msra.mxu0 %v2817
        %3225 = vmatpush.bf16.msra.mxu0 %v2809
        %3226 = vmatpush.bf16.msra.mxu0 %v2801
        %3227 = vmatmul.bf16.gmra.mxu0 %v2391
        %v3228 = vpop.f32.mrf.mxu0
        %v3229 = vadd.f32 %v2401, %v3228
        %v3230 = vpop.f32.mrf.mxu0
        %v3231 = vadd.f32 %v2401, %v3230
        %3232 = vdwg.mxu0
        %3233 = vmatpush.bf16.msra.mxu0 %v2921
        %3234 = vmatpush.bf16.msra.mxu0 %v2913
        %3235 = vmatpush.bf16.msra.mxu0 %v2905
        %3236 = vmatpush.bf16.msra.mxu0 %v2897
        %3237 = vmatpush.bf16.msra.mxu0 %v2889
        %3238 = vmatpush.bf16.msra.mxu0 %v2881
        %3239 = vmatpush.bf16.msra.mxu0 %v2873
        %3240 = vmatpush.bf16.msra.mxu0 %v2865
        %3241 = vmatmul.bf16.gmra.mxu0 %v2392
        %v3242 = vpop.f32.mrf.mxu0
        %v3243 = vadd.f32 %v3229, %v3242
        %v3244 = vpop.f32.mrf.mxu0
        %v3245 = vadd.f32 %v3231, %v3244
        %3246 = vdwg.mxu0
        %3247 = vmatpush.bf16.msra.mxu0 %v2858
        %3248 = vmatpush.bf16.msra.mxu0 %v2850
        %3249 = vmatpush.bf16.msra.mxu0 %v2842
        %3250 = vmatpush.bf16.msra.mxu0 %v2834
        %3251 = vmatpush.bf16.msra.mxu0 %v2826
        %3252 = vmatpush.bf16.msra.mxu0 %v2818
        %3253 = vmatpush.bf16.msra.mxu0 %v2810
        %3254 = vmatpush.bf16.msra.mxu0 %v2802
        %3255 = vmatmul.bf16.gmra.mxu0 %v2391
        %v3256 = vpop.f32.mrf.mxu0
        %v3257 = vadd.f32 %v2402, %v3256
        %v3258 = vpop.f32.mrf.mxu0
        %v3259 = vadd.f32 %v2402, %v3258
        %3260 = vdwg.mxu0
        %3261 = vmatpush.bf16.msra.mxu0 %v2922
        %3262 = vmatpush.bf16.msra.mxu0 %v2914
        %3263 = vmatpush.bf16.msra.mxu0 %v2906
        %3264 = vmatpush.bf16.msra.mxu0 %v2898
        %3265 = vmatpush.bf16.msra.mxu0 %v2890
        %3266 = vmatpush.bf16.msra.mxu0 %v2882
        %3267 = vmatpush.bf16.msra.mxu0 %v2874
        %3268 = vmatpush.bf16.msra.mxu0 %v2866
        %3269 = vmatmul.bf16.gmra.mxu0 %v2392
        %v3270 = vpop.f32.mrf.mxu0
        %v3271 = vadd.f32 %v3257, %v3270
        %v3272 = vpop.f32.mrf.mxu0
        %v3273 = vadd.f32 %v3259, %v3272
        %3274 = vdwg.mxu0
        %v3275 = vmul.f32 %v3075, 1.702
        %v3276 = vmul.f32 %v3103, 1.702
        %v3277 = vmul.f32 %v3131, 1.702
        %v3278 = vmul.f32 %v3159, 1.702
        %v3279 = vmul.f32 %v3187, 1.702
        %v3280 = vmul.f32 %v3215, 1.702
        %v3281 = vmul.f32 %v3243, 1.702
        %v3282 = vmul.f32 %v3271, 1.702
        %v3283 = vmul.f32 %v3077, 1.702
        %v3284 = vmul.f32 %v3105, 1.702
        %v3285 = vmul.f32 %v3133, 1.702
        %v3286 = vmul.f32 %v3161, 1.702
        %v3287 = vmul.f32 %v3189, 1.702
        %v3288 = vmul.f32 %v3217, 1.702
        %v3289 = vmul.f32 %v3245, 1.702
        %v3290 = vmul.f32 %v3273, 1.702
        %v3291 = vxor.u32 %v3275, 2147483648
        %v3292 = vxor.u32 %v3276, 2147483648
        %v3293 = vxor.u32 %v3277, 2147483648
        %v3294 = vxor.u32 %v3278, 2147483648
        %v3295 = vxor.u32 %v3279, 2147483648
        %v3296 = vxor.u32 %v3280, 2147483648
        %v3297 = vxor.u32 %v3281, 2147483648
        %v3298 = vxor.u32 %v3282, 2147483648
        %v3299 = vxor.u32 %v3283, 2147483648
        %v3300 = vxor.u32 %v3284, 2147483648
        %v3301 = vxor.u32 %v3285, 2147483648
        %v3302 = vxor.u32 %v3286, 2147483648
        %v3303 = vxor.u32 %v3287, 2147483648
        %v3304 = vxor.u32 %v3288, 2147483648
        %v3305 = vxor.u32 %v3289, 2147483648
        %v3306 = vxor.u32 %v3290, 2147483648
        %v3307 = vmul.f32 %v3291, 1.442695
        %v3308 = vpow.pop %v3307
        %v3309 = vmul.f32 %v3292, 1.442695
        %v3310 = vpow.pop %v3309
        %v3311 = vmul.f32 %v3293, 1.442695
        %v3312 = vpow.pop %v3311
        %v3313 = vmul.f32 %v3294, 1.442695
        %v3314 = vpow.pop %v3313
        %v3315 = vmul.f32 %v3295, 1.442695
        %v3316 = vpow.pop %v3315
        %v3317 = vmul.f32 %v3296, 1.442695
        %v3318 = vpow.pop %v3317
        %v3319 = vmul.f32 %v3297, 1.442695
        %v3320 = vpow.pop %v3319
        %v3321 = vmul.f32 %v3298, 1.442695
        %v3322 = vpow.pop %v3321
        %v3323 = vmul.f32 %v3299, 1.442695
        %v3324 = vpow.pop %v3323
        %v3325 = vmul.f32 %v3300, 1.442695
        %v3326 = vpow.pop %v3325
        %v3327 = vmul.f32 %v3301, 1.442695
        %v3328 = vpow.pop %v3327
        %v3329 = vmul.f32 %v3302, 1.442695
        %v3330 = vpow.pop %v3329
        %v3331 = vmul.f32 %v3303, 1.442695
        %v3332 = vpow.pop %v3331
        %v3333 = vmul.f32 %v3304, 1.442695
        %v3334 = vpow.pop %v3333
        %v3335 = vmul.f32 %v3305, 1.442695
        %v3336 = vpow.pop %v3335
        %v3337 = vmul.f32 %v3306, 1.442695
        %v3338 = vpow.pop %v3337
        %v3339 = vadd.f32 %v3308, 1.0
        %v3340 = vadd.f32 %v3310, 1.0
        %v3341 = vadd.f32 %v3312, 1.0
        %v3342 = vadd.f32 %v3314, 1.0
        %v3343 = vadd.f32 %v3316, 1.0
        %v3344 = vadd.f32 %v3318, 1.0
        %v3345 = vadd.f32 %v3320, 1.0
        %v3346 = vadd.f32 %v3322, 1.0
        %v3347 = vadd.f32 %v3324, 1.0
        %v3348 = vadd.f32 %v3326, 1.0
        %v3349 = vadd.f32 %v3328, 1.0
        %v3350 = vadd.f32 %v3330, 1.0
        %v3351 = vadd.f32 %v3332, 1.0
        %v3352 = vadd.f32 %v3334, 1.0
        %v3353 = vadd.f32 %v3336, 1.0
        %v3354 = vadd.f32 %v3338, 1.0
        %v3355 = vrcp.pop %v3339
        %v3356 = vmul.f32 %v3339, %v3355
        %v3357 = vsub.f32 1.0, %v3356
        %v3358 = vmul.f32 %v3355, %v3357
        %v3359 = vadd.f32 %v3355, %v3358
        %vm3360 = vweird.f32 %v3339
        %vm3361 = vweird.f32 %v3355
        %vm3362 = vmor %vm3360, %vm3361
        %v3363 = vsel %vm3362, %v3355, %v3359
        %v3364 = vand.u32 2147483647, %v3339
        %vm3365 = vcmp.eq.f32.partialorder %v3364, 8.507059e+37
        %v3366 = vand.u32 %v3339, 2147483648
        %v3367 = vor.u32 1.1754944e-38, %v3366
        %v3368 = vsel %vm3365, %v3367, %v3363
        %v3369 = vmul.f32 1.0, %v3368
        %v3370 = vrcp.pop %v3340
        %v3371 = vmul.f32 %v3340, %v3370
        %v3372 = vsub.f32 1.0, %v3371
        %v3373 = vmul.f32 %v3370, %v3372
        %v3374 = vadd.f32 %v3370, %v3373
        %vm3375 = vweird.f32 %v3340
        %vm3376 = vweird.f32 %v3370
        %vm3377 = vmor %vm3375, %vm3376
        %v3378 = vsel %vm3377, %v3370, %v3374
        %v3379 = vand.u32 2147483647, %v3340
        %vm3380 = vcmp.eq.f32.partialorder %v3379, 8.507059e+37
        %v3381 = vand.u32 %v3340, 2147483648
        %v3382 = vor.u32 1.1754944e-38, %v3381
        %v3383 = vsel %vm3380, %v3382, %v3378
        %v3384 = vmul.f32 1.0, %v3383
        %v3385 = vrcp.pop %v3341
        %v3386 = vmul.f32 %v3341, %v3385
        %v3387 = vsub.f32 1.0, %v3386
        %v3388 = vmul.f32 %v3385, %v3387
        %v3389 = vadd.f32 %v3385, %v3388
        %vm3390 = vweird.f32 %v3341
        %vm3391 = vweird.f32 %v3385
        %vm3392 = vmor %vm3390, %vm3391
        %v3393 = vsel %vm3392, %v3385, %v3389
        %v3394 = vand.u32 2147483647, %v3341
        %vm3395 = vcmp.eq.f32.partialorder %v3394, 8.507059e+37
        %v3396 = vand.u32 %v3341, 2147483648
        %v3397 = vor.u32 1.1754944e-38, %v3396
        %v3398 = vsel %vm3395, %v3397, %v3393
        %v3399 = vmul.f32 1.0, %v3398
        %v3400 = vrcp.pop %v3342
        %v3401 = vmul.f32 %v3342, %v3400
        %v3402 = vsub.f32 1.0, %v3401
        %v3403 = vmul.f32 %v3400, %v3402
        %v3404 = vadd.f32 %v3400, %v3403
        %vm3405 = vweird.f32 %v3342
        %vm3406 = vweird.f32 %v3400
        %vm3407 = vmor %vm3405, %vm3406
        %v3408 = vsel %vm3407, %v3400, %v3404
        %v3409 = vand.u32 2147483647, %v3342
        %vm3410 = vcmp.eq.f32.partialorder %v3409, 8.507059e+37
        %v3411 = vand.u32 %v3342, 2147483648
        %v3412 = vor.u32 1.1754944e-38, %v3411
        %v3413 = vsel %vm3410, %v3412, %v3408
        %v3414 = vmul.f32 1.0, %v3413
        %v3415 = vrcp.pop %v3343
        %v3416 = vmul.f32 %v3343, %v3415
        %v3417 = vsub.f32 1.0, %v3416
        %v3418 = vmul.f32 %v3415, %v3417
        %v3419 = vadd.f32 %v3415, %v3418
        %vm3420 = vweird.f32 %v3343
        %vm3421 = vweird.f32 %v3415
        %vm3422 = vmor %vm3420, %vm3421
        %v3423 = vsel %vm3422, %v3415, %v3419
        %v3424 = vand.u32 2147483647, %v3343
        %vm3425 = vcmp.eq.f32.partialorder %v3424, 8.507059e+37
        %v3426 = vand.u32 %v3343, 2147483648
        %v3427 = vor.u32 1.1754944e-38, %v3426
        %v3428 = vsel %vm3425, %v3427, %v3423
        %v3429 = vmul.f32 1.0, %v3428
        %v3430 = vrcp.pop %v3344
        %v3431 = vmul.f32 %v3344, %v3430
        %v3432 = vsub.f32 1.0, %v3431
        %v3433 = vmul.f32 %v3430, %v3432
        %v3434 = vadd.f32 %v3430, %v3433
        %vm3435 = vweird.f32 %v3344
        %vm3436 = vweird.f32 %v3430
        %vm3437 = vmor %vm3435, %vm3436
        %v3438 = vsel %vm3437, %v3430, %v3434
        %v3439 = vand.u32 2147483647, %v3344
        %vm3440 = vcmp.eq.f32.partialorder %v3439, 8.507059e+37
        %v3441 = vand.u32 %v3344, 2147483648
        %v3442 = vor.u32 1.1754944e-38, %v3441
        %v3443 = vsel %vm3440, %v3442, %v3438
        %v3444 = vmul.f32 1.0, %v3443
        %v3445 = vrcp.pop %v3345
        %v3446 = vmul.f32 %v3345, %v3445
        %v3447 = vsub.f32 1.0, %v3446
        %v3448 = vmul.f32 %v3445, %v3447
        %v3449 = vadd.f32 %v3445, %v3448
        %vm3450 = vweird.f32 %v3345
        %vm3451 = vweird.f32 %v3445
        %vm3452 = vmor %vm3450, %vm3451
        %v3453 = vsel %vm3452, %v3445, %v3449
        %v3454 = vand.u32 2147483647, %v3345
        %vm3455 = vcmp.eq.f32.partialorder %v3454, 8.507059e+37
        %v3456 = vand.u32 %v3345, 2147483648
        %v3457 = vor.u32 1.1754944e-38, %v3456
        %v3458 = vsel %vm3455, %v3457, %v3453
        %v3459 = vmul.f32 1.0, %v3458
        %v3460 = vrcp.pop %v3346
        %v3461 = vmul.f32 %v3346, %v3460
        %v3462 = vsub.f32 1.0, %v3461
        %v3463 = vmul.f32 %v3460, %v3462
        %v3464 = vadd.f32 %v3460, %v3463
        %vm3465 = vweird.f32 %v3346
        %vm3466 = vweird.f32 %v3460
        %vm3467 = vmor %vm3465, %vm3466
        %v3468 = vsel %vm3467, %v3460, %v3464
        %v3469 = vand.u32 2147483647, %v3346
        %vm3470 = vcmp.eq.f32.partialorder %v3469, 8.507059e+37
        %v3471 = vand.u32 %v3346, 2147483648
        %v3472 = vor.u32 1.1754944e-38, %v3471
        %v3473 = vsel %vm3470, %v3472, %v3468
        %v3474 = vmul.f32 1.0, %v3473
        %v3475 = vrcp.pop %v3347
        %v3476 = vmul.f32 %v3347, %v3475
        %v3477 = vsub.f32 1.0, %v3476
        %v3478 = vmul.f32 %v3475, %v3477
        %v3479 = vadd.f32 %v3475, %v3478
        %vm3480 = vweird.f32 %v3347
        %vm3481 = vweird.f32 %v3475
        %vm3482 = vmor %vm3480, %vm3481
        %v3483 = vsel %vm3482, %v3475, %v3479
        %v3484 = vand.u32 2147483647, %v3347
        %vm3485 = vcmp.eq.f32.partialorder %v3484, 8.507059e+37
        %v3486 = vand.u32 %v3347, 2147483648
        %v3487 = vor.u32 1.1754944e-38, %v3486
        %v3488 = vsel %vm3485, %v3487, %v3483
        %v3489 = vmul.f32 1.0, %v3488
        %v3490 = vrcp.pop %v3348
        %v3491 = vmul.f32 %v3348, %v3490
        %v3492 = vsub.f32 1.0, %v3491
        %v3493 = vmul.f32 %v3490, %v3492
        %v3494 = vadd.f32 %v3490, %v3493
        %vm3495 = vweird.f32 %v3348
        %vm3496 = vweird.f32 %v3490
        %vm3497 = vmor %vm3495, %vm3496
        %v3498 = vsel %vm3497, %v3490, %v3494
        %v3499 = vand.u32 2147483647, %v3348
        %vm3500 = vcmp.eq.f32.partialorder %v3499, 8.507059e+37
        %v3501 = vand.u32 %v3348, 2147483648
        %v3502 = vor.u32 1.1754944e-38, %v3501
        %v3503 = vsel %vm3500, %v3502, %v3498
        %v3504 = vmul.f32 1.0, %v3503
        %v3505 = vrcp.pop %v3349
        %v3506 = vmul.f32 %v3349, %v3505
        %v3507 = vsub.f32 1.0, %v3506
        %v3508 = vmul.f32 %v3505, %v3507
        %v3509 = vadd.f32 %v3505, %v3508
        %vm3510 = vweird.f32 %v3349
        %vm3511 = vweird.f32 %v3505
        %vm3512 = vmor %vm3510, %vm3511
        %v3513 = vsel %vm3512, %v3505, %v3509
        %v3514 = vand.u32 2147483647, %v3349
        %vm3515 = vcmp.eq.f32.partialorder %v3514, 8.507059e+37
        %v3516 = vand.u32 %v3349, 2147483648
        %v3517 = vor.u32 1.1754944e-38, %v3516
        %v3518 = vsel %vm3515, %v3517, %v3513
        %v3519 = vmul.f32 1.0, %v3518
        %v3520 = vrcp.pop %v3350
        %v3521 = vmul.f32 %v3350, %v3520
        %v3522 = vsub.f32 1.0, %v3521
        %v3523 = vmul.f32 %v3520, %v3522
        %v3524 = vadd.f32 %v3520, %v3523
        %vm3525 = vweird.f32 %v3350
        %vm3526 = vweird.f32 %v3520
        %vm3527 = vmor %vm3525, %vm3526
        %v3528 = vsel %vm3527, %v3520, %v3524
        %v3529 = vand.u32 2147483647, %v3350
        %vm3530 = vcmp.eq.f32.partialorder %v3529, 8.507059e+37
        %v3531 = vand.u32 %v3350, 2147483648
        %v3532 = vor.u32 1.1754944e-38, %v3531
        %v3533 = vsel %vm3530, %v3532, %v3528
        %v3534 = vmul.f32 1.0, %v3533
        %v3535 = vrcp.pop %v3351
        %v3536 = vmul.f32 %v3351, %v3535
        %v3537 = vsub.f32 1.0, %v3536
        %v3538 = vmul.f32 %v3535, %v3537
        %v3539 = vadd.f32 %v3535, %v3538
        %vm3540 = vweird.f32 %v3351
        %vm3541 = vweird.f32 %v3535
        %vm3542 = vmor %vm3540, %vm3541
        %v3543 = vsel %vm3542, %v3535, %v3539
        %v3544 = vand.u32 2147483647, %v3351
        %vm3545 = vcmp.eq.f32.partialorder %v3544, 8.507059e+37
        %v3546 = vand.u32 %v3351, 2147483648
        %v3547 = vor.u32 1.1754944e-38, %v3546
        %v3548 = vsel %vm3545, %v3547, %v3543
        %v3549 = vmul.f32 1.0, %v3548
        %v3550 = vrcp.pop %v3352
        %v3551 = vmul.f32 %v3352, %v3550
        %v3552 = vsub.f32 1.0, %v3551
        %v3553 = vmul.f32 %v3550, %v3552
        %v3554 = vadd.f32 %v3550, %v3553
        %vm3555 = vweird.f32 %v3352
        %vm3556 = vweird.f32 %v3550
        %vm3557 = vmor %vm3555, %vm3556
        %v3558 = vsel %vm3557, %v3550, %v3554
        %v3559 = vand.u32 2147483647, %v3352
        %vm3560 = vcmp.eq.f32.partialorder %v3559, 8.507059e+37
        %v3561 = vand.u32 %v3352, 2147483648
        %v3562 = vor.u32 1.1754944e-38, %v3561
        %v3563 = vsel %vm3560, %v3562, %v3558
        %v3564 = vmul.f32 1.0, %v3563
        %v3565 = vrcp.pop %v3353
        %v3566 = vmul.f32 %v3353, %v3565
        %v3567 = vsub.f32 1.0, %v3566
        %v3568 = vmul.f32 %v3565, %v3567
        %v3569 = vadd.f32 %v3565, %v3568
        %vm3570 = vweird.f32 %v3353
        %vm3571 = vweird.f32 %v3565
        %vm3572 = vmor %vm3570, %vm3571
        %v3573 = vsel %vm3572, %v3565, %v3569
        %v3574 = vand.u32 2147483647, %v3353
        %vm3575 = vcmp.eq.f32.partialorder %v3574, 8.507059e+37
        %v3576 = vand.u32 %v3353, 2147483648
        %v3577 = vor.u32 1.1754944e-38, %v3576
        %v3578 = vsel %vm3575, %v3577, %v3573
        %v3579 = vmul.f32 1.0, %v3578
        %v3580 = vrcp.pop %v3354
        %v3581 = vmul.f32 %v3354, %v3580
        %v3582 = vsub.f32 1.0, %v3581
        %v3583 = vmul.f32 %v3580, %v3582
        %v3584 = vadd.f32 %v3580, %v3583
        %vm3585 = vweird.f32 %v3354
        %vm3586 = vweird.f32 %v3580
        %vm3587 = vmor %vm3585, %vm3586
        %v3588 = vsel %vm3587, %v3580, %v3584
        %v3589 = vand.u32 2147483647, %v3354
        %vm3590 = vcmp.eq.f32.partialorder %v3589, 8.507059e+37
        %v3591 = vand.u32 %v3354, 2147483648
        %v3592 = vor.u32 1.1754944e-38, %v3591
        %v3593 = vsel %vm3590, %v3592, %v3588
        %v3594 = vmul.f32 1.0, %v3593
        %v3595 = vmul.f32 %v3075, %v3369
        %v3596 = vmul.f32 %v3103, %v3384
        %v3597 = vmul.f32 %v3131, %v3399
        %v3598 = vmul.f32 %v3159, %v3414
        %v3599 = vmul.f32 %v3187, %v3429
        %v3600 = vmul.f32 %v3215, %v3444
        %v3601 = vmul.f32 %v3243, %v3459
        %v3602 = vmul.f32 %v3271, %v3474
        %v3603 = vmul.f32 %v3077, %v3489
        %v3604 = vmul.f32 %v3105, %v3504
        %v3605 = vmul.f32 %v3133, %v3519
        %v3606 = vmul.f32 %v3161, %v3534
        %v3607 = vmul.f32 %v3189, %v3549
        %v3608 = vmul.f32 %v3217, %v3564
        %v3609 = vmul.f32 %v3245, %v3579
        %v3610 = vmul.f32 %v3273, %v3594
        %v3611 = vld [vmem:[%s740] sm:$0xff]
        %v3612 = vld [vmem:[%s740 + $0x8] sm:$0xff]
        %v3613 = vld [vmem:[%s740 + $0x10] sm:$0xff]
        %v3614 = vld [vmem:[%s740 + $0x18] sm:$0xff]
        %v3615 = vld [vmem:[%s740 + $0x20] sm:$0xff]
        %v3616 = vld [vmem:[%s740 + $0x28] sm:$0xff]
        %v3617 = vld [vmem:[%s740 + $0x30] sm:$0xff]
        %v3618 = vld [vmem:[%s740 + $0x38] sm:$0xff]
        %v3619 = vld [vmem:[%s740 + $0x40] sm:$0xff]
        %v3620 = vld [vmem:[%s740 + $0x48] sm:$0xff]
        %v3621 = vld [vmem:[%s740 + $0x50] sm:$0xff]
        %v3622 = vld [vmem:[%s740 + $0x58] sm:$0xff]
        %v3623 = vld [vmem:[%s740 + $0x60] sm:$0xff]
        %v3624 = vld [vmem:[%s740 + $0x68] sm:$0xff]
        %v3625 = vld [vmem:[%s740 + $0x70] sm:$0xff]
        %v3626 = vld [vmem:[%s740 + $0x78] sm:$0xff]
        %v3627 = vld [vmem:[%s740 + $0x80] sm:$0xff]
        %v3628 = vld [vmem:[%s740 + $0x88] sm:$0xff]
        %v3629 = vld [vmem:[%s740 + $0x90] sm:$0xff]
        %v3630 = vld [vmem:[%s740 + $0x98] sm:$0xff]
        %v3631 = vld [vmem:[%s740 + $0xa0] sm:$0xff]
        %v3632 = vld [vmem:[%s740 + $0xa8] sm:$0xff]
        %v3633 = vld [vmem:[%s740 + $0xb0] sm:$0xff]
        %v3634 = vld [vmem:[%s740 + $0xb8] sm:$0xff]
        %v3635 = vld [vmem:[%s740 + $0xc0] sm:$0xff]
        %v3636 = vld [vmem:[%s740 + $0xc8] sm:$0xff]
        %v3637 = vld [vmem:[%s740 + $0xd0] sm:$0xff]
        %v3638 = vld [vmem:[%s740 + $0xd8] sm:$0xff]
        %v3639 = vld [vmem:[%s740 + $0xe0] sm:$0xff]
        %v3640 = vld [vmem:[%s740 + $0xe8] sm:$0xff]
        %v3641 = vld [vmem:[%s740 + $0xf0] sm:$0xff]
        %v3642 = vld [vmem:[%s740 + $0xf8] sm:$0xff]
        %v3643 = vld [vmem:[%s740 + $0x100] sm:$0xff]
        %v3644 = vld [vmem:[%s740 + $0x108] sm:$0xff]
        %v3645 = vld [vmem:[%s740 + $0x110] sm:$0xff]
        %v3646 = vld [vmem:[%s740 + $0x118] sm:$0xff]
        %v3647 = vld [vmem:[%s740 + $0x120] sm:$0xff]
        %v3648 = vld [vmem:[%s740 + $0x128] sm:$0xff]
        %v3649 = vld [vmem:[%s740 + $0x130] sm:$0xff]
        %v3650 = vld [vmem:[%s740 + $0x138] sm:$0xff]
        %v3651 = vld [vmem:[%s740 + $0x140] sm:$0xff]
        %v3652 = vld [vmem:[%s740 + $0x148] sm:$0xff]
        %v3653 = vld [vmem:[%s740 + $0x150] sm:$0xff]
        %v3654 = vld [vmem:[%s740 + $0x158] sm:$0xff]
        %v3655 = vld [vmem:[%s740 + $0x160] sm:$0xff]
        %v3656 = vld [vmem:[%s740 + $0x168] sm:$0xff]
        %v3657 = vld [vmem:[%s740 + $0x170] sm:$0xff]
        %v3658 = vld [vmem:[%s740 + $0x178] sm:$0xff]
        %v3659 = vld [vmem:[%s740 + $0x180] sm:$0xff]
        %v3660 = vld [vmem:[%s740 + $0x188] sm:$0xff]
        %v3661 = vld [vmem:[%s740 + $0x190] sm:$0xff]
        %v3662 = vld [vmem:[%s740 + $0x198] sm:$0xff]
        %v3663 = vld [vmem:[%s740 + $0x1a0] sm:$0xff]
        %v3664 = vld [vmem:[%s740 + $0x1a8] sm:$0xff]
        %v3665 = vld [vmem:[%s740 + $0x1b0] sm:$0xff]
        %v3666 = vld [vmem:[%s740 + $0x1b8] sm:$0xff]
        %v3667 = vld [vmem:[%s740 + $0x1c0] sm:$0xff]
        %v3668 = vld [vmem:[%s740 + $0x1c8] sm:$0xff]
        %v3669 = vld [vmem:[%s740 + $0x1d0] sm:$0xff]
        %v3670 = vld [vmem:[%s740 + $0x1d8] sm:$0xff]
        %v3671 = vld [vmem:[%s740 + $0x1e0] sm:$0xff]
        %v3672 = vld [vmem:[%s740 + $0x1e8] sm:$0xff]
        %v3673 = vld [vmem:[%s740 + $0x1f0] sm:$0xff]
        %v3674 = vld [vmem:[%s740 + $0x1f8] sm:$0xff]
        %v3675 = vld [vmem:[%s740 + $0x200] sm:$0xff]
        %v3676 = vld [vmem:[%s740 + $0x208] sm:$0xff]
        %v3677 = vld [vmem:[%s740 + $0x210] sm:$0xff]
        %v3678 = vld [vmem:[%s740 + $0x218] sm:$0xff]
        %v3679 = vld [vmem:[%s740 + $0x220] sm:$0xff]
        %v3680 = vld [vmem:[%s740 + $0x228] sm:$0xff]
        %v3681 = vld [vmem:[%s740 + $0x230] sm:$0xff]
        %v3682 = vld [vmem:[%s740 + $0x238] sm:$0xff]
        %v3683 = vld [vmem:[%s740 + $0x240] sm:$0xff]
        %v3684 = vld [vmem:[%s740 + $0x248] sm:$0xff]
        %v3685 = vld [vmem:[%s740 + $0x250] sm:$0xff]
        %v3686 = vld [vmem:[%s740 + $0x258] sm:$0xff]
        %v3687 = vld [vmem:[%s740 + $0x260] sm:$0xff]
        %v3688 = vld [vmem:[%s740 + $0x268] sm:$0xff]
        %v3689 = vld [vmem:[%s740 + $0x270] sm:$0xff]
        %v3690 = vld [vmem:[%s740 + $0x278] sm:$0xff]
        %v3691 = vld [vmem:[%s740 + $0x280] sm:$0xff]
        %v3692 = vld [vmem:[%s740 + $0x288] sm:$0xff]
        %v3693 = vld [vmem:[%s740 + $0x290] sm:$0xff]
        %v3694 = vld [vmem:[%s740 + $0x298] sm:$0xff]
        %v3695 = vld [vmem:[%s740 + $0x2a0] sm:$0xff]
        %v3696 = vld [vmem:[%s740 + $0x2a8] sm:$0xff]
        %v3697 = vld [vmem:[%s740 + $0x2b0] sm:$0xff]
        %v3698 = vld [vmem:[%s740 + $0x2b8] sm:$0xff]
        %v3699 = vld [vmem:[%s740 + $0x2c0] sm:$0xff]
        %v3700 = vld [vmem:[%s740 + $0x2c8] sm:$0xff]
        %v3701 = vld [vmem:[%s740 + $0x2d0] sm:$0xff]
        %v3702 = vld [vmem:[%s740 + $0x2d8] sm:$0xff]
        %v3703 = vld [vmem:[%s740 + $0x2e0] sm:$0xff]
        %v3704 = vld [vmem:[%s740 + $0x2e8] sm:$0xff]
        %v3705 = vld [vmem:[%s740 + $0x2f0] sm:$0xff]
        %v3706 = vld [vmem:[%s740 + $0x2f8] sm:$0xff]
        %v3707 = vld [vmem:[%s740 + $0x300] sm:$0xff]
        %v3708 = vld [vmem:[%s740 + $0x308] sm:$0xff]
        %v3709 = vld [vmem:[%s740 + $0x310] sm:$0xff]
        %v3710 = vld [vmem:[%s740 + $0x318] sm:$0xff]
        %v3711 = vld [vmem:[%s740 + $0x320] sm:$0xff]
        %v3712 = vld [vmem:[%s740 + $0x328] sm:$0xff]
        %v3713 = vld [vmem:[%s740 + $0x330] sm:$0xff]
        %v3714 = vld [vmem:[%s740 + $0x338] sm:$0xff]
        %v3715 = vld [vmem:[%s740 + $0x340] sm:$0xff]
        %v3716 = vld [vmem:[%s740 + $0x348] sm:$0xff]
        %v3717 = vld [vmem:[%s740 + $0x350] sm:$0xff]
        %v3718 = vld [vmem:[%s740 + $0x358] sm:$0xff]
        %v3719 = vld [vmem:[%s740 + $0x360] sm:$0xff]
        %v3720 = vld [vmem:[%s740 + $0x368] sm:$0xff]
        %v3721 = vld [vmem:[%s740 + $0x370] sm:$0xff]
        %v3722 = vld [vmem:[%s740 + $0x378] sm:$0xff]
        %v3723 = vld [vmem:[%s740 + $0x380] sm:$0xff]
        %v3724 = vld [vmem:[%s740 + $0x388] sm:$0xff]
        %v3725 = vld [vmem:[%s740 + $0x390] sm:$0xff]
        %v3726 = vld [vmem:[%s740 + $0x398] sm:$0xff]
        %v3727 = vld [vmem:[%s740 + $0x3a0] sm:$0xff]
        %v3728 = vld [vmem:[%s740 + $0x3a8] sm:$0xff]
        %v3729 = vld [vmem:[%s740 + $0x3b0] sm:$0xff]
        %v3730 = vld [vmem:[%s740 + $0x3b8] sm:$0xff]
        %v3731 = vld [vmem:[%s740 + $0x3c0] sm:$0xff]
        %v3732 = vld [vmem:[%s740 + $0x3c8] sm:$0xff]
        %v3733 = vld [vmem:[%s740 + $0x3d0] sm:$0xff]
        %v3734 = vld [vmem:[%s740 + $0x3d8] sm:$0xff]
        %v3735 = vld [vmem:[%s740 + $0x3e0] sm:$0xff]
        %v3736 = vld [vmem:[%s740 + $0x3e8] sm:$0xff]
        %v3737 = vld [vmem:[%s740 + $0x3f0] sm:$0xff]
        %v3738 = vld [vmem:[%s740 + $0x3f8] sm:$0xff]
        %v3739 = vpack.c.bf16 %v3603, %v3595
        %v3740 = vpack.c.bf16 %v3604, %v3596
        %v3741 = vpack.c.bf16 %v3605, %v3597
        %v3742 = vpack.c.bf16 %v3606, %v3598
        %v3743 = vpack.c.bf16 %v3607, %v3599
        %v3744 = vpack.c.bf16 %v3608, %v3600
        %v3745 = vpack.c.bf16 %v3609, %v3601
        %v3746 = vpack.c.bf16 %v3610, %v3602
        %v3747 = vld [vmem:[%s869] sm:$0x3]
        %v3749 = vperm.slane %v3747, 0
        %v3750 = vperm.slane %v3747, 1
        %v3881 = vunpack.c.l.b16 %v3611
        %v3882 = vunpack.c.h.b16 %v3611
        %v3883 = vunpack.c.l.b16 %v3612
        %v3884 = vunpack.c.h.b16 %v3612
        %v3885 = vunpack.c.l.b16 %v3613
        %v3886 = vunpack.c.h.b16 %v3613
        %v3887 = vunpack.c.l.b16 %v3614
        %v3888 = vunpack.c.h.b16 %v3614
        %v3889 = vunpack.c.l.b16 %v3615
        %v3890 = vunpack.c.h.b16 %v3615
        %v3891 = vunpack.c.l.b16 %v3616
        %v3892 = vunpack.c.h.b16 %v3616
        %v3893 = vunpack.c.l.b16 %v3617
        %v3894 = vunpack.c.h.b16 %v3617
        %v3895 = vunpack.c.l.b16 %v3618
        %v3896 = vunpack.c.h.b16 %v3618
        %v3897 = vunpack.c.l.b16 %v3619
        %v3898 = vunpack.c.h.b16 %v3619
        %v3899 = vunpack.c.l.b16 %v3620
        %v3900 = vunpack.c.h.b16 %v3620
        %v3901 = vunpack.c.l.b16 %v3621
        %v3902 = vunpack.c.h.b16 %v3621
        %v3903 = vunpack.c.l.b16 %v3622
        %v3904 = vunpack.c.h.b16 %v3622
        %v3905 = vunpack.c.l.b16 %v3623
        %v3906 = vunpack.c.h.b16 %v3623
        %v3907 = vunpack.c.l.b16 %v3624
        %v3908 = vunpack.c.h.b16 %v3624
        %v3909 = vunpack.c.l.b16 %v3625
        %v3910 = vunpack.c.h.b16 %v3625
        %v3911 = vunpack.c.l.b16 %v3626
        %v3912 = vunpack.c.h.b16 %v3626
        %v3913 = vunpack.c.l.b16 %v3627
        %v3914 = vunpack.c.h.b16 %v3627
        %v3915 = vunpack.c.l.b16 %v3628
        %v3916 = vunpack.c.h.b16 %v3628
        %v3917 = vunpack.c.l.b16 %v3629
        %v3918 = vunpack.c.h.b16 %v3629
        %v3919 = vunpack.c.l.b16 %v3630
        %v3920 = vunpack.c.h.b16 %v3630
        %v3921 = vunpack.c.l.b16 %v3631
        %v3922 = vunpack.c.h.b16 %v3631
        %v3923 = vunpack.c.l.b16 %v3632
        %v3924 = vunpack.c.h.b16 %v3632
        %v3925 = vunpack.c.l.b16 %v3633
        %v3926 = vunpack.c.h.b16 %v3633
        %v3927 = vunpack.c.l.b16 %v3634
        %v3928 = vunpack.c.h.b16 %v3634
        %v3929 = vunpack.c.l.b16 %v3635
        %v3930 = vunpack.c.h.b16 %v3635
        %v3931 = vunpack.c.l.b16 %v3636
        %v3932 = vunpack.c.h.b16 %v3636
        %v3933 = vunpack.c.l.b16 %v3637
        %v3934 = vunpack.c.h.b16 %v3637
        %v3935 = vunpack.c.l.b16 %v3638
        %v3936 = vunpack.c.h.b16 %v3638
        %v3937 = vunpack.c.l.b16 %v3639
        %v3938 = vunpack.c.h.b16 %v3639
        %v3939 = vunpack.c.l.b16 %v3640
        %v3940 = vunpack.c.h.b16 %v3640
        %v3941 = vunpack.c.l.b16 %v3641
        %v3942 = vunpack.c.h.b16 %v3641
        %v3943 = vunpack.c.l.b16 %v3642
        %v3944 = vunpack.c.h.b16 %v3642
        %v3945 = vunpack.c.l.b16 %v3643
        %v3946 = vunpack.c.h.b16 %v3643
        %v3947 = vunpack.c.l.b16 %v3644
        %v3948 = vunpack.c.h.b16 %v3644
        %v3949 = vunpack.c.l.b16 %v3645
        %v3950 = vunpack.c.h.b16 %v3645
        %v3951 = vunpack.c.l.b16 %v3646
        %v3952 = vunpack.c.h.b16 %v3646
        %v3953 = vunpack.c.l.b16 %v3647
        %v3954 = vunpack.c.h.b16 %v3647
        %v3955 = vunpack.c.l.b16 %v3648
        %v3956 = vunpack.c.h.b16 %v3648
        %v3957 = vunpack.c.l.b16 %v3649
        %v3958 = vunpack.c.h.b16 %v3649
        %v3959 = vunpack.c.l.b16 %v3650
        %v3960 = vunpack.c.h.b16 %v3650
        %v3961 = vunpack.c.l.b16 %v3651
        %v3962 = vunpack.c.h.b16 %v3651
        %v3963 = vunpack.c.l.b16 %v3652
        %v3964 = vunpack.c.h.b16 %v3652
        %v3965 = vunpack.c.l.b16 %v3653
        %v3966 = vunpack.c.h.b16 %v3653
        %v3967 = vunpack.c.l.b16 %v3654
        %v3968 = vunpack.c.h.b16 %v3654
        %v3969 = vunpack.c.l.b16 %v3655
        %v3970 = vunpack.c.h.b16 %v3655
        %v3971 = vunpack.c.l.b16 %v3656
        %v3972 = vunpack.c.h.b16 %v3656
        %v3973 = vunpack.c.l.b16 %v3657
        %v3974 = vunpack.c.h.b16 %v3657
        %v3975 = vunpack.c.l.b16 %v3658
        %v3976 = vunpack.c.h.b16 %v3658
        %v3977 = vunpack.c.l.b16 %v3659
        %v3978 = vunpack.c.h.b16 %v3659
        %v3979 = vunpack.c.l.b16 %v3660
        %v3980 = vunpack.c.h.b16 %v3660
        %v3981 = vunpack.c.l.b16 %v3661
        %v3982 = vunpack.c.h.b16 %v3661
        %v3983 = vunpack.c.l.b16 %v3662
        %v3984 = vunpack.c.h.b16 %v3662
        %v3985 = vunpack.c.l.b16 %v3663
        %v3986 = vunpack.c.h.b16 %v3663
        %v3987 = vunpack.c.l.b16 %v3664
        %v3988 = vunpack.c.h.b16 %v3664
        %v3989 = vunpack.c.l.b16 %v3665
        %v3990 = vunpack.c.h.b16 %v3665
        %v3991 = vunpack.c.l.b16 %v3666
        %v3992 = vunpack.c.h.b16 %v3666
        %v3993 = vunpack.c.l.b16 %v3667
        %v3994 = vunpack.c.h.b16 %v3667
        %v3995 = vunpack.c.l.b16 %v3668
        %v3996 = vunpack.c.h.b16 %v3668
        %v3997 = vunpack.c.l.b16 %v3669
        %v3998 = vunpack.c.h.b16 %v3669
        %v3999 = vunpack.c.l.b16 %v3670
        %v4000 = vunpack.c.h.b16 %v3670
        %v4001 = vunpack.c.l.b16 %v3671
        %v4002 = vunpack.c.h.b16 %v3671
        %v4003 = vunpack.c.l.b16 %v3672
        %v4004 = vunpack.c.h.b16 %v3672
        %v4005 = vunpack.c.l.b16 %v3673
        %v4006 = vunpack.c.h.b16 %v3673
        %v4007 = vunpack.c.l.b16 %v3674
        %v4008 = vunpack.c.h.b16 %v3674
        %v4009 = vunpack.c.l.b16 %v3675
        %v4010 = vunpack.c.h.b16 %v3675
        %v4011 = vunpack.c.l.b16 %v3676
        %v4012 = vunpack.c.h.b16 %v3676
        %v4013 = vunpack.c.l.b16 %v3677
        %v4014 = vunpack.c.h.b16 %v3677
        %v4015 = vunpack.c.l.b16 %v3678
        %v4016 = vunpack.c.h.b16 %v3678
        %v4017 = vunpack.c.l.b16 %v3679
        %v4018 = vunpack.c.h.b16 %v3679
        %v4019 = vunpack.c.l.b16 %v3680
        %v4020 = vunpack.c.h.b16 %v3680
        %v4021 = vunpack.c.l.b16 %v3681
        %v4022 = vunpack.c.h.b16 %v3681
        %v4023 = vunpack.c.l.b16 %v3682
        %v4024 = vunpack.c.h.b16 %v3682
        %v4025 = vunpack.c.l.b16 %v3683
        %v4026 = vunpack.c.h.b16 %v3683
        %v4027 = vunpack.c.l.b16 %v3684
        %v4028 = vunpack.c.h.b16 %v3684
        %v4029 = vunpack.c.l.b16 %v3685
        %v4030 = vunpack.c.h.b16 %v3685
        %v4031 = vunpack.c.l.b16 %v3686
        %v4032 = vunpack.c.h.b16 %v3686
        %v4033 = vunpack.c.l.b16 %v3687
        %v4034 = vunpack.c.h.b16 %v3687
        %v4035 = vunpack.c.l.b16 %v3688
        %v4036 = vunpack.c.h.b16 %v3688
        %v4037 = vunpack.c.l.b16 %v3689
        %v4038 = vunpack.c.h.b16 %v3689
        %v4039 = vunpack.c.l.b16 %v3690
        %v4040 = vunpack.c.h.b16 %v3690
        %v4041 = vunpack.c.l.b16 %v3691
        %v4042 = vunpack.c.h.b16 %v3691
        %v4043 = vunpack.c.l.b16 %v3692
        %v4044 = vunpack.c.h.b16 %v3692
        %v4045 = vunpack.c.l.b16 %v3693
        %v4046 = vunpack.c.h.b16 %v3693
        %v4047 = vunpack.c.l.b16 %v3694
        %v4048 = vunpack.c.h.b16 %v3694
        %v4049 = vunpack.c.l.b16 %v3695
        %v4050 = vunpack.c.h.b16 %v3695
        %v4051 = vunpack.c.l.b16 %v3696
        %v4052 = vunpack.c.h.b16 %v3696
        %v4053 = vunpack.c.l.b16 %v3697
        %v4054 = vunpack.c.h.b16 %v3697
        %v4055 = vunpack.c.l.b16 %v3698
        %v4056 = vunpack.c.h.b16 %v3698
        %v4057 = vunpack.c.l.b16 %v3699
        %v4058 = vunpack.c.h.b16 %v3699
        %v4059 = vunpack.c.l.b16 %v3700
        %v4060 = vunpack.c.h.b16 %v3700
        %v4061 = vunpack.c.l.b16 %v3701
        %v4062 = vunpack.c.h.b16 %v3701
        %v4063 = vunpack.c.l.b16 %v3702
        %v4064 = vunpack.c.h.b16 %v3702
        %v4065 = vunpack.c.l.b16 %v3703
        %v4066 = vunpack.c.h.b16 %v3703
        %v4067 = vunpack.c.l.b16 %v3704
        %v4068 = vunpack.c.h.b16 %v3704
        %v4069 = vunpack.c.l.b16 %v3705
        %v4070 = vunpack.c.h.b16 %v3705
        %v4071 = vunpack.c.l.b16 %v3706
        %v4072 = vunpack.c.h.b16 %v3706
        %v4073 = vunpack.c.l.b16 %v3707
        %v4074 = vunpack.c.h.b16 %v3707
        %v4075 = vunpack.c.l.b16 %v3708
        %v4076 = vunpack.c.h.b16 %v3708
        %v4077 = vunpack.c.l.b16 %v3709
        %v4078 = vunpack.c.h.b16 %v3709
        %v4079 = vunpack.c.l.b16 %v3710
        %v4080 = vunpack.c.h.b16 %v3710
        %v4081 = vunpack.c.l.b16 %v3711
        %v4082 = vunpack.c.h.b16 %v3711
        %v4083 = vunpack.c.l.b16 %v3712
        %v4084 = vunpack.c.h.b16 %v3712
        %v4085 = vunpack.c.l.b16 %v3713
        %v4086 = vunpack.c.h.b16 %v3713
        %v4087 = vunpack.c.l.b16 %v3714
        %v4088 = vunpack.c.h.b16 %v3714
        %v4089 = vunpack.c.l.b16 %v3715
        %v4090 = vunpack.c.h.b16 %v3715
        %v4091 = vunpack.c.l.b16 %v3716
        %v4092 = vunpack.c.h.b16 %v3716
        %v4093 = vunpack.c.l.b16 %v3717
        %v4094 = vunpack.c.h.b16 %v3717
        %v4095 = vunpack.c.l.b16 %v3718
        %v4096 = vunpack.c.h.b16 %v3718
        %v4097 = vunpack.c.l.b16 %v3719
        %v4098 = vunpack.c.h.b16 %v3719
        %v4099 = vunpack.c.l.b16 %v3720
        %v4100 = vunpack.c.h.b16 %v3720
        %v4101 = vunpack.c.l.b16 %v3721
        %v4102 = vunpack.c.h.b16 %v3721
        %v4103 = vunpack.c.l.b16 %v3722
        %v4104 = vunpack.c.h.b16 %v3722
        %v4105 = vunpack.c.l.b16 %v3723
        %v4106 = vunpack.c.h.b16 %v3723
        %v4107 = vunpack.c.l.b16 %v3724
        %v4108 = vunpack.c.h.b16 %v3724
        %v4109 = vunpack.c.l.b16 %v3725
        %v4110 = vunpack.c.h.b16 %v3725
        %v4111 = vunpack.c.l.b16 %v3726
        %v4112 = vunpack.c.h.b16 %v3726
        %v4113 = vunpack.c.l.b16 %v3727
        %v4114 = vunpack.c.h.b16 %v3727
        %v4115 = vunpack.c.l.b16 %v3728
        %v4116 = vunpack.c.h.b16 %v3728
        %v4117 = vunpack.c.l.b16 %v3729
        %v4118 = vunpack.c.h.b16 %v3729
        %v4119 = vunpack.c.l.b16 %v3730
        %v4120 = vunpack.c.h.b16 %v3730
        %v4121 = vunpack.c.l.b16 %v3731
        %v4122 = vunpack.c.h.b16 %v3731
        %v4123 = vunpack.c.l.b16 %v3732
        %v4124 = vunpack.c.h.b16 %v3732
        %v4125 = vunpack.c.l.b16 %v3733
        %v4126 = vunpack.c.h.b16 %v3733
        %v4127 = vunpack.c.l.b16 %v3734
        %v4128 = vunpack.c.h.b16 %v3734
        %v4129 = vunpack.c.l.b16 %v3735
        %v4130 = vunpack.c.h.b16 %v3735
        %v4131 = vunpack.c.l.b16 %v3736
        %v4132 = vunpack.c.h.b16 %v3736
        %v4133 = vunpack.c.l.b16 %v3737
        %v4134 = vunpack.c.h.b16 %v3737
        %v4135 = vunpack.c.l.b16 %v3738
        %v4136 = vunpack.c.h.b16 %v3738
        %v4137 = vpack.c.b16 %v3883, %v3881
        %v4138 = vpack.c.b16 %v3884, %v3882
        %v4139 = vpack.c.b16 %v3887, %v3885
        %v4140 = vpack.c.b16 %v3888, %v3886
        %v4141 = vpack.c.b16 %v3891, %v3889
        %v4142 = vpack.c.b16 %v3892, %v3890
        %v4143 = vpack.c.b16 %v3895, %v3893
        %v4144 = vpack.c.b16 %v3896, %v3894
        %v4145 = vpack.c.b16 %v3899, %v3897
        %v4146 = vpack.c.b16 %v3900, %v3898
        %v4147 = vpack.c.b16 %v3903, %v3901
        %v4148 = vpack.c.b16 %v3904, %v3902
        %v4149 = vpack.c.b16 %v3907, %v3905
        %v4150 = vpack.c.b16 %v3908, %v3906
        %v4151 = vpack.c.b16 %v3911, %v3909
        %v4152 = vpack.c.b16 %v3912, %v3910
        %v4153 = vpack.c.b16 %v3915, %v3913
        %v4154 = vpack.c.b16 %v3916, %v3914
        %v4155 = vpack.c.b16 %v3919, %v3917
        %v4156 = vpack.c.b16 %v3920, %v3918
        %v4157 = vpack.c.b16 %v3923, %v3921
        %v4158 = vpack.c.b16 %v3924, %v3922
        %v4159 = vpack.c.b16 %v3927, %v3925
        %v4160 = vpack.c.b16 %v3928, %v3926
        %v4161 = vpack.c.b16 %v3931, %v3929
        %v4162 = vpack.c.b16 %v3932, %v3930
        %v4163 = vpack.c.b16 %v3935, %v3933
        %v4164 = vpack.c.b16 %v3936, %v3934
        %v4165 = vpack.c.b16 %v3939, %v3937
        %v4166 = vpack.c.b16 %v3940, %v3938
        %v4167 = vpack.c.b16 %v3943, %v3941
        %v4168 = vpack.c.b16 %v3944, %v3942
        %v4169 = vpack.c.b16 %v3947, %v3945
        %v4170 = vpack.c.b16 %v3948, %v3946
        %v4171 = vpack.c.b16 %v3951, %v3949
        %v4172 = vpack.c.b16 %v3952, %v3950
        %v4173 = vpack.c.b16 %v3955, %v3953
        %v4174 = vpack.c.b16 %v3956, %v3954
        %v4175 = vpack.c.b16 %v3959, %v3957
        %v4176 = vpack.c.b16 %v3960, %v3958
        %v4177 = vpack.c.b16 %v3963, %v3961
        %v4178 = vpack.c.b16 %v3964, %v3962
        %v4179 = vpack.c.b16 %v3967, %v3965
        %v4180 = vpack.c.b16 %v3968, %v3966
        %v4181 = vpack.c.b16 %v3971, %v3969
        %v4182 = vpack.c.b16 %v3972, %v3970
        %v4183 = vpack.c.b16 %v3975, %v3973
        %v4184 = vpack.c.b16 %v3976, %v3974
        %v4185 = vpack.c.b16 %v3979, %v3977
        %v4186 = vpack.c.b16 %v3980, %v3978
        %v4187 = vpack.c.b16 %v3983, %v3981
        %v4188 = vpack.c.b16 %v3984, %v3982
        %v4189 = vpack.c.b16 %v3987, %v3985
        %v4190 = vpack.c.b16 %v3988, %v3986
        %v4191 = vpack.c.b16 %v3991, %v3989
        %v4192 = vpack.c.b16 %v3992, %v3990
        %v4193 = vpack.c.b16 %v3995, %v3993
        %v4194 = vpack.c.b16 %v3996, %v3994
        %v4195 = vpack.c.b16 %v3999, %v3997
        %v4196 = vpack.c.b16 %v4000, %v3998
        %v4197 = vpack.c.b16 %v4003, %v4001
        %v4198 = vpack.c.b16 %v4004, %v4002
        %v4199 = vpack.c.b16 %v4007, %v4005
        %v4200 = vpack.c.b16 %v4008, %v4006
        %v4201 = vpack.c.b16 %v4011, %v4009
        %v4202 = vpack.c.b16 %v4012, %v4010
        %v4203 = vpack.c.b16 %v4015, %v4013
        %v4204 = vpack.c.b16 %v4016, %v4014
        %v4205 = vpack.c.b16 %v4019, %v4017
        %v4206 = vpack.c.b16 %v4020, %v4018
        %v4207 = vpack.c.b16 %v4023, %v4021
        %v4208 = vpack.c.b16 %v4024, %v4022
        %v4209 = vpack.c.b16 %v4027, %v4025
        %v4210 = vpack.c.b16 %v4028, %v4026
        %v4211 = vpack.c.b16 %v4031, %v4029
        %v4212 = vpack.c.b16 %v4032, %v4030
        %v4213 = vpack.c.b16 %v4035, %v4033
        %v4214 = vpack.c.b16 %v4036, %v4034
        %v4215 = vpack.c.b16 %v4039, %v4037
        %v4216 = vpack.c.b16 %v4040, %v4038
        %v4217 = vpack.c.b16 %v4043, %v4041
        %v4218 = vpack.c.b16 %v4044, %v4042
        %v4219 = vpack.c.b16 %v4047, %v4045
        %v4220 = vpack.c.b16 %v4048, %v4046
        %v4221 = vpack.c.b16 %v4051, %v4049
        %v4222 = vpack.c.b16 %v4052, %v4050
        %v4223 = vpack.c.b16 %v4055, %v4053
        %v4224 = vpack.c.b16 %v4056, %v4054
        %v4225 = vpack.c.b16 %v4059, %v4057
        %v4226 = vpack.c.b16 %v4060, %v4058
        %v4227 = vpack.c.b16 %v4063, %v4061
        %v4228 = vpack.c.b16 %v4064, %v4062
        %v4229 = vpack.c.b16 %v4067, %v4065
        %v4230 = vpack.c.b16 %v4068, %v4066
        %v4231 = vpack.c.b16 %v4071, %v4069
        %v4232 = vpack.c.b16 %v4072, %v4070
        %v4233 = vpack.c.b16 %v4075, %v4073
        %v4234 = vpack.c.b16 %v4076, %v4074
        %v4235 = vpack.c.b16 %v4079, %v4077
        %v4236 = vpack.c.b16 %v4080, %v4078
        %v4237 = vpack.c.b16 %v4083, %v4081
        %v4238 = vpack.c.b16 %v4084, %v4082
        %v4239 = vpack.c.b16 %v4087, %v4085
        %v4240 = vpack.c.b16 %v4088, %v4086
        %v4241 = vpack.c.b16 %v4091, %v4089
        %v4242 = vpack.c.b16 %v4092, %v4090
        %v4243 = vpack.c.b16 %v4095, %v4093
        %v4244 = vpack.c.b16 %v4096, %v4094
        %v4245 = vpack.c.b16 %v4099, %v4097
        %v4246 = vpack.c.b16 %v4100, %v4098
        %v4247 = vpack.c.b16 %v4103, %v4101
        %v4248 = vpack.c.b16 %v4104, %v4102
        %v4249 = vpack.c.b16 %v4107, %v4105
        %v4250 = vpack.c.b16 %v4108, %v4106
        %v4251 = vpack.c.b16 %v4111, %v4109
        %v4252 = vpack.c.b16 %v4112, %v4110
        %v4253 = vpack.c.b16 %v4115, %v4113
        %v4254 = vpack.c.b16 %v4116, %v4114
        %v4255 = vpack.c.b16 %v4119, %v4117
        %v4256 = vpack.c.b16 %v4120, %v4118
        %v4257 = vpack.c.b16 %v4123, %v4121
        %v4258 = vpack.c.b16 %v4124, %v4122
        %v4259 = vpack.c.b16 %v4127, %v4125
        %v4260 = vpack.c.b16 %v4128, %v4126
        %v4261 = vpack.c.b16 %v4131, %v4129
        %v4262 = vpack.c.b16 %v4132, %v4130
        %v4263 = vpack.c.b16 %v4135, %v4133
        %v4264 = vpack.c.b16 %v4136, %v4134
        %4393 = vmatpush.bf16.msra.mxu0 %v4151
        %4394 = vmatpush.bf16.msra.mxu0 %v4149
        %4395 = vmatpush.bf16.msra.mxu0 %v4147
        %4396 = vmatpush.bf16.msra.mxu0 %v4145
        %4397 = vmatpush.bf16.msra.mxu0 %v4143
        %4398 = vmatpush.bf16.msra.mxu0 %v4141
        %4399 = vmatpush.bf16.msra.mxu0 %v4139
        %4400 = vmatpush.bf16.msra.mxu0 %v4137
        %4401 = vmatmul.bf16.gmra.mxu0 %v3739
        %v4402 = vpop.f32.mrf.mxu0
        %v4403 = vadd.f32 %v3749, %v4402
        %v4404 = vpop.f32.mrf.mxu0
        %v4405 = vadd.f32 %v3749, %v4404
        %4406 = vdwg.mxu0
        %4407 = vmatpush.bf16.msra.mxu0 %v4167
        %4408 = vmatpush.bf16.msra.mxu0 %v4165
        %4409 = vmatpush.bf16.msra.mxu0 %v4163
        %4410 = vmatpush.bf16.msra.mxu0 %v4161
        %4411 = vmatpush.bf16.msra.mxu0 %v4159
        %4412 = vmatpush.bf16.msra.mxu0 %v4157
        %4413 = vmatpush.bf16.msra.mxu0 %v4155
        %4414 = vmatpush.bf16.msra.mxu0 %v4153
        %4415 = vmatmul.bf16.gmra.mxu0 %v3740
        %v4416 = vpop.f32.mrf.mxu0
        %v4417 = vadd.f32 %v4403, %v4416
        %v4418 = vpop.f32.mrf.mxu0
        %v4419 = vadd.f32 %v4405, %v4418
        %4420 = vdwg.mxu0
        %4421 = vmatpush.bf16.msra.mxu0 %v4183
        %4422 = vmatpush.bf16.msra.mxu0 %v4181
        %4423 = vmatpush.bf16.msra.mxu0 %v4179
        %4424 = vmatpush.bf16.msra.mxu0 %v4177
        %4425 = vmatpush.bf16.msra.mxu0 %v4175
        %4426 = vmatpush.bf16.msra.mxu0 %v4173
        %4427 = vmatpush.bf16.msra.mxu0 %v4171
        %4428 = vmatpush.bf16.msra.mxu0 %v4169
        %4429 = vmatmul.bf16.gmra.mxu0 %v3741
        %v4430 = vpop.f32.mrf.mxu0
        %v4431 = vadd.f32 %v4417, %v4430
        %v4432 = vpop.f32.mrf.mxu0
        %v4433 = vadd.f32 %v4419, %v4432
        %4434 = vdwg.mxu0
        %4435 = vmatpush.bf16.msra.mxu0 %v4199
        %4436 = vmatpush.bf16.msra.mxu0 %v4197
        %4437 = vmatpush.bf16.msra.mxu0 %v4195
        %4438 = vmatpush.bf16.msra.mxu0 %v4193
        %4439 = vmatpush.bf16.msra.mxu0 %v4191
        %4440 = vmatpush.bf16.msra.mxu0 %v4189
        %4441 = vmatpush.bf16.msra.mxu0 %v4187
        %4442 = vmatpush.bf16.msra.mxu0 %v4185
        %4443 = vmatmul.bf16.gmra.mxu0 %v3742
        %v4444 = vpop.f32.mrf.mxu0
        %v4445 = vadd.f32 %v4431, %v4444
        %v4446 = vpop.f32.mrf.mxu0
        %v4447 = vadd.f32 %v4433, %v4446
        %4448 = vdwg.mxu0
        %4449 = vmatpush.bf16.msra.mxu0 %v4215
        %4450 = vmatpush.bf16.msra.mxu0 %v4213
        %4451 = vmatpush.bf16.msra.mxu0 %v4211
        %4452 = vmatpush.bf16.msra.mxu0 %v4209
        %4453 = vmatpush.bf16.msra.mxu0 %v4207
        %4454 = vmatpush.bf16.msra.mxu0 %v4205
        %4455 = vmatpush.bf16.msra.mxu0 %v4203
        %4456 = vmatpush.bf16.msra.mxu0 %v4201
        %4457 = vmatmul.bf16.gmra.mxu0 %v3743
        %v4458 = vpop.f32.mrf.mxu0
        %v4459 = vadd.f32 %v4445, %v4458
        %v4460 = vpop.f32.mrf.mxu0
        %v4461 = vadd.f32 %v4447, %v4460
        %4462 = vdwg.mxu0
        %4463 = vmatpush.bf16.msra.mxu0 %v4231
        %4464 = vmatpush.bf16.msra.mxu0 %v4229
        %4465 = vmatpush.bf16.msra.mxu0 %v4227
        %4466 = vmatpush.bf16.msra.mxu0 %v4225
        %4467 = vmatpush.bf16.msra.mxu0 %v4223
        %4468 = vmatpush.bf16.msra.mxu0 %v4221
        %4469 = vmatpush.bf16.msra.mxu0 %v4219
        %4470 = vmatpush.bf16.msra.mxu0 %v4217
        %4471 = vmatmul.bf16.gmra.mxu0 %v3744
        %v4472 = vpop.f32.mrf.mxu0
        %v4473 = vadd.f32 %v4459, %v4472
        %v4474 = vpop.f32.mrf.mxu0
        %v4475 = vadd.f32 %v4461, %v4474
        %4476 = vdwg.mxu0
        %4477 = vmatpush.bf16.msra.mxu0 %v4247
        %4478 = vmatpush.bf16.msra.mxu0 %v4245
        %4479 = vmatpush.bf16.msra.mxu0 %v4243
        %4480 = vmatpush.bf16.msra.mxu0 %v4241
        %4481 = vmatpush.bf16.msra.mxu0 %v4239
        %4482 = vmatpush.bf16.msra.mxu0 %v4237
        %4483 = vmatpush.bf16.msra.mxu0 %v4235
        %4484 = vmatpush.bf16.msra.mxu0 %v4233
        %4485 = vmatmul.bf16.gmra.mxu0 %v3745
        %v4486 = vpop.f32.mrf.mxu0
        %v4487 = vadd.f32 %v4473, %v4486
        %v4488 = vpop.f32.mrf.mxu0
        %v4489 = vadd.f32 %v4475, %v4488
        %4490 = vdwg.mxu0
        %4491 = vmatpush.bf16.msra.mxu0 %v4263
        %4492 = vmatpush.bf16.msra.mxu0 %v4261
        %4493 = vmatpush.bf16.msra.mxu0 %v4259
        %4494 = vmatpush.bf16.msra.mxu0 %v4257
        %4495 = vmatpush.bf16.msra.mxu0 %v4255
        %4496 = vmatpush.bf16.msra.mxu0 %v4253
        %4497 = vmatpush.bf16.msra.mxu0 %v4251
        %4498 = vmatpush.bf16.msra.mxu0 %v4249
        %4499 = vmatmul.bf16.gmra.mxu0 %v3746
        %v4500 = vpop.f32.mrf.mxu0
        %v4501 = vadd.f32 %v4487, %v4500
        %v4502 = vpop.f32.mrf.mxu0
        %v4503 = vadd.f32 %v4489, %v4502
        %4504 = vdwg.mxu0
        %4505 = vmatpush.bf16.msra.mxu0 %v4152
        %4506 = vmatpush.bf16.msra.mxu0 %v4150
        %4507 = vmatpush.bf16.msra.mxu0 %v4148
        %4508 = vmatpush.bf16.msra.mxu0 %v4146
        %4509 = vmatpush.bf16.msra.mxu0 %v4144
        %4510 = vmatpush.bf16.msra.mxu0 %v4142
        %4511 = vmatpush.bf16.msra.mxu0 %v4140
        %4512 = vmatpush.bf16.msra.mxu0 %v4138
        %4513 = vmatmul.bf16.gmra.mxu0 %v3739
        %v4514 = vpop.f32.mrf.mxu0
        %v4515 = vadd.f32 %v3750, %v4514
        %v4516 = vpop.f32.mrf.mxu0
        %v4517 = vadd.f32 %v3750, %v4516
        %4518 = vdwg.mxu0
        %4519 = vmatpush.bf16.msra.mxu0 %v4168
        %4520 = vmatpush.bf16.msra.mxu0 %v4166
        %4521 = vmatpush.bf16.msra.mxu0 %v4164
        %4522 = vmatpush.bf16.msra.mxu0 %v4162
        %4523 = vmatpush.bf16.msra.mxu0 %v4160
        %4524 = vmatpush.bf16.msra.mxu0 %v4158
        %4525 = vmatpush.bf16.msra.mxu0 %v4156
        %4526 = vmatpush.bf16.msra.mxu0 %v4154
        %4527 = vmatmul.bf16.gmra.mxu0 %v3740
        %v4528 = vpop.f32.mrf.mxu0
        %v4529 = vadd.f32 %v4515, %v4528
        %v4530 = vpop.f32.mrf.mxu0
        %v4531 = vadd.f32 %v4517, %v4530
        %4532 = vdwg.mxu0
        %4533 = vmatpush.bf16.msra.mxu0 %v4184
        %4534 = vmatpush.bf16.msra.mxu0 %v4182
        %4535 = vmatpush.bf16.msra.mxu0 %v4180
        %4536 = vmatpush.bf16.msra.mxu0 %v4178
        %4537 = vmatpush.bf16.msra.mxu0 %v4176
        %4538 = vmatpush.bf16.msra.mxu0 %v4174
        %4539 = vmatpush.bf16.msra.mxu0 %v4172
        %4540 = vmatpush.bf16.msra.mxu0 %v4170
        %4541 = vmatmul.bf16.gmra.mxu0 %v3741
        %v4542 = vpop.f32.mrf.mxu0
        %v4543 = vadd.f32 %v4529, %v4542
        %v4544 = vpop.f32.mrf.mxu0
        %v4545 = vadd.f32 %v4531, %v4544
        %4546 = vdwg.mxu0
        %4547 = vmatpush.bf16.msra.mxu0 %v4200
        %4548 = vmatpush.bf16.msra.mxu0 %v4198
        %4549 = vmatpush.bf16.msra.mxu0 %v4196
        %4550 = vmatpush.bf16.msra.mxu0 %v4194
        %4551 = vmatpush.bf16.msra.mxu0 %v4192
        %4552 = vmatpush.bf16.msra.mxu0 %v4190
        %4553 = vmatpush.bf16.msra.mxu0 %v4188
        %4554 = vmatpush.bf16.msra.mxu0 %v4186
        %4555 = vmatmul.bf16.gmra.mxu0 %v3742
        %v4556 = vpop.f32.mrf.mxu0
        %v4557 = vadd.f32 %v4543, %v4556
        %v4558 = vpop.f32.mrf.mxu0
        %v4559 = vadd.f32 %v4545, %v4558
        %4560 = vdwg.mxu0
        %4561 = vmatpush.bf16.msra.mxu0 %v4216
        %4562 = vmatpush.bf16.msra.mxu0 %v4214
        %4563 = vmatpush.bf16.msra.mxu0 %v4212
        %4564 = vmatpush.bf16.msra.mxu0 %v4210
        %4565 = vmatpush.bf16.msra.mxu0 %v4208
        %4566 = vmatpush.bf16.msra.mxu0 %v4206
        %4567 = vmatpush.bf16.msra.mxu0 %v4204
        %4568 = vmatpush.bf16.msra.mxu0 %v4202
        %4569 = vmatmul.bf16.gmra.mxu0 %v3743
        %v4570 = vpop.f32.mrf.mxu0
        %v4571 = vadd.f32 %v4557, %v4570
        %v4572 = vpop.f32.mrf.mxu0
        %v4573 = vadd.f32 %v4559, %v4572
        %4574 = vdwg.mxu0
        %4575 = vmatpush.bf16.msra.mxu0 %v4232
        %4576 = vmatpush.bf16.msra.mxu0 %v4230
        %4577 = vmatpush.bf16.msra.mxu0 %v4228
        %4578 = vmatpush.bf16.msra.mxu0 %v4226
        %4579 = vmatpush.bf16.msra.mxu0 %v4224
        %4580 = vmatpush.bf16.msra.mxu0 %v4222
        %4581 = vmatpush.bf16.msra.mxu0 %v4220
        %4582 = vmatpush.bf16.msra.mxu0 %v4218
        %4583 = vmatmul.bf16.gmra.mxu0 %v3744
        %v4584 = vpop.f32.mrf.mxu0
        %v4585 = vadd.f32 %v4571, %v4584
        %v4586 = vpop.f32.mrf.mxu0
        %v4587 = vadd.f32 %v4573, %v4586
        %4588 = vdwg.mxu0
        %4589 = vmatpush.bf16.msra.mxu0 %v4248
        %4590 = vmatpush.bf16.msra.mxu0 %v4246
        %4591 = vmatpush.bf16.msra.mxu0 %v4244
        %4592 = vmatpush.bf16.msra.mxu0 %v4242
        %4593 = vmatpush.bf16.msra.mxu0 %v4240
        %4594 = vmatpush.bf16.msra.mxu0 %v4238
        %4595 = vmatpush.bf16.msra.mxu0 %v4236
        %4596 = vmatpush.bf16.msra.mxu0 %v4234
        %4597 = vmatmul.bf16.gmra.mxu0 %v3745
        %v4598 = vpop.f32.mrf.mxu0
        %v4599 = vadd.f32 %v4585, %v4598
        %v4600 = vpop.f32.mrf.mxu0
        %v4601 = vadd.f32 %v4587, %v4600
        %4602 = vdwg.mxu0
        %4603 = vmatpush.bf16.msra.mxu0 %v4264
        %4604 = vmatpush.bf16.msra.mxu0 %v4262
        %4605 = vmatpush.bf16.msra.mxu0 %v4260
        %4606 = vmatpush.bf16.msra.mxu0 %v4258
        %4607 = vmatpush.bf16.msra.mxu0 %v4256
        %4608 = vmatpush.bf16.msra.mxu0 %v4254
        %4609 = vmatpush.bf16.msra.mxu0 %v4252
        %4610 = vmatpush.bf16.msra.mxu0 %v4250
        %4611 = vmatmul.bf16.gmra.mxu0 %v3746
        %v4612 = vpop.f32.mrf.mxu0
        %v4613 = vadd.f32 %v4599, %v4612
        %v4614 = vpop.f32.mrf.mxu0
        %v4615 = vadd.f32 %v4601, %v4614
        %4616 = vdwg.mxu0
        %v4617 = vadd.f32 %v2189, %v4501
        %v4618 = vadd.f32 %v2190, %v4613
        %v4619 = vadd.f32 %v2191, %v4503
        %v4620 = vadd.f32 %v2192, %v4615
        %4621 = vst [vmem:[#allocation2] sm:$0xff] %v4617
        %4622 = vst [vmem:[#allocation2 + $0x8] sm:$0xff] %v4618
        %4623 = vst [vmem:[#allocation2 + $0x10] sm:$0xff] %v4619
        %4624 = vst [vmem:[#allocation2 + $0x18] sm:$0xff] %v4620
        %p4625 = scmp.eq.s32.totalorder %s40, 1
        // Predicated region
        $region117: #{text_encoder_forward.1} parent=95 // pred_check
          %p4626 = pneg %p4625
        $region118: #{text_encoder_forward.1} parent=95 // pred_check_branch
          %4628 = sbr.rel (%p4626) target = $region120
        $region119: #{text_encoder_forward.1} parent=95 // pred_region
          %v4629 = vld [vmem:[%s3] sm:$0x3]
          %vm4630 = vcmask 130048
          %v4632 = vsel %vm4630, %v4629, 0
          %4634 = vmatpush.msra.mxu0 0.0
          %4635 = vmatpush.msra.mxu0 0.0
          %4636 = vmatpush.msra.mxu0 0.0
          %4637 = vmatpush.msra.mxu0 0.0
          %4638 = vmatpush.msra.mxu0 0.0
          %4639 = vmatpush.msra.mxu0 0.0
          %4640 = vmatpush.msra.mxu0 0.0
          %4641 = vmatpush.msra.mxu0 0.0
          %4642 = vmatpush.msra.mxu0 0.0
          %4643 = vmatpush.msra.mxu0 0.0
          %4644 = vmatpush.msra.mxu0 0.0
          %4645 = vmatpush.msra.mxu0 0.0
          %4646 = vmatpush.msra.mxu0 0.0
          %4647 = vmatpush.msra.mxu0 0.0
          %4648 = vmatpush.msra.mxu0 %v4619
          %4649 = vmatpush.msra.mxu0 %v4617
          %4650 = vmatmul.f32.gmra.mxu0 %v4632
          %v4651 = vpop.f32.mrf.mxu0
          %v4652 = vadd.f32 0.0, %v4651
          %4653 = vdwg.mxu0
          %4654 = vmatpush.msra.mxu0 0.0
          %4655 = vmatpush.msra.mxu0 0.0
          %4656 = vmatpush.msra.mxu0 0.0
          %4657 = vmatpush.msra.mxu0 0.0
          %4658 = vmatpush.msra.mxu0 0.0
          %4659 = vmatpush.msra.mxu0 0.0
          %4660 = vmatpush.msra.mxu0 0.0
          %4661 = vmatpush.msra.mxu0 0.0
          %4662 = vmatpush.msra.mxu0 0.0
          %4663 = vmatpush.msra.mxu0 0.0
          %4664 = vmatpush.msra.mxu0 0.0
          %4665 = vmatpush.msra.mxu0 0.0
          %4666 = vmatpush.msra.mxu0 0.0
          %4667 = vmatpush.msra.mxu0 0.0
          %4668 = vmatpush.msra.mxu0 %v4620
          %4669 = vmatpush.msra.mxu0 %v4618
          %4670 = vmatmul.f32.gmra.mxu0 %v4632
          %v4671 = vpop.f32.mrf.mxu0
          %v4672 = vadd.f32 0.0, %v4671
          %4673 = vdwg.mxu0
          %v4674 = vld [vmem:[%s16] sm:$0x3]
          %v4675 = vld [vmem:[%s17] sm:$0x3]
          %vm4676 = vcmask 1041408
          %v4677 = vsel %vm4676, %v4652, 0.0
          %v4678 = vsel %vm4676, %v4672, 0.0
          %v4679 = vadd.f32 %v4677, %v4678
          %4680 = vadd.xlane.f32.xlu0 %v4679
          %v4681 = vpop.xlane.xlu0 %4680
          %v4682 = vmul.f32 %v4681, %v908
          %v4683 = vsub.f32 %v4652, %v4682
          %v4684 = vsub.f32 %v4672, %v4682
          %v4685 = vmul.f32 %v4683, %v4683
          %v4686 = vmul.f32 %v4684, %v4684
          %v4687 = vsel %vm4676, %v4685, 0.0
          %v4688 = vsel %vm4676, %v4686, 0.0
          %v4689 = vadd.f32 %v4687, %v4688
          %4690 = vadd.xlane.f32.xlu0 %v4689
          %v4691 = vpop.xlane.xlu0 %4690
          %v4692 = vmul.f32 %v4691, %v908
          %v4693 = vadd.f32 %v4692, 1e-05
          %v4694 = vrsqrt.pop %v4693
          %v4695 = vmul.f32 %v4694, %v4693
          %v4696 = vmul.f32 %v4695, %v4694
          %v4697 = vmul.f32 0.5, %v4696
          %v4698 = vsub.f32 1.5, %v4697
          %v4699 = vmul.f32 %v4694, %v4698
          %vm4700 = vweird.f32 %v4693
          %vm4701 = vweird.f32 %v4694
          %vm4702 = vmor %vm4700, %vm4701
          %v4703 = vsel %vm4702, %v4694, %v4699
          %v4704 = vmul.f32 %v4683, %v4703
          %v4705 = vmul.f32 %v4684, %v4703
          %v4707 = vperm.slane %v4674, 0
          %v4708 = vperm.slane %v4674, 1
          %v4711 = vmul.f32 %v4704, %v4707
          %v4712 = vmul.f32 %v4705, %v4708
          %v4714 = vperm.slane %v4675, 0
          %v4715 = vperm.slane %v4675, 1
          %v4718 = vadd.f32 %v4711, %v4714
          %v4719 = vadd.f32 %v4712, %v4715
          %v4720 = vld [vmem:[%s18] sm:$0xf]
          %v4721 = vld [vmem:[%s18 + $0x4] sm:$0xf]
          %v4722 = vld [vmem:[%s18 + $0x8] sm:$0xf]
          %v4723 = vld [vmem:[%s18 + $0xc] sm:$0xf]
          %v4724 = vld [vmem:[%s18 + $0x10] sm:$0xf]
          %v4725 = vld [vmem:[%s18 + $0x14] sm:$0xf]
          %v4726 = vld [vmem:[%s18 + $0x18] sm:$0xf]
          %v4727 = vld [vmem:[%s18 + $0x1c] sm:$0xf]
          %v4728 = vld [vmem:[%s18 + $0x20] sm:$0xf]
          %v4729 = vld [vmem:[%s18 + $0x24] sm:$0xf]
          %v4730 = vld [vmem:[%s18 + $0x28] sm:$0xf]
          %v4731 = vld [vmem:[%s18 + $0x2c] sm:$0xf]
          %v4732 = vld [vmem:[%s18 + $0x30] sm:$0xf]
          %v4733 = vld [vmem:[%s18 + $0x34] sm:$0xf]
          %v4734 = vld [vmem:[%s18 + $0x38] sm:$0xf]
          %v4735 = vld [vmem:[%s18 + $0x3c] sm:$0xf]
          %v4736 = vld [vmem:[%s18 + $0x40] sm:$0xf]
          %v4737 = vld [vmem:[%s18 + $0x44] sm:$0xf]
          %v4738 = vld [vmem:[%s18 + $0x48] sm:$0xf]
          %v4739 = vld [vmem:[%s18 + $0x4c] sm:$0xf]
          %v4740 = vld [vmem:[%s18 + $0x50] sm:$0xf]
          %v4741 = vld [vmem:[%s18 + $0x54] sm:$0xf]
          %v4742 = vld [vmem:[%s18 + $0x58] sm:$0xf]
          %v4743 = vld [vmem:[%s18 + $0x5c] sm:$0xf]
          %v4744 = vld [vmem:[%s18 + $0x60] sm:$0xf]
          %v4745 = vld [vmem:[%s18 + $0x64] sm:$0xf]
          %v4746 = vld [vmem:[%s18 + $0x68] sm:$0xf]
          %v4747 = vld [vmem:[%s18 + $0x6c] sm:$0xf]
          %v4748 = vld [vmem:[%s18 + $0x70] sm:$0xf]
          %v4749 = vld [vmem:[%s18 + $0x74] sm:$0xf]
          %v4750 = vld [vmem:[%s18 + $0x78] sm:$0xf]
          %v4751 = vld [vmem:[%s18 + $0x7c] sm:$0xf]
          %v4752 = vpack.c.bf16 %v4718, %v4718
          %v4753 = vpack.c.bf16 %v4719, %v4719
          %v4786 = vunpack.c.l.b16 %v4720
          %v4787 = vunpack.c.l.b16 %v4721
          %v4788 = vunpack.c.l.b16 %v4722
          %v4789 = vunpack.c.l.b16 %v4723
          %v4790 = vunpack.c.l.b16 %v4724
          %v4791 = vunpack.c.l.b16 %v4725
          %v4792 = vunpack.c.l.b16 %v4726
          %v4793 = vunpack.c.l.b16 %v4727
          %v4794 = vunpack.c.l.b16 %v4728
          %v4795 = vunpack.c.l.b16 %v4729
          %v4796 = vunpack.c.l.b16 %v4730
          %v4797 = vunpack.c.l.b16 %v4731
          %v4798 = vunpack.c.l.b16 %v4732
          %v4799 = vunpack.c.l.b16 %v4733
          %v4800 = vunpack.c.l.b16 %v4734
          %v4801 = vunpack.c.l.b16 %v4735
          %v4802 = vunpack.c.l.b16 %v4736
          %v4803 = vunpack.c.l.b16 %v4737
          %v4804 = vunpack.c.l.b16 %v4738
          %v4805 = vunpack.c.l.b16 %v4739
          %v4806 = vunpack.c.l.b16 %v4740
          %v4807 = vunpack.c.l.b16 %v4741
          %v4808 = vunpack.c.l.b16 %v4742
          %v4809 = vunpack.c.l.b16 %v4743
          %v4810 = vunpack.c.l.b16 %v4744
          %v4811 = vunpack.c.l.b16 %v4745
          %v4812 = vunpack.c.l.b16 %v4746
          %v4813 = vunpack.c.l.b16 %v4747
          %v4814 = vunpack.c.l.b16 %v4748
          %v4815 = vunpack.c.l.b16 %v4749
          %v4816 = vunpack.c.l.b16 %v4750
          %v4817 = vunpack.c.l.b16 %v4751
          %v4818 = vpack.c.b16 %v4787, %v4786
          %v4819 = vpack.c.b16 %v4789, %v4788
          %v4820 = vpack.c.b16 %v4791, %v4790
          %v4821 = vpack.c.b16 %v4793, %v4792
          %v4822 = vpack.c.b16 %v4795, %v4794
          %v4823 = vpack.c.b16 %v4797, %v4796
          %v4824 = vpack.c.b16 %v4799, %v4798
          %v4825 = vpack.c.b16 %v4801, %v4800
          %v4826 = vpack.c.b16 %v4803, %v4802
          %v4827 = vpack.c.b16 %v4805, %v4804
          %v4828 = vpack.c.b16 %v4807, %v4806
          %v4829 = vpack.c.b16 %v4809, %v4808
          %v4830 = vpack.c.b16 %v4811, %v4810
          %v4831 = vpack.c.b16 %v4813, %v4812
          %v4832 = vpack.c.b16 %v4815, %v4814
          %v4833 = vpack.c.b16 %v4817, %v4816
          %4850 = vmatpush.bf16.msra.mxu0 %v4825
          %4851 = vmatpush.bf16.msra.mxu0 %v4824
          %4852 = vmatpush.bf16.msra.mxu0 %v4823
          %4853 = vmatpush.bf16.msra.mxu0 %v4822
          %4854 = vmatpush.bf16.msra.mxu0 %v4821
          %4855 = vmatpush.bf16.msra.mxu0 %v4820
          %4856 = vmatpush.bf16.msra.mxu0 %v4819
          %4857 = vmatpush.bf16.msra.mxu0 %v4818
          %4858 = vmatmul.bf16.gmra.mxu0 %v4752
          %v4859 = vpop.f32.mrf.mxu0
          %v4860 = vadd.f32 0.0, %v4859
          %v4861 = vpop.f32.mrf.mxu0
          %4862 = vdwg.mxu0
          %4863 = vmatpush.bf16.msra.mxu0 %v4833
          %4864 = vmatpush.bf16.msra.mxu0 %v4832
          %4865 = vmatpush.bf16.msra.mxu0 %v4831
          %4866 = vmatpush.bf16.msra.mxu0 %v4830
          %4867 = vmatpush.bf16.msra.mxu0 %v4829
          %4868 = vmatpush.bf16.msra.mxu0 %v4828
          %4869 = vmatpush.bf16.msra.mxu0 %v4827
          %4870 = vmatpush.bf16.msra.mxu0 %v4826
          %4871 = vmatmul.bf16.gmra.mxu0 %v4753
          %v4872 = vpop.f32.mrf.mxu0
          %v4873 = vadd.f32 %v4860, %v4872
          %v4874 = vpop.f32.mrf.mxu0
          %4875 = vdwg.mxu0
          %4876 = vst [vmem:[#allocation11] sm:$0x3] %v4873
        $region120: #{text_encoder_forward.1} parent=95 // pred_fallthru
          _
        // Predicated region
        $region121: #{text_encoder_forward.1} parent=95 // pred_check
          %p4877 = pneg %p512
        $region122: #{text_encoder_forward.1} parent=95 // pred_check_branch
          %4879 = sbr.rel (%p4877) target = $region124
        $region123: #{text_encoder_forward.1} parent=95 // pred_region
          %4881 = vsyncadd [#allocation5], 0
          %s4883 = sshll.u32 [#allocation11], 4
          %s4884 = int_to_ptr.vmem [resolvable:$true] %s4883
          %s4885 = sshll.u32 %s19, 4
          %s4886 = int_to_ptr.hbm [resolvable:$true] %s4885
          %4888 = dma.vmem_to_hbm [thread:$0]  %s4884, 32, %s4886, [#allocation5]
        $region124: #{text_encoder_forward.1} parent=95 // pred_fallthru
          _
        // Predicated region
        $region125: #{text_encoder_forward.1} parent=95 // pred_check
          %p4889 = pneg %p512
        $region126: #{text_encoder_forward.1} parent=95 // pred_check_branch
          %4891 = sbr.rel (%p4889) target = $region128
        $region127: #{text_encoder_forward.1} parent=95 // pred_region
          %4893 = dma.done [#allocation5], 32
        $region128: #{text_encoder_forward.1} parent=95 // pred_fallthru
          _
      $region96: #{text_encoder_forward.1} parent=5 // pred_fallthru
        _
      %p4894 = scmp.le.s32.totalorder 2, %s35
      // Predicated region
      $region129: #{text_encoder_forward.1} parent=5 // pred_check
        %p4895 = pneg %p4894
      $region130: #{text_encoder_forward.1} parent=5 // pred_check_branch
        %4897 = sbr.rel (%p4895) target = $region132
      $region131: #{text_encoder_forward.1} parent=5 // pred_region
        %s4898 = ssub.s32 %s35, 2
      $region132: #{text_encoder_forward.1} parent=5 // pred_fallthru
        _
    $region6: #{text_encoder_forward.1} parent=1 // loop_footer
      %s39 = sadd.s32 1, %s35
    $region7: #{text_encoder_forward.1} parent=1 // loop_footer_branch
      %34 = sbr.rel target = $region3
    $region8: #{text_encoder_forward.1} parent=1 // loop_exit
      _
    %4899 = vsyncpa [#allocation4], 1
    %s4900 = scalar_lea.sflag [#allocation4], 1
    %4901 = vsyncpa %s4900, 1
    %4902 = vsyncpa [#allocation7], 1
    %s4903 = scalar_lea.sflag [#allocation7], 1
    %4904 = vsyncpa %s4903, 1
    %4905 = vsyncpa [#allocation10], 1
    %s4906 = scalar_lea.sflag [#allocation10], 1
    %4907 = vsyncpa %s4906, 1
    %4908 = vsyncpa [#allocation5], 1
    %s4909 = scalar_lea.sflag [#allocation5], 1
    %4910 = vsyncpa %s4909, 1

</llo_original>
